<compile_context>
chip_gen: v7x
topology: tpu7x:2x2x1
jax: 0.10.0
libtpu: 0.0.40
codegen_flags: <defaults>
</compile_context>

<pallas_src>
import functools

import jax
import jax.numpy as jnp
from jax.experimental import pallas as pl
from jax.experimental.pallas import tpu as pltpu

NUM_HEADS = 8  # Attention(dim=channels) default num_heads


# --------------------------------------------------------------------------- #
# helpers
# --------------------------------------------------------------------------- #

def _round_up(x, m):
    return (x + m - 1) // m * m


def _cparams(n_axes, workset_bytes=0):
    kw = {"dimension_semantics": ("parallel",) * n_axes}
    if workset_bytes > 12 * 1024 * 1024:
        try:
            phys = int(getattr(pltpu.get_tpu_info(), "vmem_capacity_bytes",
                               64 * 1024 * 1024))
        except Exception:
            phys = 64 * 1024 * 1024
        kw["vmem_limit_bytes"] = int(min(workset_bytes * 3 // 2, phys * 3 // 4))
    return pltpu.CompilerParams(**kw)


def _conv_workset(cin, cout, P, HW, out_bytes, n_in=1):
    return (n_in * 2 * cin * P * 2 + n_in * 9 * cin * HW * 2
            + 2 * cout * P * out_bytes + n_in * cout * 9 * cin * 2
            + cout * HW * 4)


def _to_flat_padded(x_nchw, P, pad):
    # (B, C, H, W) f32 -> (B, C, P) bf16, data at [pad, pad+H*W), zeros elsewhere
    B, C, H, W = x_nchw.shape
    xf = x_nchw.reshape(B, C, H * W).astype(jnp.bfloat16)
    return jnp.pad(xf, ((0, 0), (0, 0), (pad, P - H * W - pad)))


# --------------------------------------------------------------------------- #
# in-kernel building blocks
# --------------------------------------------------------------------------- #

def _xcol(x_ref, *, W, HW, pad):
    """(9*Cin, HW) bf16 im2col block, built in-register from static lane slices
    of the flat-padded (Cin, P) image (data at [pad, pad+HW), zeros elsewhere).
    Tap order is (dy, dx) row-major = PyTorch Conv2d weight flattened (kh, kw).
    Only the width-boundary wrap needs masking; height-boundary reads land in
    the explicit zero halo."""
    wpos = jax.lax.broadcasted_iota(jnp.int32, (1, HW), 1) % W
    m_left = wpos >= 1            # dx == 0 taps invalid at w == 0
    m_right = wpos <= W - 2       # dx == 2 taps invalid at w == W-1
    cols = []
    for dy in range(3):
        for dx in range(3):
            s = (dy - 1) * W + (dx - 1)
            tap = x_ref[:, pad + s:pad + s + HW]
            if dx == 0:
                tap = jnp.where(m_left, tap, jnp.zeros_like(tap))
            elif dx == 2:
                tap = jnp.where(m_right, tap, jnp.zeros_like(tap))
            cols.append(tap)
    return jnp.concatenate(cols, axis=0)


def _pad_cols(y, pad, P, HW):
    # place (Cout, HW) at columns [pad, pad+HW) of a (Cout, P) slab, zeros around
    return jnp.concatenate(
        [jnp.zeros((y.shape[0], pad), y.dtype), y,
         jnp.zeros((y.shape[0], P - HW - pad), y.dtype)], axis=-1)


def _sigmoid(y):
    # divide lands on the EUP slot (approx reciprocal), off the VALU path
    return pl.reciprocal(1.0 + jnp.exp(-y), approx=True)


# --------------------------------------------------------------------------- #
# kernels
# --------------------------------------------------------------------------- #

def conv3x3_kernel(x_ref, w_ref, b_ref, o_ref, *, W, HW, pad, relu, pad_out, P):
    y = jnp.dot(w_ref[...], _xcol(x_ref, W=W, HW=HW, pad=pad),
                preferred_element_type=jnp.float32) + b_ref[...]
    if relu:
        y = jnp.maximum(y, 0.0)
    y = y.astype(o_ref.dtype)
    if pad_out:
        y = _pad_cols(y, pad, P, HW)
    o_ref[...] = y


def conv3x3_dual_kernel(x1_ref, x2_ref, w1_ref, w2_ref, b_ref, o_ref, *,
                        W, HW, pad, relu, P):
    # conv over cat([x1, x2], channels) expressed as two matmuls on resident data
    y = (jnp.dot(w1_ref[...], _xcol(x1_ref, W=W, HW=HW, pad=pad),
                 preferred_element_type=jnp.float32)
         + jnp.dot(w2_ref[...], _xcol(x2_ref, W=W, HW=HW, pad=pad),
                   preferred_element_type=jnp.float32)
         + b_ref[...])
    if relu:
        y = jnp.maximum(y, 0.0)
    o_ref[...] = _pad_cols(y.astype(o_ref.dtype), pad, P, HW)


def conv3x3_gate_kernel(h_ref, fre_ref, spa_ref, wf_ref, ws_ref, bf_ref, bs_ref,
                        o_ref, *, W, HW, pad):
    # fuse2 conv + BN + sigmoid + gate: res = fre*fre_a + spa*spa_a
    xcol = _xcol(h_ref, W=W, HW=HW, pad=pad)
    fre_a = _sigmoid(jnp.dot(wf_ref[...], xcol,
                             preferred_element_type=jnp.float32) + bf_ref[...])
    spa_a = _sigmoid(jnp.dot(ws_ref[...], xcol,
                             preferred_element_type=jnp.float32) + bs_ref[...])
    fre_v = fre_ref[:, pad:pad + HW].astype(jnp.float32)
    spa_v = spa_ref[:, pad:pad + HW].astype(jnp.float32)
    o_ref[...] = (fre_v * fre_a + spa_v * spa_a).astype(o_ref.dtype)


def proj_res_kernel(x_ref, w_ref, r_ref, o_ref, *, HW, pad, P):
    # project_out (1x1 conv) fused with the FuseBlock residual add, written
    # back into the flat-padded layout (residual halo is zero, so adding the
    # full-width residual keeps the halo invariant).
    y = jnp.dot(w_ref[...], x_ref[...], preferred_element_type=jnp.float32)
    y = _pad_cols(y, pad, P, HW) + r_ref[...].astype(jnp.float32)
    o_ref[...] = y.astype(o_ref.dtype)


def attn_kernel(q_ref, k_ref, v_ref, t_ref, o_ref):
    # one (batch, head) per grid step; q,k,v blocks are (ch, HW)
    q = q_ref[...].astype(jnp.float32)
    k = k_ref[...].astype(jnp.float32)
    # torch.nn.functional.normalize(p=2, dim=-1, eps=1e-12)
    qn = q * jax.lax.rsqrt(jnp.maximum(jnp.sum(q * q, -1, keepdims=True), 1e-24))
    kn = k * jax.lax.rsqrt(jnp.maximum(jnp.sum(k * k, -1, keepdims=True), 1e-24))
    attn = jnp.einsum("cs,ds->cd", qn.astype(jnp.bfloat16),
                      kn.astype(jnp.bfloat16),
                      preferred_element_type=jnp.float32) * t_ref[...]
    attn = attn - jnp.max(attn, axis=-1, keepdims=True)
    p = jnp.exp(attn)
    p = p * pl.reciprocal(jnp.sum(p, axis=-1, keepdims=True), approx=True)
    o_ref[...] = jnp.dot(p.astype(jnp.bfloat16), v_ref[...],
                         preferred_element_type=jnp.float32).astype(o_ref.dtype)


# --------------------------------------------------------------------------- #
# wrappers
# --------------------------------------------------------------------------- #

def conv3x3(x, wmat, bias, *, H, W, relu=False, pad_out=True):
    # x: (B, Cin, P) bf16 flat-padded; wmat: (Cout, 9*Cin) bf16; bias: (Cout,1) f32
    B, Cin, P = x.shape
    Cout = wmat.shape[0]
    HW = H * W
    pad = W + 1
    out_cols = P if pad_out else HW
    kern = functools.partial(conv3x3_kernel, W=W, HW=HW, pad=pad, relu=relu,
                             pad_out=pad_out, P=P)
    return pl.pallas_call(
        kern,
        out_shape=jax.ShapeDtypeStruct((B, Cout, out_cols), jnp.bfloat16),
        grid=(B,),
        in_specs=[pl.BlockSpec((None, Cin, P), lambda b: (b, 0, 0)),
                  pl.BlockSpec((Cout, 9 * Cin), lambda b: (0, 0)),
                  pl.BlockSpec((Cout, 1), lambda b: (0, 0))],
        out_specs=pl.BlockSpec((None, Cout, out_cols), lambda b: (b, 0, 0)),
        compiler_params=_cparams(1, _conv_workset(Cin, Cout, P, HW, 2)),
    )(x, wmat, bias)


def conv3x3_dual(x1, x2, w1, w2, bias, *, H, W, relu=True):
    B, Cin, P = x1.shape
    Cout = w1.shape[0]
    HW = H * W
    pad = W + 1
    kern = functools.partial(conv3x3_dual_kernel, W=W, HW=HW, pad=pad,
                             relu=relu, P=P)
    x_spec = pl.BlockSpec((None, Cin, P), lambda b: (b, 0, 0))
    w_spec = pl.BlockSpec((Cout, 9 * Cin), lambda b: (0, 0))
    return pl.pallas_call(
        kern,
        out_shape=jax.ShapeDtypeStruct((B, Cout, P), jnp.bfloat16),
        grid=(B,),
        in_specs=[x_spec, x_spec, w_spec, w_spec,
                  pl.BlockSpec((Cout, 1), lambda b: (0, 0))],
        out_specs=pl.BlockSpec((None, Cout, P), lambda b: (b, 0, 0)),
        compiler_params=_cparams(1, _conv_workset(Cin, Cout, P, HW, 2, n_in=2)),
    )(x1, x2, w1, w2, bias)


def conv3x3_gate(h1, fre, spa, wf, ws, bf, bs, *, H, W):
    B, Cin, P = h1.shape
    C = wf.shape[0]
    HW = H * W
    pad = W + 1
    kern = functools.partial(conv3x3_gate_kernel, W=W, HW=HW, pad=pad)
    h_spec = pl.BlockSpec((None, Cin, P), lambda b: (b, 0, 0))
    g_spec = pl.BlockSpec((None, C, P), lambda b: (b, 0, 0))
    w_spec = pl.BlockSpec((C, 9 * Cin), lambda b: (0, 0))
    b_spec = pl.BlockSpec((C, 1), lambda b: (0, 0))
    ws_bytes = _conv_workset(Cin, 2 * C, P, HW, 4) + 4 * C * P * 2
    return pl.pallas_call(
        kern,
        out_shape=jax.ShapeDtypeStruct((B, C, HW), jnp.float32),
        grid=(B,),
        in_specs=[h_spec, g_spec, g_spec, w_spec, w_spec, b_spec, b_spec],
        out_specs=pl.BlockSpec((None, C, HW), lambda b: (b, 0, 0)),
        compiler_params=_cparams(1, ws_bytes),
    )(h1, fre, spa, wf, ws, bf, bs)


def conv1x1_residual(x, wmat, resid, *, H, W):
    # x: (B, Cin, HW) bf16; wmat: (Cout, Cin) bf16; resid: (B, Cout, P) bf16
    B, Cin, HW = x.shape
    Cout = wmat.shape[0]
    P = resid.shape[-1]
    pad = W + 1
    kern = functools.partial(proj_res_kernel, HW=HW, pad=pad, P=P)
    ws_bytes = 2 * Cin * HW * 2 + 4 * Cout * P * 2 + Cout * Cin * 2 + Cout * HW * 4
    return pl.pallas_call(
        kern,
        out_shape=jax.ShapeDtypeStruct((B, Cout, P), jnp.bfloat16),
        grid=(B,),
        in_specs=[pl.BlockSpec((None, Cin, HW), lambda b: (b, 0, 0)),
                  pl.BlockSpec((Cout, Cin), lambda b: (0, 0)),
                  pl.BlockSpec((None, Cout, P), lambda b: (b, 0, 0))],
        out_specs=pl.BlockSpec((None, Cout, P), lambda b: (b, 0, 0)),
        compiler_params=_cparams(1, ws_bytes),
    )(x, wmat, resid)


def attention_core(q, kv, temperature, *, heads):
    # q: (B, C, HW) bf16; kv: (B, 2C, HW) bf16 (k channels first); temperature: (heads,)
    B, C, HW = q.shape
    ch = C // heads
    q4 = q.reshape(B, heads, ch, HW)          # '(head c)' split: free reshape
    kv5 = kv.reshape(B, 2, heads, ch, HW)     # chunk(2) + head split: free reshape
    t3 = temperature.reshape(heads, 1, 1).astype(jnp.float32)
    q_spec = pl.BlockSpec((None, None, ch, HW), lambda b, h: (b, h, 0, 0))
    k_spec = pl.BlockSpec((None, None, None, ch, HW), lambda b, h: (b, 0, h, 0, 0))
    v_spec = pl.BlockSpec((None, None, None, ch, HW), lambda b, h: (b, 1, h, 0, 0))
    t_spec = pl.BlockSpec((None, 1, 1), lambda b, h: (h, 0, 0))
    out = pl.pallas_call(
        attn_kernel,
        out_shape=jax.ShapeDtypeStruct((B, heads, ch, HW), jnp.bfloat16),
        grid=(B, heads),
        in_specs=[q_spec, k_spec, v_spec, t_spec],
        out_specs=q_spec,
        compiler_params=_cparams(2, 10 * ch * HW * 4),
    )(q4, kv5, kv5, t3)
    return out.reshape(B, C, HW)


def attention_forward(att, x, y, *, H, W):
    # project_out(Attention(x, y)) + x, all in the flat-padded channel-major layout
    q_ = conv3x3(x, att["q_wmat"], att["q_b"], H=H, W=W, pad_out=False)
    kv_ = conv3x3(y, att["kv_wmat"], att["kv_b"], H=H, W=W, pad_out=False)
    out = attention_core(q_, kv_, att["temperature"], heads=NUM_HEADS)
    return conv1x1_residual(out, att["proj_wmat"], x, H=H, W=W)


# --------------------------------------------------------------------------- #
# parameter preparation (folds, transposes, casts) and model forward
# --------------------------------------------------------------------------- #

def prepare_params(p):
    def wmat(w9):  # (9, Cin, Cout) -> (Cout, 9*Cin) bf16, K ordered tap-major
        t, cin, cout = w9.shape
        return jnp.transpose(w9.reshape(t * cin, cout)).astype(jnp.bfloat16)

    def bvec(b):
        return b.reshape(-1, 1).astype(jnp.float32)

    def bn_fold(w9, b, g, beta, mean, var, eps=1e-5):
        scale = g * jax.lax.rsqrt(var + eps)
        return w9 * scale, b * scale + (beta - mean * scale)

    C = p["fre_b"].shape[0]
    out = {
        "fre_wmat": wmat(p["fre_w"]), "fre_b": bvec(p["fre_b"]),
        "spa_wmat": wmat(p["spa_w"]), "spa_b": bvec(p["spa_b"]),
    }

    # fuse1: Conv2d(2C->C)+BN1+ReLU; split input channels (fre first, spa second)
    w1, b1 = bn_fold(p["fuse1_w"], p["fuse1_b"], p["bn1_g"], p["bn1_b"],
                     p["bn1_m"], p["bn1_v"])
    out["fuse1_wf"] = wmat(w1[:, :C, :])
    out["fuse1_ws"] = wmat(w1[:, C:, :])
    out["fuse1_b"] = bvec(b1)

    # fuse2: Conv2d(C->2C)+BN2+Sigmoid; split output channels (fre_a, spa_a)
    w2, b2 = bn_fold(p["fuse2_w"], p["fuse2_b"], p["bn2_g"], p["bn2_b"],
                     p["bn2_m"], p["bn2_v"])
    out["fuse2_wf"], out["fuse2_bf"] = wmat(w2[..., :C]), bvec(b2[:C])
    out["fuse2_ws"], out["fuse2_bs"] = wmat(w2[..., C:]), bvec(b2[C:])

    # Attention: 1x1 conv + depthwise 3x3 (both bias-free) folded into one 3x3
    att = p["att"]
    w_q3 = att["q_w"][None, :, :] * att["q_dw_w"]       # (9, C, C)
    w_kv3 = att["kv_w"][None, :, :] * att["kv_dw_w"]    # (9, C, 2C)
    out["att"] = {
        "q_wmat": wmat(w_q3), "q_b": bvec(jnp.zeros((C,), jnp.float32)),
        "kv_wmat": wmat(w_kv3), "kv_b": bvec(jnp.zeros((2 * C,), jnp.float32)),
        "proj_wmat": att["proj_w"].T.astype(jnp.bfloat16),
        "temperature": att["temperature"],
    }
    return out


def fuseblock_forward(p, spa_nchw, fre_nchw):
    B, C, H, W = spa_nchw.shape
    HW = H * W
    pad = W + 1
    P = _round_up(HW + 2 * pad, 128)
    pp = prepare_params(p)

    fre = _to_flat_padded(fre_nchw.astype(jnp.float32), P, pad)
    spa = _to_flat_padded(spa_nchw.astype(jnp.float32), P, pad)

    fre = conv3x3(fre, pp["fre_wmat"], pp["fre_b"], H=H, W=W)
    spa = conv3x3(spa, pp["spa_wmat"], pp["spa_b"], H=H, W=W)

    fre = attention_forward(pp["att"], fre, spa, H=H, W=W)  # fre_att(fre, spa) + fre
    spa = attention_forward(pp["att"], spa, fre, H=H, W=W)  # fre_att(spa, fre') + spa

    h1 = conv3x3_dual(fre, spa, pp["fuse1_wf"], pp["fuse1_ws"], pp["fuse1_b"],
                      H=H, W=W, relu=True)
    res = conv3x3_gate(h1, fre, spa, pp["fuse2_wf"], pp["fuse2_ws"],
                       pp["fuse2_bf"], pp["fuse2_bs"], H=H, W=W)
    return res.reshape(B, C, H, W)  # channel-major layout -> NCHW is a free reshape


# --------------------------------------------------------------------------- #
# params (random init mirroring the PyTorch module structure)
# --------------------------------------------------------------------------- #

def init_params(key, C):
    ks = jax.random.split(key, 13)

    def w(k, shape, scale=0.1):
        return (scale * jax.random.normal(k, shape)).astype(jnp.float32)

    return {
        "fre_w": w(ks[0], (9, C, C)), "fre_b": w(ks[1], (C,)),
        "spa_w": w(ks[2], (9, C, C)), "spa_b": w(ks[3], (C,)),
        "fuse1_w": w(ks[4], (9, 2 * C, C)), "fuse1_b": w(ks[5], (C,)),
        "fuse2_w": w(ks[6], (9, C, 2 * C)), "fuse2_b": w(ks[7], (2 * C,)),
        # BatchNorm2d PyTorch defaults (eval mode)
        "bn1_g": jnp.ones((C,), jnp.float32), "bn1_b": jnp.zeros((C,), jnp.float32),
        "bn1_m": jnp.zeros((C,), jnp.float32), "bn1_v": jnp.ones((C,), jnp.float32),
        "bn2_g": jnp.ones((2 * C,), jnp.float32), "bn2_b": jnp.zeros((2 * C,), jnp.float32),
        "bn2_m": jnp.zeros((2 * C,), jnp.float32), "bn2_v": jnp.ones((2 * C,), jnp.float32),
        "att": {
            "temperature": jnp.ones((NUM_HEADS,), jnp.float32),
            "kv_w": w(ks[8], (C, 2 * C)),          # 1x1 conv, no bias
            "kv_dw_w": w(ks[9], (9, 1, 2 * C)),    # depthwise 3x3, no bias
            "q_w": w(ks[10], (C, C)),
            "q_dw_w": w(ks[11], (9, 1, C)),
            "proj_w": w(ks[12], (C, C)),
        },
    }


if __name__ == "__main__":
    key = jax.random.PRNGKey(0)
    k1, k2, k3 = jax.random.split(key, 3)
    B, C, H, W = 2, 16, 8, 8          # channels must be divisible by num_heads=8
    spa = jax.random.normal(k1, (B, C, H, W), jnp.float32)
    fre = jax.random.normal(k2, (B, C, H, W), jnp.float32)
    params = init_params(k3, C)

    fwd = jax.jit(functools.partial(fuseblock_forward, params))
    out = fwd(spa, fre)
    jax.block_until_ready(out)
    assert out.shape == (B, C, H, W)
    assert bool(jnp.all(jnp.isfinite(out)))
    print("KERNEL_OK")
</pallas_src>

<mosaic_0001>
module attributes {stable_mosaic.version = 11 : i64} {
  func.func @conv3x3_kernel(%arg0: i32, %arg1: memref<1x16x128xbf16, #tpu.memory_space<vmem>>, %arg2: memref<16x144xbf16, #tpu.memory_space<vmem>>, %arg3: memref<16x1xf32, #tpu.memory_space<vmem>>, %arg4: memref<1x16x64xbf16, #tpu.memory_space<vmem>>) attributes {dimension_semantics = [#tpu.dimension_semantics<parallel>], iteration_bounds = array<i64: 2>, scalar_prefetch = 0 : i64, scratch_operands = 0 : i64, tpu.core_type = #tpu.core_type<tc>, window_params = [{transform_indices = @transform_0, window_bounds = array<i64: 1, 16, 128>}, {pipeline_mode = #tpu.pipeline_mode<synchronous>, transform_indices = @transform_1, window_bounds = array<i64: 16, 144>}, {pipeline_mode = #tpu.pipeline_mode<synchronous>, transform_indices = @transform_2, window_bounds = array<i64: 16, 1>}, {transform_indices = @transform_3, window_bounds = array<i64: 1, 16, 64>}]} {
    %c0 = arith.constant 0 : index
    %c0_0 = arith.constant 0 : index
    %0 = vector.load %arg2[%c0, %c0_0] : memref<16x144xbf16, #tpu.memory_space<vmem>>, vector<16x144xbf16>
    %1 = tpu.iota {dimensions = array<i32: 1>} : vector<1x64xi32>
    %c8_i32 = arith.constant 8 : i32
    %c0_i32 = arith.constant 0 : i32
    %2 = arith.cmpi eq, %c8_i32, %c0_i32 : i32
    %c1_i32 = arith.constant 1 : i32
    %3 = arith.select %2, %c1_i32, %c8_i32 : i32
    %4 = vector.broadcast %3 : i32 to vector<1x64xi32>
    %5 = arith.remsi %1, %4 : vector<1x64xi32>
    %c0_i32_1 = arith.constant 0 : i32
    %6 = vector.broadcast %c0_i32_1 : i32 to vector<1x64xi32>
    %7 = arith.cmpi ne, %5, %6 : vector<1x64xi32>
    %c0_i32_2 = arith.constant 0 : i32
    %8 = vector.broadcast %c0_i32_2 : i32 to vector<1x64xi32>
    %9 = arith.cmpi slt, %5, %8 : vector<1x64xi32>
    %c0_i32_3 = arith.constant 0 : i32
    %10 = arith.cmpi slt, %3, %c0_i32_3 : i32
    %11 = vector.broadcast %10 : i1 to vector<1x64xi1>
    %12 = vector.broadcast %11 : vector<1x64xi1> to vector<1x64xi1>
    %13 = arith.xori %9, %12 : vector<1x64xi1>
    %14 = arith.andi %13, %7 : vector<1x64xi1>
    %15 = vector.broadcast %3 : i32 to vector<1x64xi32>
    %16 = arith.addi %5, %15 : vector<1x64xi32>
    %17 = arith.select %14, %16, %5 : vector<1x64xi1>, vector<1x64xi32>
    %c1_i32_4 = arith.constant 1 : i32
    %18 = vector.broadcast %c1_i32_4 : i32 to vector<1x64xi32>
    %19 = arith.cmpi sge, %17, %18 : vector<1x64xi32>
    %c6_i32 = arith.constant 6 : i32
    %20 = vector.broadcast %c6_i32 : i32 to vector<1x64xi32>
    %21 = arith.cmpi sle, %17, %20 : vector<1x64xi32>
    %c0_5 = arith.constant 0 : index
    %c0_6 = arith.constant 0 : index
    %c0_7 = arith.constant 0 : index
    %22 = vector.load %arg1[%c0_5, %c0_6, %c0_7] : memref<1x16x128xbf16, #tpu.memory_space<vmem>>, vector<1x16x64xbf16>
    %23 = vector.shape_cast %22 : vector<1x16x64xbf16> to vector<16x64xbf16>
    %cst = arith.constant 0.000000e+00 : bf16
    %24 = vector.broadcast %cst : bf16 to vector<16x64xbf16>
    %25 = vector.shape_cast %19 : vector<1x64xi1> to vector<1x64xi1>
    %26 = vector.broadcast %25 : vector<1x64xi1> to vector<16x64xi1>
    %27 = arith.select %26, %23, %24 : vector<16x64xi1>, vector<16x64xbf16>
    %c0_8 = arith.constant 0 : index
    %c0_9 = arith.constant 0 : index
    %c1 = arith.constant 1 : index
    %28 = vector.load %arg1[%c0_8, %c0_9, %c1] : memref<1x16x128xbf16, #tpu.memory_space<vmem>>, vector<1x16x64xbf16>
    %29 = vector.shape_cast %28 : vector<1x16x64xbf16> to vector<16x64xbf16>
    %c0_10 = arith.constant 0 : index
    %c0_11 = arith.constant 0 : index
    %c2 = arith.constant 2 : index
    %30 = vector.load %arg1[%c0_10, %c0_11, %c2] : memref<1x16x128xbf16, #tpu.memory_space<vmem>>, vector<1x16x64xbf16>
    %31 = vector.shape_cast %30 : vector<1x16x64xbf16> to vector<16x64xbf16>
    %cst_12 = arith.constant 0.000000e+00 : bf16
    %32 = vector.broadcast %cst_12 : bf16 to vector<16x64xbf16>
    %33 = vector.shape_cast %21 : vector<1x64xi1> to vector<1x64xi1>
    %34 = vector.broadcast %33 : vector<1x64xi1> to vector<16x64xi1>
    %35 = arith.select %34, %31, %32 : vector<16x64xi1>, vector<16x64xbf16>
    %c0_13 = arith.constant 0 : index
    %c0_14 = arith.constant 0 : index
    %c8 = arith.constant 8 : index
    %36 = vector.load %arg1[%c0_13, %c0_14, %c8] : memref<1x16x128xbf16, #tpu.memory_space<vmem>>, vector<1x16x64xbf16>
    %37 = vector.shape_cast %36 : vector<1x16x64xbf16> to vector<16x64xbf16>
    %cst_15 = arith.constant 0.000000e+00 : bf16
    %38 = vector.broadcast %cst_15 : bf16 to vector<16x64xbf16>
    %39 = vector.shape_cast %19 : vector<1x64xi1> to vector<1x64xi1>
    %40 = vector.broadcast %39 : vector<1x64xi1> to vector<16x64xi1>
    %41 = arith.select %40, %37, %38 : vector<16x64xi1>, vector<16x64xbf16>
    %c0_16 = arith.constant 0 : index
    %c0_17 = arith.constant 0 : index
    %c9 = arith.constant 9 : index
    %42 = vector.load %arg1[%c0_16, %c0_17, %c9] : memref<1x16x128xbf16, #tpu.memory_space<vmem>>, vector<1x16x64xbf16>
    %43 = vector.shape_cast %42 : vector<1x16x64xbf16> to vector<16x64xbf16>
    %c0_18 = arith.constant 0 : index
    %c0_19 = arith.constant 0 : index
    %c10 = arith.constant 10 : index
    %44 = vector.load %arg1[%c0_18, %c0_19, %c10] : memref<1x16x128xbf16, #tpu.memory_space<vmem>>, vector<1x16x64xbf16>
    %45 = vector.shape_cast %44 : vector<1x16x64xbf16> to vector<16x64xbf16>
    %cst_20 = arith.constant 0.000000e+00 : bf16
    %46 = vector.broadcast %cst_20 : bf16 to vector<16x64xbf16>
    %47 = vector.shape_cast %21 : vector<1x64xi1> to vector<1x64xi1>
    %48 = vector.broadcast %47 : vector<1x64xi1> to vector<16x64xi1>
    %49 = arith.select %48, %45, %46 : vector<16x64xi1>, vector<16x64xbf16>
    %c0_21 = arith.constant 0 : index
    %c0_22 = arith.constant 0 : index
    %c16 = arith.constant 16 : index
    %50 = vector.load %arg1[%c0_21, %c0_22, %c16] : memref<1x16x128xbf16, #tpu.memory_space<vmem>>, vector<1x16x64xbf16>
    %51 = vector.shape_cast %50 : vector<1x16x64xbf16> to vector<16x64xbf16>
    %cst_23 = arith.constant 0.000000e+00 : bf16
    %52 = vector.broadcast %cst_23 : bf16 to vector<16x64xbf16>
    %53 = vector.shape_cast %19 : vector<1x64xi1> to vector<1x64xi1>
    %54 = vector.broadcast %53 : vector<1x64xi1> to vector<16x64xi1>
    %55 = arith.select %54, %51, %52 : vector<16x64xi1>, vector<16x64xbf16>
    %c0_24 = arith.constant 0 : index
    %c0_25 = arith.constant 0 : index
    %c17 = arith.constant 17 : index
    %56 = vector.load %arg1[%c0_24, %c0_25, %c17] : memref<1x16x128xbf16, #tpu.memory_space<vmem>>, vector<1x16x64xbf16>
    %57 = vector.shape_cast %56 : vector<1x16x64xbf16> to vector<16x64xbf16>
    %c0_26 = arith.constant 0 : index
    %c0_27 = arith.constant 0 : index
    %c18 = arith.constant 18 : index
    %58 = vector.load %arg1[%c0_26, %c0_27, %c18] : memref<1x16x128xbf16, #tpu.memory_space<vmem>>, vector<1x16x64xbf16>
    %59 = vector.shape_cast %58 : vector<1x16x64xbf16> to vector<16x64xbf16>
    %cst_28 = arith.constant 0.000000e+00 : bf16
    %60 = vector.broadcast %cst_28 : bf16 to vector<16x64xbf16>
    %61 = vector.shape_cast %21 : vector<1x64xi1> to vector<1x64xi1>
    %62 = vector.broadcast %61 : vector<1x64xi1> to vector<16x64xi1>
    %63 = arith.select %62, %59, %60 : vector<16x64xi1>, vector<16x64xbf16>
    %64 = tpu.concatenate %27, %29, %35, %41, %43, %49, %55, %57, %63 in 0 : vector<16x64xbf16>, vector<16x64xbf16>, vector<16x64xbf16>, vector<16x64xbf16>, vector<16x64xbf16>, vector<16x64xbf16>, vector<16x64xbf16>, vector<16x64xbf16>, vector<16x64xbf16> -> vector<144x64xbf16>
    %cst_29 = arith.constant dense<0.000000e+00> : vector<16x64xf32>
    %65 = tpu.matmul %0, %64, %cst_29 {dimension_numbers = #tpu.dot_dimension_numbers<[1], [0], [0], [1], [0, 0, 1, 1], [], []>} : vector<16x144xbf16>, vector<144x64xbf16>, vector<16x64xf32> -> vector<16x64xf32>
    %c0_30 = arith.constant 0 : index
    %c0_31 = arith.constant 0 : index
    %66 = vector.load %arg3[%c0_30, %c0_31] : memref<16x1xf32, #tpu.memory_space<vmem>>, vector<16x1xf32>
    %67 = vector.broadcast %66 : vector<16x1xf32> to vector<16x64xf32>
    %68 = arith.addf %65, %67 : vector<16x64xf32>
    %69 = arith.truncf %68 : vector<16x64xf32> to vector<16x64xbf16>
    %c0_32 = arith.constant 0 : index
    %c0_33 = arith.constant 0 : index
    %c0_34 = arith.constant 0 : index
    %70 = vector.load %arg4[%c0_32, %c0_33, %c0_34] : memref<1x16x64xbf16, #tpu.memory_space<vmem>>, vector<1x16x64xbf16>
    %71 = vector.shape_cast %70 : vector<1x16x64xbf16> to vector<16x64xbf16>
    %72 = vector.shape_cast %69 : vector<16x64xbf16> to vector<1x16x64xbf16>
    tpu.vector_store %arg4[%c0_32, %c0_33, %c0_34], %72 {strides = array<i32>} : memref<1x16x64xbf16, #tpu.memory_space<vmem>>, vector<1x16x64xbf16>,
    return
  }
  func.func @transform_0(%arg0: i32) -> (i32, i32, i32) {
    %c0_i32 = arith.constant 0 : i32
    %c0_i32_0 = arith.constant 0 : i32
    %c0_i32_1 = arith.constant 0 : i32
    return %arg0, %c0_i32, %c0_i32_0 : i32, i32, i32
  }
  func.func @transform_1(%arg0: i32) -> (i32, i32) {
    %c0_i32 = arith.constant 0 : i32
    %c0_i32_0 = arith.constant 0 : i32
    %c0_i32_1 = arith.constant 0 : i32
    return %c0_i32, %c0_i32_0 : i32, i32
  }
  func.func @transform_2(%arg0: i32) -> (i32, i32) {
    %c0_i32 = arith.constant 0 : i32
    %c0_i32_0 = arith.constant 0 : i32
    %c0_i32_1 = arith.constant 0 : i32
    return %c0_i32, %c0_i32_0 : i32, i32
  }
  func.func @transform_3(%arg0: i32) -> (i32, i32, i32) {
    %c0_i32 = arith.constant 0 : i32
    %c0_i32_0 = arith.constant 0 : i32
    %c0_i32_1 = arith.constant 0 : i32
    return %arg0, %c0_i32, %c0_i32_0 : i32, i32, i32
  }
}

module attributes {stable_mosaic.version = 11 : i64} {
  func.func @conv3x3_kernel(%arg0: i32, %arg1: memref<1x16x128xbf16, #tpu.memory_space<vmem>>, %arg2: memref<16x144xbf16, #tpu.memory_space<vmem>>, %arg3: memref<16x1xf32, #tpu.memory_space<vmem>>, %arg4: memref<1x16x128xbf16, #tpu.memory_space<vmem>>) attributes {dimension_semantics = [#tpu.dimension_semantics<parallel>], iteration_bounds = array<i64: 2>, scalar_prefetch = 0 : i64, scratch_operands = 0 : i64, tpu.core_type = #tpu.core_type<tc>, window_params = [{transform_indices = @transform_0, window_bounds = array<i64: 1, 16, 128>}, {pipeline_mode = #tpu.pipeline_mode<synchronous>, transform_indices = @transform_1, window_bounds = array<i64: 16, 144>}, {pipeline_mode = #tpu.pipeline_mode<synchronous>, transform_indices = @transform_2, window_bounds = array<i64: 16, 1>}, {transform_indices = @transform_3, window_bounds = array<i64: 1, 16, 128>}]} {
    %c0 = arith.constant 0 : index
    %c0_0 = arith.constant 0 : index
    %0 = vector.load %arg2[%c0, %c0_0] : memref<16x144xbf16, #tpu.memory_space<vmem>>, vector<16x144xbf16>
    %1 = tpu.iota {dimensions = array<i32: 1>} : vector<1x64xi32>
    %c8_i32 = arith.constant 8 : i32
    %c0_i32 = arith.constant 0 : i32
    %2 = arith.cmpi eq, %c8_i32, %c0_i32 : i32
    %c1_i32 = arith.constant 1 : i32
    %3 = arith.select %2, %c1_i32, %c8_i32 : i32
    %4 = vector.broadcast %3 : i32 to vector<1x64xi32>
    %5 = arith.remsi %1, %4 : vector<1x64xi32>
    %c0_i32_1 = arith.constant 0 : i32
    %6 = vector.broadcast %c0_i32_1 : i32 to vector<1x64xi32>
    %7 = arith.cmpi ne, %5, %6 : vector<1x64xi32>
    %c0_i32_2 = arith.constant 0 : i32
    %8 = vector.broadcast %c0_i32_2 : i32 to vector<1x64xi32>
    %9 = arith.cmpi slt, %5, %8 : vector<1x64xi32>
    %c0_i32_3 = arith.constant 0 : i32
    %10 = arith.cmpi slt, %3, %c0_i32_3 : i32
    %11 = vector.broadcast %10 : i1 to vector<1x64xi1>
    %12 = vector.broadcast %11 : vector<1x64xi1> to vector<1x64xi1>
    %13 = arith.xori %9, %12 : vector<1x64xi1>
    %14 = arith.andi %13, %7 : vector<1x64xi1>
    %15 = vector.broadcast %3 : i32 to vector<1x64xi32>
    %16 = arith.addi %5, %15 : vector<1x64xi32>
    %17 = arith.select %14, %16, %5 : vector<1x64xi1>, vector<1x64xi32>
    %c1_i32_4 = arith.constant 1 : i32
    %18 = vector.broadcast %c1_i32_4 : i32 to vector<1x64xi32>
    %19 = arith.cmpi sge, %17, %18 : vector<1x64xi32>
    %c6_i32 = arith.constant 6 : i32
    %20 = vector.broadcast %c6_i32 : i32 to vector<1x64xi32>
    %21 = arith.cmpi sle, %17, %20 : vector<1x64xi32>
    %c0_5 = arith.constant 0 : index
    %c0_6 = arith.constant 0 : index
    %c0_7 = arith.constant 0 : index
    %22 = vector.load %arg1[%c0_5, %c0_6, %c0_7] : memref<1x16x128xbf16, #tpu.memory_space<vmem>>, vector<1x16x64xbf16>
    %23 = vector.shape_cast %22 : vector<1x16x64xbf16> to vector<16x64xbf16>
    %cst = arith.constant 0.000000e+00 : bf16
    %24 = vector.broadcast %cst : bf16 to vector<16x64xbf16>
    %25 = vector.shape_cast %19 : vector<1x64xi1> to vector<1x64xi1>
    %26 = vector.broadcast %25 : vector<1x64xi1> to vector<16x64xi1>
    %27 = arith.select %26, %23, %24 : vector<16x64xi1>, vector<16x64xbf16>
    %c0_8 = arith.constant 0 : index
    %c0_9 = arith.constant 0 : index
    %c1 = arith.constant 1 : index
    %28 = vector.load %arg1[%c0_8, %c0_9, %c1] : memref<1x16x128xbf16, #tpu.memory_space<vmem>>, vector<1x16x64xbf16>
    %29 = vector.shape_cast %28 : vector<1x16x64xbf16> to vector<16x64xbf16>
    %c0_10 = arith.constant 0 : index
    %c0_11 = arith.constant 0 : index
    %c2 = arith.constant 2 : index
    %30 = vector.load %arg1[%c0_10, %c0_11, %c2] : memref<1x16x128xbf16, #tpu.memory_space<vmem>>, vector<1x16x64xbf16>
    %31 = vector.shape_cast %30 : vector<1x16x64xbf16> to vector<16x64xbf16>
    %cst_12 = arith.constant 0.000000e+00 : bf16
    %32 = vector.broadcast %cst_12 : bf16 to vector<16x64xbf16>
    %33 = vector.shape_cast %21 : vector<1x64xi1> to vector<1x64xi1>
    %34 = vector.broadcast %33 : vector<1x64xi1> to vector<16x64xi1>
    %35 = arith.select %34, %31, %32 : vector<16x64xi1>, vector<16x64xbf16>
    %c0_13 = arith.constant 0 : index
    %c0_14 = arith.constant 0 : index
    %c8 = arith.constant 8 : index
    %36 = vector.load %arg1[%c0_13, %c0_14, %c8] : memref<1x16x128xbf16, #tpu.memory_space<vmem>>, vector<1x16x64xbf16>
    %37 = vector.shape_cast %36 : vector<1x16x64xbf16> to vector<16x64xbf16>
    %cst_15 = arith.constant 0.000000e+00 : bf16
    %38 = vector.broadcast %cst_15 : bf16 to vector<16x64xbf16>
    %39 = vector.shape_cast %19 : vector<1x64xi1> to vector<1x64xi1>
    %40 = vector.broadcast %39 : vector<1x64xi1> to vector<16x64xi1>
    %41 = arith.select %40, %37, %38 : vector<16x64xi1>, vector<16x64xbf16>
    %c0_16 = arith.constant 0 : index
    %c0_17 = arith.constant 0 : index
    %c9 = arith.constant 9 : index
    %42 = vector.load %arg1[%c0_16, %c0_17, %c9] : memref<1x16x128xbf16, #tpu.memory_space<vmem>>, vector<1x16x64xbf16>
    %43 = vector.shape_cast %42 : vector<1x16x64xbf16> to vector<16x64xbf16>
    %c0_18 = arith.constant 0 : index
    %c0_19 = arith.constant 0 : index
    %c10 = arith.constant 10 : index
    %44 = vector.load %arg1[%c0_18, %c0_19, %c10] : memref<1x16x128xbf16, #tpu.memory_space<vmem>>, vector<1x16x64xbf16>
    %45 = vector.shape_cast %44 : vector<1x16x64xbf16> to vector<16x64xbf16>
    %cst_20 = arith.constant 0.000000e+00 : bf16
    %46 = vector.broadcast %cst_20 : bf16 to vector<16x64xbf16>
    %47 = vector.shape_cast %21 : vector<1x64xi1> to vector<1x64xi1>
    %48 = vector.broadcast %47 : vector<1x64xi1> to vector<16x64xi1>
    %49 = arith.select %48, %45, %46 : vector<16x64xi1>, vector<16x64xbf16>
    %c0_21 = arith.constant 0 : index
    %c0_22 = arith.constant 0 : index
    %c16 = arith.constant 16 : index
    %50 = vector.load %arg1[%c0_21, %c0_22, %c16] : memref<1x16x128xbf16, #tpu.memory_space<vmem>>, vector<1x16x64xbf16>
    %51 = vector.shape_cast %50 : vector<1x16x64xbf16> to vector<16x64xbf16>
    %cst_23 = arith.constant 0.000000e+00 : bf16
    %52 = vector.broadcast %cst_23 : bf16 to vector<16x64xbf16>
    %53 = vector.shape_cast %19 : vector<1x64xi1> to vector<1x64xi1>
    %54 = vector.broadcast %53 : vector<1x64xi1> to vector<16x64xi1>
    %55 = arith.select %54, %51, %52 : vector<16x64xi1>, vector<16x64xbf16>
    %c0_24 = arith.constant 0 : index
    %c0_25 = arith.constant 0 : index
    %c17 = arith.constant 17 : index
    %56 = vector.load %arg1[%c0_24, %c0_25, %c17] : memref<1x16x128xbf16, #tpu.memory_space<vmem>>, vector<1x16x64xbf16>
    %57 = vector.shape_cast %56 : vector<1x16x64xbf16> to vector<16x64xbf16>
    %c0_26 = arith.constant 0 : index
    %c0_27 = arith.constant 0 : index
    %c18 = arith.constant 18 : index
    %58 = vector.load %arg1[%c0_26, %c0_27, %c18] : memref<1x16x128xbf16, #tpu.memory_space<vmem>>, vector<1x16x64xbf16>
    %59 = vector.shape_cast %58 : vector<1x16x64xbf16> to vector<16x64xbf16>
    %cst_28 = arith.constant 0.000000e+00 : bf16
    %60 = vector.broadcast %cst_28 : bf16 to vector<16x64xbf16>
    %61 = vector.shape_cast %21 : vector<1x64xi1> to vector<1x64xi1>
    %62 = vector.broadcast %61 : vector<1x64xi1> to vector<16x64xi1>
    %63 = arith.select %62, %59, %60 : vector<16x64xi1>, vector<16x64xbf16>
    %64 = tpu.concatenate %27, %29, %35, %41, %43, %49, %55, %57, %63 in 0 : vector<16x64xbf16>, vector<16x64xbf16>, vector<16x64xbf16>, vector<16x64xbf16>, vector<16x64xbf16>, vector<16x64xbf16>, vector<16x64xbf16>, vector<16x64xbf16>, vector<16x64xbf16> -> vector<144x64xbf16>
    %cst_29 = arith.constant dense<0.000000e+00> : vector<16x64xf32>
    %65 = tpu.matmul %0, %64, %cst_29 {dimension_numbers = #tpu.dot_dimension_numbers<[1], [0], [0], [1], [0, 0, 1, 1], [], []>} : vector<16x144xbf16>, vector<144x64xbf16>, vector<16x64xf32> -> vector<16x64xf32>
    %c0_30 = arith.constant 0 : index
    %c0_31 = arith.constant 0 : index
    %66 = vector.load %arg3[%c0_30, %c0_31] : memref<16x1xf32, #tpu.memory_space<vmem>>, vector<16x1xf32>
    %67 = vector.broadcast %66 : vector<16x1xf32> to vector<16x64xf32>
    %68 = arith.addf %65, %67 : vector<16x64xf32>
    %69 = arith.truncf %68 : vector<16x64xf32> to vector<16x64xbf16>
    %cst_32 = arith.constant 0.000000e+00 : bf16
    %70 = vector.broadcast %cst_32 : bf16 to vector<16x9xbf16>
    %cst_33 = arith.constant 0.000000e+00 : bf16
    %71 = vector.broadcast %cst_33 : bf16 to vector<16x55xbf16>
    %72 = tpu.concatenate %70, %69, %71 in 1 : vector<16x9xbf16>, vector<16x64xbf16>, vector<16x55xbf16> -> vector<16x128xbf16>
    %c0_34 = arith.constant 0 : index
    %c0_35 = arith.constant 0 : index
    %c0_36 = arith.constant 0 : index
    %73 = vector.load %arg4[%c0_34, %c0_35, %c0_36] : memref<1x16x128xbf16, #tpu.memory_space<vmem>>, vector<1x16x128xbf16>
    %74 = vector.shape_cast %73 : vector<1x16x128xbf16> to vector<16x128xbf16>
    %75 = vector.shape_cast %72 : vector<16x128xbf16> to vector<1x16x128xbf16>
    tpu.vector_store %arg4[%c0_34, %c0_35, %c0_36], %75 {strides = array<i32>} : memref<1x16x128xbf16, #tpu.memory_space<vmem>>, vector<1x16x128xbf16>,
    return
  }
  func.func @transform_0(%arg0: i32) -> (i32, i32, i32) {
    %c0_i32 = arith.constant 0 : i32
    %c0_i32_0 = arith.constant 0 : i32
    %c0_i32_1 = arith.constant 0 : i32
    return %arg0, %c0_i32, %c0_i32_0 : i32, i32, i32
  }
  func.func @transform_1(%arg0: i32) -> (i32, i32) {
    %c0_i32 = arith.constant 0 : i32
    %c0_i32_0 = arith.constant 0 : i32
    %c0_i32_1 = arith.constant 0 : i32
    return %c0_i32, %c0_i32_0 : i32, i32
  }
  func.func @transform_2(%arg0: i32) -> (i32, i32) {
    %c0_i32 = arith.constant 0 : i32
    %c0_i32_0 = arith.constant 0 : i32
    %c0_i32_1 = arith.constant 0 : i32
    return %c0_i32, %c0_i32_0 : i32, i32
  }
  func.func @transform_3(%arg0: i32) -> (i32, i32, i32) {
    %c0_i32 = arith.constant 0 : i32
    %c0_i32_0 = arith.constant 0 : i32
    %c0_i32_1 = arith.constant 0 : i32
    return %arg0, %c0_i32, %c0_i32_0 : i32, i32, i32
  }
}

module attributes {stable_mosaic.version = 11 : i64} {
  func.func @conv3x3_kernel(%arg0: i32, %arg1: memref<1x16x128xbf16, #tpu.memory_space<vmem>>, %arg2: memref<32x144xbf16, #tpu.memory_space<vmem>>, %arg3: memref<32x1xf32, #tpu.memory_space<vmem>>, %arg4: memref<1x32x64xbf16, #tpu.memory_space<vmem>>) attributes {dimension_semantics = [#tpu.dimension_semantics<parallel>], iteration_bounds = array<i64: 2>, scalar_prefetch = 0 : i64, scratch_operands = 0 : i64, tpu.core_type = #tpu.core_type<tc>, window_params = [{transform_indices = @transform_0, window_bounds = array<i64: 1, 16, 128>}, {pipeline_mode = #tpu.pipeline_mode<synchronous>, transform_indices = @transform_1, window_bounds = array<i64: 32, 144>}, {pipeline_mode = #tpu.pipeline_mode<synchronous>, transform_indices = @transform_2, window_bounds = array<i64: 32, 1>}, {transform_indices = @transform_3, window_bounds = array<i64: 1, 32, 64>}]} {
    %c0 = arith.constant 0 : index
    %c0_0 = arith.constant 0 : index
    %0 = vector.load %arg2[%c0, %c0_0] : memref<32x144xbf16, #tpu.memory_space<vmem>>, vector<32x144xbf16>
    %1 = tpu.iota {dimensions = array<i32: 1>} : vector<1x64xi32>
    %c8_i32 = arith.constant 8 : i32
    %c0_i32 = arith.constant 0 : i32
    %2 = arith.cmpi eq, %c8_i32, %c0_i32 : i32
    %c1_i32 = arith.constant 1 : i32
    %3 = arith.select %2, %c1_i32, %c8_i32 : i32
    %4 = vector.broadcast %3 : i32 to vector<1x64xi32>
    %5 = arith.remsi %1, %4 : vector<1x64xi32>
    %c0_i32_1 = arith.constant 0 : i32
    %6 = vector.broadcast %c0_i32_1 : i32 to vector<1x64xi32>
    %7 = arith.cmpi ne, %5, %6 : vector<1x64xi32>
    %c0_i32_2 = arith.constant 0 : i32
    %8 = vector.broadcast %c0_i32_2 : i32 to vector<1x64xi32>
    %9 = arith.cmpi slt, %5, %8 : vector<1x64xi32>
    %c0_i32_3 = arith.constant 0 : i32
    %10 = arith.cmpi slt, %3, %c0_i32_3 : i32
    %11 = vector.broadcast %10 : i1 to vector<1x64xi1>
    %12 = vector.broadcast %11 : vector<1x64xi1> to vector<1x64xi1>
    %13 = arith.xori %9, %12 : vector<1x64xi1>
    %14 = arith.andi %13, %7 : vector<1x64xi1>
    %15 = vector.broadcast %3 : i32 to vector<1x64xi32>
    %16 = arith.addi %5, %15 : vector<1x64xi32>
    %17 = arith.select %14, %16, %5 : vector<1x64xi1>, vector<1x64xi32>
    %c1_i32_4 = arith.constant 1 : i32
    %18 = vector.broadcast %c1_i32_4 : i32 to vector<1x64xi32>
    %19 = arith.cmpi sge, %17, %18 : vector<1x64xi32>
    %c6_i32 = arith.constant 6 : i32
    %20 = vector.broadcast %c6_i32 : i32 to vector<1x64xi32>
    %21 = arith.cmpi sle, %17, %20 : vector<1x64xi32>
    %c0_5 = arith.constant 0 : index
    %c0_6 = arith.constant 0 : index
    %c0_7 = arith.constant 0 : index
    %22 = vector.load %arg1[%c0_5, %c0_6, %c0_7] : memref<1x16x128xbf16, #tpu.memory_space<vmem>>, vector<1x16x64xbf16>
    %23 = vector.shape_cast %22 : vector<1x16x64xbf16> to vector<16x64xbf16>
    %cst = arith.constant 0.000000e+00 : bf16
    %24 = vector.broadcast %cst : bf16 to vector<16x64xbf16>
    %25 = vector.shape_cast %19 : vector<1x64xi1> to vector<1x64xi1>
    %26 = vector.broadcast %25 : vector<1x64xi1> to vector<16x64xi1>
    %27 = arith.select %26, %23, %24 : vector<16x64xi1>, vector<16x64xbf16>
    %c0_8 = arith.constant 0 : index
    %c0_9 = arith.constant 0 : index
    %c1 = arith.constant 1 : index
    %28 = vector.load %arg1[%c0_8, %c0_9, %c1] : memref<1x16x128xbf16, #tpu.memory_space<vmem>>, vector<1x16x64xbf16>
    %29 = vector.shape_cast %28 : vector<1x16x64xbf16> to vector<16x64xbf16>
    %c0_10 = arith.constant 0 : index
    %c0_11 = arith.constant 0 : index
    %c2 = arith.constant 2 : index
    %30 = vector.load %arg1[%c0_10, %c0_11, %c2] : memref<1x16x128xbf16, #tpu.memory_space<vmem>>, vector<1x16x64xbf16>
    %31 = vector.shape_cast %30 : vector<1x16x64xbf16> to vector<16x64xbf16>
    %cst_12 = arith.constant 0.000000e+00 : bf16
    %32 = vector.broadcast %cst_12 : bf16 to vector<16x64xbf16>
    %33 = vector.shape_cast %21 : vector<1x64xi1> to vector<1x64xi1>
    %34 = vector.broadcast %33 : vector<1x64xi1> to vector<16x64xi1>
    %35 = arith.select %34, %31, %32 : vector<16x64xi1>, vector<16x64xbf16>
    %c0_13 = arith.constant 0 : index
    %c0_14 = arith.constant 0 : index
    %c8 = arith.constant 8 : index
    %36 = vector.load %arg1[%c0_13, %c0_14, %c8] : memref<1x16x128xbf16, #tpu.memory_space<vmem>>, vector<1x16x64xbf16>
    %37 = vector.shape_cast %36 : vector<1x16x64xbf16> to vector<16x64xbf16>
    %cst_15 = arith.constant 0.000000e+00 : bf16
    %38 = vector.broadcast %cst_15 : bf16 to vector<16x64xbf16>
    %39 = vector.shape_cast %19 : vector<1x64xi1> to vector<1x64xi1>
    %40 = vector.broadcast %39 : vector<1x64xi1> to vector<16x64xi1>
    %41 = arith.select %40, %37, %38 : vector<16x64xi1>, vector<16x64xbf16>
    %c0_16 = arith.constant 0 : index
    %c0_17 = arith.constant 0 : index
    %c9 = arith.constant 9 : index
    %42 = vector.load %arg1[%c0_16, %c0_17, %c9] : memref<1x16x128xbf16, #tpu.memory_space<vmem>>, vector<1x16x64xbf16>
    %43 = vector.shape_cast %42 : vector<1x16x64xbf16> to vector<16x64xbf16>
    %c0_18 = arith.constant 0 : index
    %c0_19 = arith.constant 0 : index
    %c10 = arith.constant 10 : index
    %44 = vector.load %arg1[%c0_18, %c0_19, %c10] : memref<1x16x128xbf16, #tpu.memory_space<vmem>>, vector<1x16x64xbf16>
    %45 = vector.shape_cast %44 : vector<1x16x64xbf16> to vector<16x64xbf16>
    %cst_20 = arith.constant 0.000000e+00 : bf16
    %46 = vector.broadcast %cst_20 : bf16 to vector<16x64xbf16>
    %47 = vector.shape_cast %21 : vector<1x64xi1> to vector<1x64xi1>
    %48 = vector.broadcast %47 : vector<1x64xi1> to vector<16x64xi1>
    %49 = arith.select %48, %45, %46 : vector<16x64xi1>, vector<16x64xbf16>
    %c0_21 = arith.constant 0 : index
    %c0_22 = arith.constant 0 : index
    %c16 = arith.constant 16 : index
    %50 = vector.load %arg1[%c0_21, %c0_22, %c16] : memref<1x16x128xbf16, #tpu.memory_space<vmem>>, vector<1x16x64xbf16>
    %51 = vector.shape_cast %50 : vector<1x16x64xbf16> to vector<16x64xbf16>
    %cst_23 = arith.constant 0.000000e+00 : bf16
    %52 = vector.broadcast %cst_23 : bf16 to vector<16x64xbf16>
    %53 = vector.shape_cast %19 : vector<1x64xi1> to vector<1x64xi1>
    %54 = vector.broadcast %53 : vector<1x64xi1> to vector<16x64xi1>
    %55 = arith.select %54, %51, %52 : vector<16x64xi1>, vector<16x64xbf16>
    %c0_24 = arith.constant 0 : index
    %c0_25 = arith.constant 0 : index
    %c17 = arith.constant 17 : index
    %56 = vector.load %arg1[%c0_24, %c0_25, %c17] : memref<1x16x128xbf16, #tpu.memory_space<vmem>>, vector<1x16x64xbf16>
    %57 = vector.shape_cast %56 : vector<1x16x64xbf16> to vector<16x64xbf16>
    %c0_26 = arith.constant 0 : index
    %c0_27 = arith.constant 0 : index
    %c18 = arith.constant 18 : index
    %58 = vector.load %arg1[%c0_26, %c0_27, %c18] : memref<1x16x128xbf16, #tpu.memory_space<vmem>>, vector<1x16x64xbf16>
    %59 = vector.shape_cast %58 : vector<1x16x64xbf16> to vector<16x64xbf16>
    %cst_28 = arith.constant 0.000000e+00 : bf16
    %60 = vector.broadcast %cst_28 : bf16 to vector<16x64xbf16>
    %61 = vector.shape_cast %21 : vector<1x64xi1> to vector<1x64xi1>
    %62 = vector.broadcast %61 : vector<1x64xi1> to vector<16x64xi1>
    %63 = arith.select %62, %59, %60 : vector<16x64xi1>, vector<16x64xbf16>
    %64 = tpu.concatenate %27, %29, %35, %41, %43, %49, %55, %57, %63 in 0 : vector<16x64xbf16>, vector<16x64xbf16>, vector<16x64xbf16>, vector<16x64xbf16>, vector<16x64xbf16>, vector<16x64xbf16>, vector<16x64xbf16>, vector<16x64xbf16>, vector<16x64xbf16> -> vector<144x64xbf16>
    %cst_29 = arith.constant dense<0.000000e+00> : vector<32x64xf32>
    %65 = tpu.matmul %0, %64, %cst_29 {dimension_numbers = #tpu.dot_dimension_numbers<[1], [0], [0], [1], [0, 0, 1, 1], [], []>} : vector<32x144xbf16>, vector<144x64xbf16>, vector<32x64xf32> -> vector<32x64xf32>
    %c0_30 = arith.constant 0 : index
    %c0_31 = arith.constant 0 : index
    %66 = vector.load %arg3[%c0_30, %c0_31] : memref<32x1xf32, #tpu.memory_space<vmem>>, vector<32x1xf32>
    %67 = vector.broadcast %66 : vector<32x1xf32> to vector<32x64xf32>
    %68 = arith.addf %65, %67 : vector<32x64xf32>
    %69 = arith.truncf %68 : vector<32x64xf32> to vector<32x64xbf16>
    %c0_32 = arith.constant 0 : index
    %c0_33 = arith.constant 0 : index
    %c0_34 = arith.constant 0 : index
    %70 = vector.load %arg4[%c0_32, %c0_33, %c0_34] : memref<1x32x64xbf16, #tpu.memory_space<vmem>>, vector<1x32x64xbf16>
    %71 = vector.shape_cast %70 : vector<1x32x64xbf16> to vector<32x64xbf16>
    %72 = vector.shape_cast %69 : vector<32x64xbf16> to vector<1x32x64xbf16>
    tpu.vector_store %arg4[%c0_32, %c0_33, %c0_34], %72 {strides = array<i32>} : memref<1x32x64xbf16, #tpu.memory_space<vmem>>, vector<1x32x64xbf16>,
    return
  }
  func.func @transform_0(%arg0: i32) -> (i32, i32, i32) {
    %c0_i32 = arith.constant 0 : i32
    %c0_i32_0 = arith.constant 0 : i32
    %c0_i32_1 = arith.constant 0 : i32
    return %arg0, %c0_i32, %c0_i32_0 : i32, i32, i32
  }
  func.func @transform_1(%arg0: i32) -> (i32, i32) {
    %c0_i32 = arith.constant 0 : i32
    %c0_i32_0 = arith.constant 0 : i32
    %c0_i32_1 = arith.constant 0 : i32
    return %c0_i32, %c0_i32_0 : i32, i32
  }
  func.func @transform_2(%arg0: i32) -> (i32, i32) {
    %c0_i32 = arith.constant 0 : i32
    %c0_i32_0 = arith.constant 0 : i32
    %c0_i32_1 = arith.constant 0 : i32
    return %c0_i32, %c0_i32_0 : i32, i32
  }
  func.func @transform_3(%arg0: i32) -> (i32, i32, i32) {
    %c0_i32 = arith.constant 0 : i32
    %c0_i32_0 = arith.constant 0 : i32
    %c0_i32_1 = arith.constant 0 : i32
    return %arg0, %c0_i32, %c0_i32_0 : i32, i32, i32
  }
}

module attributes {stable_mosaic.version = 11 : i64} {
  func.func @attn_kernel(%arg0: i32, %arg1: i32, %arg2: memref<1x1x2x64xbf16, #tpu.memory_space<vmem>>, %arg3: memref<1x1x1x2x64xbf16, #tpu.memory_space<vmem>>, %arg4: memref<1x1x1x2x64xbf16, #tpu.memory_space<vmem>>, %arg5: memref<1x1x1xf32, #tpu.memory_space<vmem>>, %arg6: memref<1x1x2x64xbf16, #tpu.memory_space<vmem>>) attributes {dimension_semantics = [#tpu.dimension_semantics<parallel>, #tpu.dimension_semantics<parallel>], iteration_bounds = array<i64: 2, 8>, scalar_prefetch = 0 : i64, scratch_operands = 0 : i64, tpu.core_type = #tpu.core_type<tc>, window_params = [{transform_indices = @transform_0, window_bounds = array<i64: 1, 1, 2, 64>}, {transform_indices = @transform_1, window_bounds = array<i64: 1, 1, 1, 2, 64>}, {transform_indices = @transform_2, window_bounds = array<i64: 1, 1, 1, 2, 64>}, {transform_indices = @transform_3, window_bounds = array<i64: 1, 1, 1>}, {transform_indices = @transform_4, window_bounds = array<i64: 1, 1, 2, 64>}]} {
    %c0 = arith.constant 0 : index
    %c0_0 = arith.constant 0 : index
    %c0_1 = arith.constant 0 : index
    %c0_2 = arith.constant 0 : index
    %0 = vector.load %arg2[%c0, %c0_0, %c0_1, %c0_2] : memref<1x1x2x64xbf16, #tpu.memory_space<vmem>>, vector<1x1x2x64xbf16>
    %1 = vector.shape_cast %0 : vector<1x1x2x64xbf16> to vector<2x64xbf16>
    %2 = arith.extf %1 : vector<2x64xbf16> to vector<2x64xf32>
    %c0_3 = arith.constant 0 : index
    %c0_4 = arith.constant 0 : index
    %c0_5 = arith.constant 0 : index
    %c0_6 = arith.constant 0 : index
    %c0_7 = arith.constant 0 : index
    %3 = vector.load %arg3[%c0_3, %c0_4, %c0_5, %c0_6, %c0_7] : memref<1x1x1x2x64xbf16, #tpu.memory_space<vmem>>, vector<1x1x1x2x64xbf16>
    %4 = vector.shape_cast %3 : vector<1x1x1x2x64xbf16> to vector<2x64xbf16>
    %5 = arith.extf %4 : vector<2x64xbf16> to vector<2x64xf32>
    %6 = arith.mulf %2, %2 : vector<2x64xf32>
    %cst = arith.constant dense<0.000000e+00> : vector<2xf32>
    %7 = vector.multi_reduction <add>, %6, %cst [1] : vector<2x64xf32> to vector<2xf32>
    %8 = vector.shape_cast %7 : vector<2xf32> to vector<2x1xf32>
    %cst_8 = arith.constant 1.000000e-24 : f32
    %9 = vector.broadcast %cst_8 : f32 to vector<2x1xf32>
    %10 = arith.maximumf %8, %9 : vector<2x1xf32>
    %11 = math.rsqrt %10 : vector<2x1xf32>
    %12 = vector.broadcast %11 : vector<2x1xf32> to vector<2x64xf32>
    %13 = arith.mulf %2, %12 : vector<2x64xf32>
    %14 = arith.mulf %5, %5 : vector<2x64xf32>
    %cst_9 = arith.constant dense<0.000000e+00> : vector<2xf32>
    %15 = vector.multi_reduction <add>, %14, %cst_9 [1] : vector<2x64xf32> to vector<2xf32>
    %16 = vector.shape_cast %15 : vector<2xf32> to vector<2x1xf32>
    %cst_10 = arith.constant 1.000000e-24 : f32
    %17 = vector.broadcast %cst_10 : f32 to vector<2x1xf32>
    %18 = arith.maximumf %16, %17 : vector<2x1xf32>
    %19 = math.rsqrt %18 : vector<2x1xf32>
    %20 = vector.broadcast %19 : vector<2x1xf32> to vector<2x64xf32>
    %21 = arith.mulf %5, %20 : vector<2x64xf32>
    %22 = arith.truncf %13 : vector<2x64xf32> to vector<2x64xbf16>
    %23 = arith.truncf %21 : vector<2x64xf32> to vector<2x64xbf16>
    "tpu.trace_start"() <{level = 10 : i32, message = "cs,ds->cd"}> : () -> ()
    %cst_11 = arith.constant dense<0.000000e+00> : vector<2x2xf32>
    %24 = tpu.matmul %22, %23, %cst_11 {dimension_numbers = #tpu.dot_dimension_numbers<[1], [1], [0], [0], [0, 0, 1, 0], [], []>} : vector<2x64xbf16>, vector<2x64xbf16>, vector<2x2xf32> -> vector<2x2xf32>
    "tpu.trace_stop"() : () -> ()
    %c0_12 = arith.constant 0 : index
    %c0_13 = arith.constant 0 : index
    %c0_14 = arith.constant 0 : index
    %25 = vector.load %arg5[%c0_12, %c0_13, %c0_14] : memref<1x1x1xf32, #tpu.memory_space<vmem>>, vector<1x1x1xf32>
    %26 = vector.shape_cast %25 : vector<1x1x1xf32> to vector<1x1xf32>
    %27 = vector.broadcast %26 : vector<1x1xf32> to vector<2x2xf32>
    %28 = arith.mulf %24, %27 : vector<2x2xf32>
    %cst_15 = arith.constant dense<0xFF800000> : vector<2xf32>
    %29 = vector.multi_reduction <maximumf>, %28, %cst_15 [1] : vector<2x2xf32> to vector<2xf32>
    %30 = vector.shape_cast %29 : vector<2xf32> to vector<2x1xf32>
    %31 = vector.broadcast %30 : vector<2x1xf32> to vector<2x2xf32>
    %32 = arith.subf %28, %31 : vector<2x2xf32>
    %33 = math.exp %32 : vector<2x2xf32>
    %cst_16 = arith.constant dense<0.000000e+00> : vector<2xf32>
    %34 = vector.multi_reduction <add>, %33, %cst_16 [1] : vector<2x2xf32> to vector<2xf32>
    %35 = vector.shape_cast %34 : vector<2xf32> to vector<2x1xf32>
    %36 = tpu.reciprocal %35 {approx = true} : vector<2x1xf32> -> vector<2x1xf32>
    %37 = vector.broadcast %36 : vector<2x1xf32> to vector<2x2xf32>
    %38 = arith.mulf %33, %37 : vector<2x2xf32>
    %39 = arith.truncf %38 : vector<2x2xf32> to vector<2x2xbf16>
    %c0_17 = arith.constant 0 : index
    %c0_18 = arith.constant 0 : index
    %c0_19 = arith.constant 0 : index
    %c0_20 = arith.constant 0 : index
    %c0_21 = arith.constant 0 : index
    %40 = vector.load %arg4[%c0_17, %c0_18, %c0_19, %c0_20, %c0_21] : memref<1x1x1x2x64xbf16, #tpu.memory_space<vmem>>, vector<1x1x1x2x64xbf16>
    %41 = vector.shape_cast %40 : vector<1x1x1x2x64xbf16> to vector<2x64xbf16>
    %cst_22 = arith.constant dense<0.000000e+00> : vector<2x64xf32>
    %42 = tpu.matmul %39, %41, %cst_22 {dimension_numbers = #tpu.dot_dimension_numbers<[1], [0], [0], [1], [0, 0, 1, 1], [], []>} : vector<2x2xbf16>, vector<2x64xbf16>, vector<2x64xf32> -> vector<2x64xf32>
    %43 = arith.truncf %42 : vector<2x64xf32> to vector<2x64xbf16>
    %c0_23 = arith.constant 0 : index
    %c0_24 = arith.constant 0 : index
    %c0_25 = arith.constant 0 : index
    %c0_26 = arith.constant 0 : index
    %44 = vector.load %arg6[%c0_23, %c0_24, %c0_25, %c0_26] : memref<1x1x2x64xbf16, #tpu.memory_space<vmem>>, vector<1x1x2x64xbf16>
    %45 = vector.shape_cast %44 : vector<1x1x2x64xbf16> to vector<2x64xbf16>
    %46 = vector.shape_cast %43 : vector<2x64xbf16> to vector<1x1x2x64xbf16>
    tpu.vector_store %arg6[%c0_23, %c0_24, %c0_25, %c0_26], %46 {strides = array<i32>} : memref<1x1x2x64xbf16, #tpu.memory_space<vmem>>, vector<1x1x2x64xbf16>,
    return
  }
  func.func @transform_0(%arg0: i32, %arg1: i32) -> (i32, i32, i32, i32) {
    %c0_i32 = arith.constant 0 : i32
    %c0_i32_0 = arith.constant 0 : i32
    %c0_i32_1 = arith.constant 0 : i32
    return %arg0, %arg1, %c0_i32, %c0_i32_0 : i32, i32, i32, i32
  }
  func.func @transform_1(%arg0: i32, %arg1: i32) -> (i32, i32, i32, i32, i32) {
    %c0_i32 = arith.constant 0 : i32
    %c0_i32_0 = arith.constant 0 : i32
    %c0_i32_1 = arith.constant 0 : i32
    %c0_i32_2 = arith.constant 0 : i32
    return %arg0, %c0_i32, %arg1, %c0_i32_0, %c0_i32_1 : i32, i32, i32, i32, i32
  }
  func.func @transform_2(%arg0: i32, %arg1: i32) -> (i32, i32, i32, i32, i32) {
    %c1_i32 = arith.constant 1 : i32
    %c0_i32 = arith.constant 0 : i32
    %c0_i32_0 = arith.constant 0 : i32
    %c0_i32_1 = arith.constant 0 : i32
    return %arg0, %c1_i32, %arg1, %c0_i32, %c0_i32_0 : i32, i32, i32, i32, i32
  }
  func.func @transform_3(%arg0: i32, %arg1: i32) -> (i32, i32, i32) {
    %c0_i32 = arith.constant 0 : i32
    %c0_i32_0 = arith.constant 0 : i32
    %c0_i32_1 = arith.constant 0 : i32
    return %arg1, %c0_i32, %c0_i32_0 : i32, i32, i32
  }
  func.func @transform_4(%arg0: i32, %arg1: i32) -> (i32, i32, i32, i32) {
    %c0_i32 = arith.constant 0 : i32
    %c0_i32_0 = arith.constant 0 : i32
    %c0_i32_1 = arith.constant 0 : i32
    return %arg0, %arg1, %c0_i32, %c0_i32_0 : i32, i32, i32, i32
  }
}

module attributes {stable_mosaic.version = 11 : i64} {
  func.func @proj_res_kernel(%arg0: i32, %arg1: memref<1x16x64xbf16, #tpu.memory_space<vmem>>, %arg2: memref<16x16xbf16, #tpu.memory_space<vmem>>, %arg3: memref<1x16x128xbf16, #tpu.memory_space<vmem>>, %arg4: memref<1x16x128xbf16, #tpu.memory_space<vmem>>) attributes {dimension_semantics = [#tpu.dimension_semantics<parallel>], iteration_bounds = array<i64: 2>, scalar_prefetch = 0 : i64, scratch_operands = 0 : i64, tpu.core_type = #tpu.core_type<tc>, window_params = [{transform_indices = @transform_0, window_bounds = array<i64: 1, 16, 64>}, {pipeline_mode = #tpu.pipeline_mode<synchronous>, transform_indices = @transform_1, window_bounds = array<i64: 16, 16>}, {transform_indices = @transform_2, window_bounds = array<i64: 1, 16, 128>}, {transform_indices = @transform_3, window_bounds = array<i64: 1, 16, 128>}]} {
    %c0 = arith.constant 0 : index
    %c0_0 = arith.constant 0 : index
    %0 = vector.load %arg2[%c0, %c0_0] : memref<16x16xbf16, #tpu.memory_space<vmem>>, vector<16x16xbf16>
    %c0_1 = arith.constant 0 : index
    %c0_2 = arith.constant 0 : index
    %c0_3 = arith.constant 0 : index
    %1 = vector.load %arg1[%c0_1, %c0_2, %c0_3] : memref<1x16x64xbf16, #tpu.memory_space<vmem>>, vector<1x16x64xbf16>
    %2 = vector.shape_cast %1 : vector<1x16x64xbf16> to vector<16x64xbf16>
    %cst = arith.constant dense<0.000000e+00> : vector<16x64xf32>
    %3 = tpu.matmul %0, %2, %cst {dimension_numbers = #tpu.dot_dimension_numbers<[1], [0], [0], [1], [0, 0, 1, 1], [], []>} : vector<16x16xbf16>, vector<16x64xbf16>, vector<16x64xf32> -> vector<16x64xf32>
    %cst_4 = arith.constant 0.000000e+00 : f32
    %4 = vector.broadcast %cst_4 : f32 to vector<16x9xf32>
    %cst_5 = arith.constant 0.000000e+00 : f32
    %5 = vector.broadcast %cst_5 : f32 to vector<16x55xf32>
    %6 = tpu.concatenate %4, %3, %5 in 1 : vector<16x9xf32>, vector<16x64xf32>, vector<16x55xf32> -> vector<16x128xf32>
    %c0_6 = arith.constant 0 : index
    %c0_7 = arith.constant 0 : index
    %c0_8 = arith.constant 0 : index
    %7 = vector.load %arg3[%c0_6, %c0_7, %c0_8] : memref<1x16x128xbf16, #tpu.memory_space<vmem>>, vector<1x16x128xbf16>
    %8 = vector.shape_cast %7 : vector<1x16x128xbf16> to vector<16x128xbf16>
    %9 = arith.extf %8 : vector<16x128xbf16> to vector<16x128xf32>
    %10 = arith.addf %6, %9 : vector<16x128xf32>
    %11 = arith.truncf %10 : vector<16x128xf32> to vector<16x128xbf16>
    %c0_9 = arith.constant 0 : index
    %c0_10 = arith.constant 0 : index
    %c0_11 = arith.constant 0 : index
    %12 = vector.load %arg4[%c0_9, %c0_10, %c0_11] : memref<1x16x128xbf16, #tpu.memory_space<vmem>>, vector<1x16x128xbf16>
    %13 = vector.shape_cast %12 : vector<1x16x128xbf16> to vector<16x128xbf16>
    %14 = vector.shape_cast %11 : vector<16x128xbf16> to vector<1x16x128xbf16>
    tpu.vector_store %arg4[%c0_9, %c0_10, %c0_11], %14 {strides = array<i32>} : memref<1x16x128xbf16, #tpu.memory_space<vmem>>, vector<1x16x128xbf16>,
    return
  }
  func.func @transform_0(%arg0: i32) -> (i32, i32, i32) {
    %c0_i32 = arith.constant 0 : i32
    %c0_i32_0 = arith.constant 0 : i32
    %c0_i32_1 = arith.constant 0 : i32
    return %arg0, %c0_i32, %c0_i32_0 : i32, i32, i32
  }
  func.func @transform_1(%arg0: i32) -> (i32, i32) {
    %c0_i32 = arith.constant 0 : i32
    %c0_i32_0 = arith.constant 0 : i32
    %c0_i32_1 = arith.constant 0 : i32
    return %c0_i32, %c0_i32_0 : i32, i32
  }
  func.func @transform_2(%arg0: i32) -> (i32, i32, i32) {
    %c0_i32 = arith.constant 0 : i32
    %c0_i32_0 = arith.constant 0 : i32
    %c0_i32_1 = arith.constant 0 : i32
    return %arg0, %c0_i32, %c0_i32_0 : i32, i32, i32
  }
  func.func @transform_3(%arg0: i32) -> (i32, i32, i32) {
    %c0_i32 = arith.constant 0 : i32
    %c0_i32_0 = arith.constant 0 : i32
    %c0_i32_1 = arith.constant 0 : i32
    return %arg0, %c0_i32, %c0_i32_0 : i32, i32, i32
  }
}

module attributes {stable_mosaic.version = 11 : i64} {
  func.func @conv3x3_gate_kernel(%arg0: i32, %arg1: memref<1x16x128xbf16, #tpu.memory_space<vmem>>, %arg2: memref<1x16x128xbf16, #tpu.memory_space<vmem>>, %arg3: memref<1x16x128xbf16, #tpu.memory_space<vmem>>, %arg4: memref<16x144xbf16, #tpu.memory_space<vmem>>, %arg5: memref<16x144xbf16, #tpu.memory_space<vmem>>, %arg6: memref<16x1xf32, #tpu.memory_space<vmem>>, %arg7: memref<16x1xf32, #tpu.memory_space<vmem>>, %arg8: memref<1x16x64xf32, #tpu.memory_space<vmem>>) attributes {dimension_semantics = [#tpu.dimension_semantics<parallel>], iteration_bounds = array<i64: 2>, scalar_prefetch = 0 : i64, scratch_operands = 0 : i64, tpu.core_type = #tpu.core_type<tc>, window_params = [{transform_indices = @transform_0, window_bounds = array<i64: 1, 16, 128>}, {transform_indices = @transform_1, window_bounds = array<i64: 1, 16, 128>}, {transform_indices = @transform_2, window_bounds = array<i64: 1, 16, 128>}, {pipeline_mode = #tpu.pipeline_mode<synchronous>, transform_indices = @transform_3, window_bounds = array<i64: 16, 144>}, {pipeline_mode = #tpu.pipeline_mode<synchronous>, transform_indices = @transform_4, window_bounds = array<i64: 16, 144>}, {pipeline_mode = #tpu.pipeline_mode<synchronous>, transform_indices = @transform_5, window_bounds = array<i64: 16, 1>}, {pipeline_mode = #tpu.pipeline_mode<synchronous>, transform_indices = @transform_6, window_bounds = array<i64: 16, 1>}, {transform_indices = @transform_7, window_bounds = array<i64: 1, 16, 64>}]} {
    %0 = tpu.iota {dimensions = array<i32: 1>} : vector<1x64xi32>
    %c8_i32 = arith.constant 8 : i32
    %c0_i32 = arith.constant 0 : i32
    %1 = arith.cmpi eq, %c8_i32, %c0_i32 : i32
    %c1_i32 = arith.constant 1 : i32
    %2 = arith.select %1, %c1_i32, %c8_i32 : i32
    %3 = vector.broadcast %2 : i32 to vector<1x64xi32>
    %4 = arith.remsi %0, %3 : vector<1x64xi32>
    %c0_i32_0 = arith.constant 0 : i32
    %5 = vector.broadcast %c0_i32_0 : i32 to vector<1x64xi32>
    %6 = arith.cmpi ne, %4, %5 : vector<1x64xi32>
    %c0_i32_1 = arith.constant 0 : i32
    %7 = vector.broadcast %c0_i32_1 : i32 to vector<1x64xi32>
    %8 = arith.cmpi slt, %4, %7 : vector<1x64xi32>
    %c0_i32_2 = arith.constant 0 : i32
    %9 = arith.cmpi slt, %2, %c0_i32_2 : i32
    %10 = vector.broadcast %9 : i1 to vector<1x64xi1>
    %11 = vector.broadcast %10 : vector<1x64xi1> to vector<1x64xi1>
    %12 = arith.xori %8, %11 : vector<1x64xi1>
    %13 = arith.andi %12, %6 : vector<1x64xi1>
    %14 = vector.broadcast %2 : i32 to vector<1x64xi32>
    %15 = arith.addi %4, %14 : vector<1x64xi32>
    %16 = arith.select %13, %15, %4 : vector<1x64xi1>, vector<1x64xi32>
    %c1_i32_3 = arith.constant 1 : i32
    %17 = vector.broadcast %c1_i32_3 : i32 to vector<1x64xi32>
    %18 = arith.cmpi sge, %16, %17 : vector<1x64xi32>
    %c6_i32 = arith.constant 6 : i32
    %19 = vector.broadcast %c6_i32 : i32 to vector<1x64xi32>
    %20 = arith.cmpi sle, %16, %19 : vector<1x64xi32>
    %c0 = arith.constant 0 : index
    %c0_4 = arith.constant 0 : index
    %c0_5 = arith.constant 0 : index
    %21 = vector.load %arg1[%c0, %c0_4, %c0_5] : memref<1x16x128xbf16, #tpu.memory_space<vmem>>, vector<1x16x64xbf16>
    %22 = vector.shape_cast %21 : vector<1x16x64xbf16> to vector<16x64xbf16>
    %cst = arith.constant 0.000000e+00 : bf16
    %23 = vector.broadcast %cst : bf16 to vector<16x64xbf16>
    %24 = vector.shape_cast %18 : vector<1x64xi1> to vector<1x64xi1>
    %25 = vector.broadcast %24 : vector<1x64xi1> to vector<16x64xi1>
    %26 = arith.select %25, %22, %23 : vector<16x64xi1>, vector<16x64xbf16>
    %c0_6 = arith.constant 0 : index
    %c0_7 = arith.constant 0 : index
    %c1 = arith.constant 1 : index
    %27 = vector.load %arg1[%c0_6, %c0_7, %c1] : memref<1x16x128xbf16, #tpu.memory_space<vmem>>, vector<1x16x64xbf16>
    %28 = vector.shape_cast %27 : vector<1x16x64xbf16> to vector<16x64xbf16>
    %c0_8 = arith.constant 0 : index
    %c0_9 = arith.constant 0 : index
    %c2 = arith.constant 2 : index
    %29 = vector.load %arg1[%c0_8, %c0_9, %c2] : memref<1x16x128xbf16, #tpu.memory_space<vmem>>, vector<1x16x64xbf16>
    %30 = vector.shape_cast %29 : vector<1x16x64xbf16> to vector<16x64xbf16>
    %cst_10 = arith.constant 0.000000e+00 : bf16
    %31 = vector.broadcast %cst_10 : bf16 to vector<16x64xbf16>
    %32 = vector.shape_cast %20 : vector<1x64xi1> to vector<1x64xi1>
    %33 = vector.broadcast %32 : vector<1x64xi1> to vector<16x64xi1>
    %34 = arith.select %33, %30, %31 : vector<16x64xi1>, vector<16x64xbf16>
    %c0_11 = arith.constant 0 : index
    %c0_12 = arith.constant 0 : index
    %c8 = arith.constant 8 : index
    %35 = vector.load %arg1[%c0_11, %c0_12, %c8] : memref<1x16x128xbf16, #tpu.memory_space<vmem>>, vector<1x16x64xbf16>
    %36 = vector.shape_cast %35 : vector<1x16x64xbf16> to vector<16x64xbf16>
    %cst_13 = arith.constant 0.000000e+00 : bf16
    %37 = vector.broadcast %cst_13 : bf16 to vector<16x64xbf16>
    %38 = vector.shape_cast %18 : vector<1x64xi1> to vector<1x64xi1>
    %39 = vector.broadcast %38 : vector<1x64xi1> to vector<16x64xi1>
    %40 = arith.select %39, %36, %37 : vector<16x64xi1>, vector<16x64xbf16>
    %c0_14 = arith.constant 0 : index
    %c0_15 = arith.constant 0 : index
    %c9 = arith.constant 9 : index
    %41 = vector.load %arg1[%c0_14, %c0_15, %c9] : memref<1x16x128xbf16, #tpu.memory_space<vmem>>, vector<1x16x64xbf16>
    %42 = vector.shape_cast %41 : vector<1x16x64xbf16> to vector<16x64xbf16>
    %c0_16 = arith.constant 0 : index
    %c0_17 = arith.constant 0 : index
    %c10 = arith.constant 10 : index
    %43 = vector.load %arg1[%c0_16, %c0_17, %c10] : memref<1x16x128xbf16, #tpu.memory_space<vmem>>, vector<1x16x64xbf16>
    %44 = vector.shape_cast %43 : vector<1x16x64xbf16> to vector<16x64xbf16>
    %cst_18 = arith.constant 0.000000e+00 : bf16
    %45 = vector.broadcast %cst_18 : bf16 to vector<16x64xbf16>
    %46 = vector.shape_cast %20 : vector<1x64xi1> to vector<1x64xi1>
    %47 = vector.broadcast %46 : vector<1x64xi1> to vector<16x64xi1>
    %48 = arith.select %47, %44, %45 : vector<16x64xi1>, vector<16x64xbf16>
    %c0_19 = arith.constant 0 : index
    %c0_20 = arith.constant 0 : index
    %c16 = arith.constant 16 : index
    %49 = vector.load %arg1[%c0_19, %c0_20, %c16] : memref<1x16x128xbf16, #tpu.memory_space<vmem>>, vector<1x16x64xbf16>
    %50 = vector.shape_cast %49 : vector<1x16x64xbf16> to vector<16x64xbf16>
    %cst_21 = arith.constant 0.000000e+00 : bf16
    %51 = vector.broadcast %cst_21 : bf16 to vector<16x64xbf16>
    %52 = vector.shape_cast %18 : vector<1x64xi1> to vector<1x64xi1>
    %53 = vector.broadcast %52 : vector<1x64xi1> to vector<16x64xi1>
    %54 = arith.select %53, %50, %51 : vector<16x64xi1>, vector<16x64xbf16>
    %c0_22 = arith.constant 0 : index
    %c0_23 = arith.constant 0 : index
    %c17 = arith.constant 17 : index
    %55 = vector.load %arg1[%c0_22, %c0_23, %c17] : memref<1x16x128xbf16, #tpu.memory_space<vmem>>, vector<1x16x64xbf16>
    %56 = vector.shape_cast %55 : vector<1x16x64xbf16> to vector<16x64xbf16>
    %c0_24 = arith.constant 0 : index
    %c0_25 = arith.constant 0 : index
    %c18 = arith.constant 18 : index
    %57 = vector.load %arg1[%c0_24, %c0_25, %c18] : memref<1x16x128xbf16, #tpu.memory_space<vmem>>, vector<1x16x64xbf16>
    %58 = vector.shape_cast %57 : vector<1x16x64xbf16> to vector<16x64xbf16>
    %cst_26 = arith.constant 0.000000e+00 : bf16
    %59 = vector.broadcast %cst_26 : bf16 to vector<16x64xbf16>
    %60 = vector.shape_cast %20 : vector<1x64xi1> to vector<1x64xi1>
    %61 = vector.broadcast %60 : vector<1x64xi1> to vector<16x64xi1>
    %62 = arith.select %61, %58, %59 : vector<16x64xi1>, vector<16x64xbf16>
    %63 = tpu.concatenate %26, %28, %34, %40, %42, %48, %54, %56, %62 in 0 : vector<16x64xbf16>, vector<16x64xbf16>, vector<16x64xbf16>, vector<16x64xbf16>, vector<16x64xbf16>, vector<16x64xbf16>, vector<16x64xbf16>, vector<16x64xbf16>, vector<16x64xbf16> -> vector<144x64xbf16>
    %c0_27 = arith.constant 0 : index
    %c0_28 = arith.constant 0 : index
    %64 = vector.load %arg4[%c0_27, %c0_28] : memref<16x144xbf16, #tpu.memory_space<vmem>>, vector<16x144xbf16>
    %cst_29 = arith.constant dense<0.000000e+00> : vector<16x64xf32>
    %65 = tpu.matmul %64, %63, %cst_29 {dimension_numbers = #tpu.dot_dimension_numbers<[1], [0], [0], [1], [0, 0, 1, 1], [], []>} : vector<16x144xbf16>, vector<144x64xbf16>, vector<16x64xf32> -> vector<16x64xf32>
    %c0_30 = arith.constant 0 : index
    %c0_31 = arith.constant 0 : index
    %66 = vector.load %arg6[%c0_30, %c0_31] : memref<16x1xf32, #tpu.memory_space<vmem>>, vector<16x1xf32>
    %67 = vector.broadcast %66 : vector<16x1xf32> to vector<16x64xf32>
    %68 = arith.addf %65, %67 : vector<16x64xf32>
    %cst_32 = arith.constant 0.000000e+00 : f32
    %69 = vector.broadcast %cst_32 : f32 to vector<16x64xf32>
    %70 = arith.subf %69, %68 : vector<16x64xf32>
    %71 = math.exp %70 : vector<16x64xf32>
    %cst_33 = arith.constant 1.000000e+00 : f32
    %72 = vector.broadcast %cst_33 : f32 to vector<16x64xf32>
    %73 = arith.addf %72, %71 : vector<16x64xf32>
    %74 = tpu.reciprocal %73 {approx = true} : vector<16x64xf32> -> vector<16x64xf32>
    %c0_34 = arith.constant 0 : index
    %c0_35 = arith.constant 0 : index
    %75 = vector.load %arg5[%c0_34, %c0_35] : memref<16x144xbf16, #tpu.memory_space<vmem>>, vector<16x144xbf16>
    %cst_36 = arith.constant dense<0.000000e+00> : vector<16x64xf32>
    %76 = tpu.matmul %75, %63, %cst_36 {dimension_numbers = #tpu.dot_dimension_numbers<[1], [0], [0], [1], [0, 0, 1, 1], [], []>} : vector<16x144xbf16>, vector<144x64xbf16>, vector<16x64xf32> -> vector<16x64xf32>
    %c0_37 = arith.constant 0 : index
    %c0_38 = arith.constant 0 : index
    %77 = vector.load %arg7[%c0_37, %c0_38] : memref<16x1xf32, #tpu.memory_space<vmem>>, vector<16x1xf32>
    %78 = vector.broadcast %77 : vector<16x1xf32> to vector<16x64xf32>
    %79 = arith.addf %76, %78 : vector<16x64xf32>
    %cst_39 = arith.constant 0.000000e+00 : f32
    %80 = vector.broadcast %cst_39 : f32 to vector<16x64xf32>
    %81 = arith.subf %80, %79 : vector<16x64xf32>
    %82 = math.exp %81 : vector<16x64xf32>
    %cst_40 = arith.constant 1.000000e+00 : f32
    %83 = vector.broadcast %cst_40 : f32 to vector<16x64xf32>
    %84 = arith.addf %83, %82 : vector<16x64xf32>
    %85 = tpu.reciprocal %84 {approx = true} : vector<16x64xf32> -> vector<16x64xf32>
    %c0_41 = arith.constant 0 : index
    %c0_42 = arith.constant 0 : index
    %c9_43 = arith.constant 9 : index
    %86 = vector.load %arg2[%c0_41, %c0_42, %c9_43] : memref<1x16x128xbf16, #tpu.memory_space<vmem>>, vector<1x16x64xbf16>
    %87 = vector.shape_cast %86 : vector<1x16x64xbf16> to vector<16x64xbf16>
    %88 = arith.extf %87 : vector<16x64xbf16> to vector<16x64xf32>
    %c0_44 = arith.constant 0 : index
    %c0_45 = arith.constant 0 : index
    %c9_46 = arith.constant 9 : index
    %89 = vector.load %arg3[%c0_44, %c0_45, %c9_46] : memref<1x16x128xbf16, #tpu.memory_space<vmem>>, vector<1x16x64xbf16>
    %90 = vector.shape_cast %89 : vector<1x16x64xbf16> to vector<16x64xbf16>
    %91 = arith.extf %90 : vector<16x64xbf16> to vector<16x64xf32>
    %92 = arith.mulf %88, %74 : vector<16x64xf32>
    %93 = arith.mulf %91, %85 : vector<16x64xf32>
    %94 = arith.addf %92, %93 : vector<16x64xf32>
    %c0_47 = arith.constant 0 : index
    %c0_48 = arith.constant 0 : index
    %c0_49 = arith.constant 0 : index
    %95 = vector.load %arg8[%c0_47, %c0_48, %c0_49] : memref<1x16x64xf32, #tpu.memory_space<vmem>>, vector<1x16x64xf32>
    %96 = vector.shape_cast %95 : vector<1x16x64xf32> to vector<16x64xf32>
    %97 = vector.shape_cast %94 : vector<16x64xf32> to vector<1x16x64xf32>
    tpu.vector_store %arg8[%c0_47, %c0_48, %c0_49], %97 {strides = array<i32>} : memref<1x16x64xf32, #tpu.memory_space<vmem>>, vector<1x16x64xf32>,
    return
  }
  func.func @transform_0(%arg0: i32) -> (i32, i32, i32) {
    %c0_i32 = arith.constant 0 : i32
    %c0_i32_0 = arith.constant 0 : i32
    %c0_i32_1 = arith.constant 0 : i32
    return %arg0, %c0_i32, %c0_i32_0 : i32, i32, i32
  }
  func.func @transform_1(%arg0: i32) -> (i32, i32, i32) {
    %c0_i32 = arith.constant 0 : i32
    %c0_i32_0 = arith.constant 0 : i32
    %c0_i32_1 = arith.constant 0 : i32
    return %arg0, %c0_i32, %c0_i32_0 : i32, i32, i32
  }
  func.func @transform_2(%arg0: i32) -> (i32, i32, i32) {
    %c0_i32 = arith.constant 0 : i32
    %c0_i32_0 = arith.constant 0 : i32
    %c0_i32_1 = arith.constant 0 : i32
    return %arg0, %c0_i32, %c0_i32_0 : i32, i32, i32
  }
  func.func @transform_3(%arg0: i32) -> (i32, i32) {
    %c0_i32 = arith.constant 0 : i32
    %c0_i32_0 = arith.constant 0 : i32
    %c0_i32_1 = arith.constant 0 : i32
    return %c0_i32, %c0_i32_0 : i32, i32
  }
  func.func @transform_4(%arg0: i32) -> (i32, i32) {
    %c0_i32 = arith.constant 0 : i32
    %c0_i32_0 = arith.constant 0 : i32
    %c0_i32_1 = arith.constant 0 : i32
    return %c0_i32, %c0_i32_0 : i32, i32
  }
  func.func @transform_5(%arg0: i32) -> (i32, i32) {
    %c0_i32 = arith.constant 0 : i32
    %c0_i32_0 = arith.constant 0 : i32
    %c0_i32_1 = arith.constant 0 : i32
    return %c0_i32, %c0_i32_0 : i32, i32
  }
  func.func @transform_6(%arg0: i32) -> (i32, i32) {
    %c0_i32 = arith.constant 0 : i32
    %c0_i32_0 = arith.constant 0 : i32
    %c0_i32_1 = arith.constant 0 : i32
    return %c0_i32, %c0_i32_0 : i32, i32
  }
  func.func @transform_7(%arg0: i32) -> (i32, i32, i32) {
    %c0_i32 = arith.constant 0 : i32
    %c0_i32_0 = arith.constant 0 : i32
    %c0_i32_1 = arith.constant 0 : i32
    return %arg0, %c0_i32, %c0_i32_0 : i32, i32, i32
  }
}

module attributes {stable_mosaic.version = 11 : i64} {
  func.func @conv3x3_dual_kernel(%arg0: i32, %arg1: memref<1x16x128xbf16, #tpu.memory_space<vmem>>, %arg2: memref<1x16x128xbf16, #tpu.memory_space<vmem>>, %arg3: memref<16x144xbf16, #tpu.memory_space<vmem>>, %arg4: memref<16x144xbf16, #tpu.memory_space<vmem>>, %arg5: memref<16x1xf32, #tpu.memory_space<vmem>>, %arg6: memref<1x16x128xbf16, #tpu.memory_space<vmem>>) attributes {dimension_semantics = [#tpu.dimension_semantics<parallel>], iteration_bounds = array<i64: 2>, scalar_prefetch = 0 : i64, scratch_operands = 0 : i64, tpu.core_type = #tpu.core_type<tc>, window_params = [{transform_indices = @transform_0, window_bounds = array<i64: 1, 16, 128>}, {transform_indices = @transform_1, window_bounds = array<i64: 1, 16, 128>}, {pipeline_mode = #tpu.pipeline_mode<synchronous>, transform_indices = @transform_2, window_bounds = array<i64: 16, 144>}, {pipeline_mode = #tpu.pipeline_mode<synchronous>, transform_indices = @transform_3, window_bounds = array<i64: 16, 144>}, {pipeline_mode = #tpu.pipeline_mode<synchronous>, transform_indices = @transform_4, window_bounds = array<i64: 16, 1>}, {transform_indices = @transform_5, window_bounds = array<i64: 1, 16, 128>}]} {
    %c0 = arith.constant 0 : index
    %c0_0 = arith.constant 0 : index
    %0 = vector.load %arg3[%c0, %c0_0] : memref<16x144xbf16, #tpu.memory_space<vmem>>, vector<16x144xbf16>
    %1 = tpu.iota {dimensions = array<i32: 1>} : vector<1x64xi32>
    %c8_i32 = arith.constant 8 : i32
    %c0_i32 = arith.constant 0 : i32
    %2 = arith.cmpi eq, %c8_i32, %c0_i32 : i32
    %c1_i32 = arith.constant 1 : i32
    %3 = arith.select %2, %c1_i32, %c8_i32 : i32
    %4 = vector.broadcast %3 : i32 to vector<1x64xi32>
    %5 = arith.remsi %1, %4 : vector<1x64xi32>
    %c0_i32_1 = arith.constant 0 : i32
    %6 = vector.broadcast %c0_i32_1 : i32 to vector<1x64xi32>
    %7 = arith.cmpi ne, %5, %6 : vector<1x64xi32>
    %c0_i32_2 = arith.constant 0 : i32
    %8 = vector.broadcast %c0_i32_2 : i32 to vector<1x64xi32>
    %9 = arith.cmpi slt, %5, %8 : vector<1x64xi32>
    %c0_i32_3 = arith.constant 0 : i32
    %10 = arith.cmpi slt, %3, %c0_i32_3 : i32
    %11 = vector.broadcast %10 : i1 to vector<1x64xi1>
    %12 = vector.broadcast %11 : vector<1x64xi1> to vector<1x64xi1>
    %13 = arith.xori %9, %12 : vector<1x64xi1>
    %14 = arith.andi %13, %7 : vector<1x64xi1>
    %15 = vector.broadcast %3 : i32 to vector<1x64xi32>
    %16 = arith.addi %5, %15 : vector<1x64xi32>
    %17 = arith.select %14, %16, %5 : vector<1x64xi1>, vector<1x64xi32>
    %c1_i32_4 = arith.constant 1 : i32
    %18 = vector.broadcast %c1_i32_4 : i32 to vector<1x64xi32>
    %19 = arith.cmpi sge, %17, %18 : vector<1x64xi32>
    %c6_i32 = arith.constant 6 : i32
    %20 = vector.broadcast %c6_i32 : i32 to vector<1x64xi32>
    %21 = arith.cmpi sle, %17, %20 : vector<1x64xi32>
    %c0_5 = arith.constant 0 : index
    %c0_6 = arith.constant 0 : index
    %c0_7 = arith.constant 0 : index
    %22 = vector.load %arg1[%c0_5, %c0_6, %c0_7] : memref<1x16x128xbf16, #tpu.memory_space<vmem>>, vector<1x16x64xbf16>
    %23 = vector.shape_cast %22 : vector<1x16x64xbf16> to vector<16x64xbf16>
    %cst = arith.constant 0.000000e+00 : bf16
    %24 = vector.broadcast %cst : bf16 to vector<16x64xbf16>
    %25 = vector.shape_cast %19 : vector<1x64xi1> to vector<1x64xi1>
    %26 = vector.broadcast %25 : vector<1x64xi1> to vector<16x64xi1>
    %27 = arith.select %26, %23, %24 : vector<16x64xi1>, vector<16x64xbf16>
    %c0_8 = arith.constant 0 : index
    %c0_9 = arith.constant 0 : index
    %c1 = arith.constant 1 : index
    %28 = vector.load %arg1[%c0_8, %c0_9, %c1] : memref<1x16x128xbf16, #tpu.memory_space<vmem>>, vector<1x16x64xbf16>
    %29 = vector.shape_cast %28 : vector<1x16x64xbf16> to vector<16x64xbf16>
    %c0_10 = arith.constant 0 : index
    %c0_11 = arith.constant 0 : index
    %c2 = arith.constant 2 : index
    %30 = vector.load %arg1[%c0_10, %c0_11, %c2] : memref<1x16x128xbf16, #tpu.memory_space<vmem>>, vector<1x16x64xbf16>
    %31 = vector.shape_cast %30 : vector<1x16x64xbf16> to vector<16x64xbf16>
    %cst_12 = arith.constant 0.000000e+00 : bf16
    %32 = vector.broadcast %cst_12 : bf16 to vector<16x64xbf16>
    %33 = vector.shape_cast %21 : vector<1x64xi1> to vector<1x64xi1>
    %34 = vector.broadcast %33 : vector<1x64xi1> to vector<16x64xi1>
    %35 = arith.select %34, %31, %32 : vector<16x64xi1>, vector<16x64xbf16>
    %c0_13 = arith.constant 0 : index
    %c0_14 = arith.constant 0 : index
    %c8 = arith.constant 8 : index
    %36 = vector.load %arg1[%c0_13, %c0_14, %c8] : memref<1x16x128xbf16, #tpu.memory_space<vmem>>, vector<1x16x64xbf16>
    %37 = vector.shape_cast %36 : vector<1x16x64xbf16> to vector<16x64xbf16>
    %cst_15 = arith.constant 0.000000e+00 : bf16
    %38 = vector.broadcast %cst_15 : bf16 to vector<16x64xbf16>
    %39 = vector.shape_cast %19 : vector<1x64xi1> to vector<1x64xi1>
    %40 = vector.broadcast %39 : vector<1x64xi1> to vector<16x64xi1>
    %41 = arith.select %40, %37, %38 : vector<16x64xi1>, vector<16x64xbf16>
    %c0_16 = arith.constant 0 : index
    %c0_17 = arith.constant 0 : index
    %c9 = arith.constant 9 : index
    %42 = vector.load %arg1[%c0_16, %c0_17, %c9] : memref<1x16x128xbf16, #tpu.memory_space<vmem>>, vector<1x16x64xbf16>
    %43 = vector.shape_cast %42 : vector<1x16x64xbf16> to vector<16x64xbf16>
    %c0_18 = arith.constant 0 : index
    %c0_19 = arith.constant 0 : index
    %c10 = arith.constant 10 : index
    %44 = vector.load %arg1[%c0_18, %c0_19, %c10] : memref<1x16x128xbf16, #tpu.memory_space<vmem>>, vector<1x16x64xbf16>
    %45 = vector.shape_cast %44 : vector<1x16x64xbf16> to vector<16x64xbf16>
    %cst_20 = arith.constant 0.000000e+00 : bf16
    %46 = vector.broadcast %cst_20 : bf16 to vector<16x64xbf16>
    %47 = vector.shape_cast %21 : vector<1x64xi1> to vector<1x64xi1>
    %48 = vector.broadcast %47 : vector<1x64xi1> to vector<16x64xi1>
    %49 = arith.select %48, %45, %46 : vector<16x64xi1>, vector<16x64xbf16>
    %c0_21 = arith.constant 0 : index
    %c0_22 = arith.constant 0 : index
    %c16 = arith.constant 16 : index
    %50 = vector.load %arg1[%c0_21, %c0_22, %c16] : memref<1x16x128xbf16, #tpu.memory_space<vmem>>, vector<1x16x64xbf16>
    %51 = vector.shape_cast %50 : vector<1x16x64xbf16> to vector<16x64xbf16>
    %cst_23 = arith.constant 0.000000e+00 : bf16
    %52 = vector.broadcast %cst_23 : bf16 to vector<16x64xbf16>
    %53 = vector.shape_cast %19 : vector<1x64xi1> to vector<1x64xi1>
    %54 = vector.broadcast %53 : vector<1x64xi1> to vector<16x64xi1>
    %55 = arith.select %54, %51, %52 : vector<16x64xi1>, vector<16x64xbf16>
    %c0_24 = arith.constant 0 : index
    %c0_25 = arith.constant 0 : index
    %c17 = arith.constant 17 : index
    %56 = vector.load %arg1[%c0_24, %c0_25, %c17] : memref<1x16x128xbf16, #tpu.memory_space<vmem>>, vector<1x16x64xbf16>
    %57 = vector.shape_cast %56 : vector<1x16x64xbf16> to vector<16x64xbf16>
    %c0_26 = arith.constant 0 : index
    %c0_27 = arith.constant 0 : index
    %c18 = arith.constant 18 : index
    %58 = vector.load %arg1[%c0_26, %c0_27, %c18] : memref<1x16x128xbf16, #tpu.memory_space<vmem>>, vector<1x16x64xbf16>
    %59 = vector.shape_cast %58 : vector<1x16x64xbf16> to vector<16x64xbf16>
    %cst_28 = arith.constant 0.000000e+00 : bf16
    %60 = vector.broadcast %cst_28 : bf16 to vector<16x64xbf16>
    %61 = vector.shape_cast %21 : vector<1x64xi1> to vector<1x64xi1>
    %62 = vector.broadcast %61 : vector<1x64xi1> to vector<16x64xi1>
    %63 = arith.select %62, %59, %60 : vector<16x64xi1>, vector<16x64xbf16>
    %64 = tpu.concatenate %27, %29, %35, %41, %43, %49, %55, %57, %63 in 0 : vector<16x64xbf16>, vector<16x64xbf16>, vector<16x64xbf16>, vector<16x64xbf16>, vector<16x64xbf16>, vector<16x64xbf16>, vector<16x64xbf16>, vector<16x64xbf16>, vector<16x64xbf16> -> vector<144x64xbf16>
    %cst_29 = arith.constant dense<0.000000e+00> : vector<16x64xf32>
    %65 = tpu.matmul %0, %64, %cst_29 {dimension_numbers = #tpu.dot_dimension_numbers<[1], [0], [0], [1], [0, 0, 1, 1], [], []>} : vector<16x144xbf16>, vector<144x64xbf16>, vector<16x64xf32> -> vector<16x64xf32>
    %c0_30 = arith.constant 0 : index
    %c0_31 = arith.constant 0 : index
    %66 = vector.load %arg4[%c0_30, %c0_31] : memref<16x144xbf16, #tpu.memory_space<vmem>>, vector<16x144xbf16>
    %67 = tpu.iota {dimensions = array<i32: 1>} : vector<1x64xi32>
    %c8_i32_32 = arith.constant 8 : i32
    %c0_i32_33 = arith.constant 0 : i32
    %68 = arith.cmpi eq, %c8_i32_32, %c0_i32_33 : i32
    %c1_i32_34 = arith.constant 1 : i32
    %69 = arith.select %68, %c1_i32_34, %c8_i32_32 : i32
    %70 = vector.broadcast %69 : i32 to vector<1x64xi32>
    %71 = arith.remsi %67, %70 : vector<1x64xi32>
    %c0_i32_35 = arith.constant 0 : i32
    %72 = vector.broadcast %c0_i32_35 : i32 to vector<1x64xi32>
    %73 = arith.cmpi ne, %71, %72 : vector<1x64xi32>
    %c0_i32_36 = arith.constant 0 : i32
    %74 = vector.broadcast %c0_i32_36 : i32 to vector<1x64xi32>
    %75 = arith.cmpi slt, %71, %74 : vector<1x64xi32>
    %c0_i32_37 = arith.constant 0 : i32
    %76 = arith.cmpi slt, %69, %c0_i32_37 : i32
    %77 = vector.broadcast %76 : i1 to vector<1x64xi1>
    %78 = vector.broadcast %77 : vector<1x64xi1> to vector<1x64xi1>
    %79 = arith.xori %75, %78 : vector<1x64xi1>
    %80 = arith.andi %79, %73 : vector<1x64xi1>
    %81 = vector.broadcast %69 : i32 to vector<1x64xi32>
    %82 = arith.addi %71, %81 : vector<1x64xi32>
    %83 = arith.select %80, %82, %71 : vector<1x64xi1>, vector<1x64xi32>
    %c1_i32_38 = arith.constant 1 : i32
    %84 = vector.broadcast %c1_i32_38 : i32 to vector<1x64xi32>
    %85 = arith.cmpi sge, %83, %84 : vector<1x64xi32>
    %c6_i32_39 = arith.constant 6 : i32
    %86 = vector.broadcast %c6_i32_39 : i32 to vector<1x64xi32>
    %87 = arith.cmpi sle, %83, %86 : vector<1x64xi32>
    %c0_40 = arith.constant 0 : index
    %c0_41 = arith.constant 0 : index
    %c0_42 = arith.constant 0 : index
    %88 = vector.load %arg2[%c0_40, %c0_41, %c0_42] : memref<1x16x128xbf16, #tpu.memory_space<vmem>>, vector<1x16x64xbf16>
    %89 = vector.shape_cast %88 : vector<1x16x64xbf16> to vector<16x64xbf16>
    %cst_43 = arith.constant 0.000000e+00 : bf16
    %90 = vector.broadcast %cst_43 : bf16 to vector<16x64xbf16>
    %91 = vector.shape_cast %85 : vector<1x64xi1> to vector<1x64xi1>
    %92 = vector.broadcast %91 : vector<1x64xi1> to vector<16x64xi1>
    %93 = arith.select %92, %89, %90 : vector<16x64xi1>, vector<16x64xbf16>
    %c0_44 = arith.constant 0 : index
    %c0_45 = arith.constant 0 : index
    %c1_46 = arith.constant 1 : index
    %94 = vector.load %arg2[%c0_44, %c0_45, %c1_46] : memref<1x16x128xbf16, #tpu.memory_space<vmem>>, vector<1x16x64xbf16>
    %95 = vector.shape_cast %94 : vector<1x16x64xbf16> to vector<16x64xbf16>
    %c0_47 = arith.constant 0 : index
    %c0_48 = arith.constant 0 : index
    %c2_49 = arith.constant 2 : index
    %96 = vector.load %arg2[%c0_47, %c0_48, %c2_49] : memref<1x16x128xbf16, #tpu.memory_space<vmem>>, vector<1x16x64xbf16>
    %97 = vector.shape_cast %96 : vector<1x16x64xbf16> to vector<16x64xbf16>
    %cst_50 = arith.constant 0.000000e+00 : bf16
    %98 = vector.broadcast %cst_50 : bf16 to vector<16x64xbf16>
    %99 = vector.shape_cast %87 : vector<1x64xi1> to vector<1x64xi1>
    %100 = vector.broadcast %99 : vector<1x64xi1> to vector<16x64xi1>
    %101 = arith.select %100, %97, %98 : vector<16x64xi1>, vector<16x64xbf16>
    %c0_51 = arith.constant 0 : index
    %c0_52 = arith.constant 0 : index
    %c8_53 = arith.constant 8 : index
    %102 = vector.load %arg2[%c0_51, %c0_52, %c8_53] : memref<1x16x128xbf16, #tpu.memory_space<vmem>>, vector<1x16x64xbf16>
    %103 = vector.shape_cast %102 : vector<1x16x64xbf16> to vector<16x64xbf16>
    %cst_54 = arith.constant 0.000000e+00 : bf16
    %104 = vector.broadcast %cst_54 : bf16 to vector<16x64xbf16>
    %105 = vector.shape_cast %85 : vector<1x64xi1> to vector<1x64xi1>
    %106 = vector.broadcast %105 : vector<1x64xi1> to vector<16x64xi1>
    %107 = arith.select %106, %103, %104 : vector<16x64xi1>, vector<16x64xbf16>
    %c0_55 = arith.constant 0 : index
    %c0_56 = arith.constant 0 : index
    %c9_57 = arith.constant 9 : index
    %108 = vector.load %arg2[%c0_55, %c0_56, %c9_57] : memref<1x16x128xbf16, #tpu.memory_space<vmem>>, vector<1x16x64xbf16>
    %109 = vector.shape_cast %108 : vector<1x16x64xbf16> to vector<16x64xbf16>
    %c0_58 = arith.constant 0 : index
    %c0_59 = arith.constant 0 : index
    %c10_60 = arith.constant 10 : index
    %110 = vector.load %arg2[%c0_58, %c0_59, %c10_60] : memref<1x16x128xbf16, #tpu.memory_space<vmem>>, vector<1x16x64xbf16>
    %111 = vector.shape_cast %110 : vector<1x16x64xbf16> to vector<16x64xbf16>
    %cst_61 = arith.constant 0.000000e+00 : bf16
    %112 = vector.broadcast %cst_61 : bf16 to vector<16x64xbf16>
    %113 = vector.shape_cast %87 : vector<1x64xi1> to vector<1x64xi1>
    %114 = vector.broadcast %113 : vector<1x64xi1> to vector<16x64xi1>
    %115 = arith.select %114, %111, %112 : vector<16x64xi1>, vector<16x64xbf16>
    %c0_62 = arith.constant 0 : index
    %c0_63 = arith.constant 0 : index
    %c16_64 = arith.constant 16 : index
    %116 = vector.load %arg2[%c0_62, %c0_63, %c16_64] : memref<1x16x128xbf16, #tpu.memory_space<vmem>>, vector<1x16x64xbf16>
    %117 = vector.shape_cast %116 : vector<1x16x64xbf16> to vector<16x64xbf16>
    %cst_65 = arith.constant 0.000000e+00 : bf16
    %118 = vector.broadcast %cst_65 : bf16 to vector<16x64xbf16>
    %119 = vector.shape_cast %85 : vector<1x64xi1> to vector<1x64xi1>
    %120 = vector.broadcast %119 : vector<1x64xi1> to vector<16x64xi1>
    %121 = arith.select %120, %117, %118 : vector<16x64xi1>, vector<16x64xbf16>
    %c0_66 = arith.constant 0 : index
    %c0_67 = arith.constant 0 : index
    %c17_68 = arith.constant 17 : index
    %122 = vector.load %arg2[%c0_66, %c0_67, %c17_68] : memref<1x16x128xbf16, #tpu.memory_space<vmem>>, vector<1x16x64xbf16>
    %123 = vector.shape_cast %122 : vector<1x16x64xbf16> to vector<16x64xbf16>
    %c0_69 = arith.constant 0 : index
    %c0_70 = arith.constant 0 : index
    %c18_71 = arith.constant 18 : index
    %124 = vector.load %arg2[%c0_69, %c0_70, %c18_71] : memref<1x16x128xbf16, #tpu.memory_space<vmem>>, vector<1x16x64xbf16>
    %125 = vector.shape_cast %124 : vector<1x16x64xbf16> to vector<16x64xbf16>
    %cst_72 = arith.constant 0.000000e+00 : bf16
    %126 = vector.broadcast %cst_72 : bf16 to vector<16x64xbf16>
    %127 = vector.shape_cast %87 : vector<1x64xi1> to vector<1x64xi1>
    %128 = vector.broadcast %127 : vector<1x64xi1> to vector<16x64xi1>
    %129 = arith.select %128, %125, %126 : vector<16x64xi1>, vector<16x64xbf16>
    %130 = tpu.concatenate %93, %95, %101, %107, %109, %115, %121, %123, %129 in 0 : vector<16x64xbf16>, vector<16x64xbf16>, vector<16x64xbf16>, vector<16x64xbf16>, vector<16x64xbf16>, vector<16x64xbf16>, vector<16x64xbf16>, vector<16x64xbf16>, vector<16x64xbf16> -> vector<144x64xbf16>
    %cst_73 = arith.constant dense<0.000000e+00> : vector<16x64xf32>
    %131 = tpu.matmul %66, %130, %cst_73 {dimension_numbers = #tpu.dot_dimension_numbers<[1], [0], [0], [1], [0, 0, 1, 1], [], []>} : vector<16x144xbf16>, vector<144x64xbf16>, vector<16x64xf32> -> vector<16x64xf32>
    %132 = arith.addf %65, %131 : vector<16x64xf32>
    %c0_74 = arith.constant 0 : index
    %c0_75 = arith.constant 0 : index
    %133 = vector.load %arg5[%c0_74, %c0_75] : memref<16x1xf32, #tpu.memory_space<vmem>>, vector<16x1xf32>
    %134 = vector.broadcast %133 : vector<16x1xf32> to vector<16x64xf32>
    %135 = arith.addf %132, %134 : vector<16x64xf32>
    %cst_76 = arith.constant 0.000000e+00 : f32
    %136 = vector.broadcast %cst_76 : f32 to vector<16x64xf32>
    %137 = arith.maximumf %135, %136 : vector<16x64xf32>
    %138 = arith.truncf %137 : vector<16x64xf32> to vector<16x64xbf16>
    %cst_77 = arith.constant 0.000000e+00 : bf16
    %139 = vector.broadcast %cst_77 : bf16 to vector<16x9xbf16>
    %cst_78 = arith.constant 0.000000e+00 : bf16
    %140 = vector.broadcast %cst_78 : bf16 to vector<16x55xbf16>
    %141 = tpu.concatenate %139, %138, %140 in 1 : vector<16x9xbf16>, vector<16x64xbf16>, vector<16x55xbf16> -> vector<16x128xbf16>
    %c0_79 = arith.constant 0 : index
    %c0_80 = arith.constant 0 : index
    %c0_81 = arith.constant 0 : index
    %142 = vector.load %arg6[%c0_79, %c0_80, %c0_81] : memref<1x16x128xbf16, #tpu.memory_space<vmem>>, vector<1x16x128xbf16>
    %143 = vector.shape_cast %142 : vector<1x16x128xbf16> to vector<16x128xbf16>
    %144 = vector.shape_cast %141 : vector<16x128xbf16> to vector<1x16x128xbf16>
    tpu.vector_store %arg6[%c0_79, %c0_80, %c0_81], %144 {strides = array<i32>} : memref<1x16x128xbf16, #tpu.memory_space<vmem>>, vector<1x16x128xbf16>,
    return
  }
  func.func @transform_0(%arg0: i32) -> (i32, i32, i32) {
    %c0_i32 = arith.constant 0 : i32
    %c0_i32_0 = arith.constant 0 : i32
    %c0_i32_1 = arith.constant 0 : i32
    return %arg0, %c0_i32, %c0_i32_0 : i32, i32, i32
  }
  func.func @transform_1(%arg0: i32) -> (i32, i32, i32) {
    %c0_i32 = arith.constant 0 : i32
    %c0_i32_0 = arith.constant 0 : i32
    %c0_i32_1 = arith.constant 0 : i32
    return %arg0, %c0_i32, %c0_i32_0 : i32, i32, i32
  }
  func.func @transform_2(%arg0: i32) -> (i32, i32) {
    %c0_i32 = arith.constant 0 : i32
    %c0_i32_0 = arith.constant 0 : i32
    %c0_i32_1 = arith.constant 0 : i32
    return %c0_i32, %c0_i32_0 : i32, i32
  }
  func.func @transform_3(%arg0: i32) -> (i32, i32) {
    %c0_i32 = arith.constant 0 : i32
    %c0_i32_0 = arith.constant 0 : i32
    %c0_i32_1 = arith.constant 0 : i32
    return %c0_i32, %c0_i32_0 : i32, i32
  }
  func.func @transform_4(%arg0: i32) -> (i32, i32) {
    %c0_i32 = arith.constant 0 : i32
    %c0_i32_0 = arith.constant 0 : i32
    %c0_i32_1 = arith.constant 0 : i32
    return %c0_i32, %c0_i32_0 : i32, i32
  }
  func.func @transform_5(%arg0: i32) -> (i32, i32, i32) {
    %c0_i32 = arith.constant 0 : i32
    %c0_i32_0 = arith.constant 0 : i32
    %c0_i32_1 = arith.constant 0 : i32
    return %arg0, %c0_i32, %c0_i32_0 : i32, i32, i32
  }
}

</mosaic_0001>

<llo_original>
// kernel: fuseblock_forward.14
$region0: #{fuseblock_forward.14}
  #allocation0 [shape = 'u32[]', space=smem, size = 0x4, offset = 0x4, fixed_abs, tag = 'smem constant byte address 0x4 - core index']
  #allocation1 [shape = 'u32[144,128]{1,0:T(1,128)}', space=vmem, size = 0x12000, scoped, tag = 'internal scratch']
  %s0 = inlined_call_operand.vmem [shape: bf16[2,16,128], index: 0, kind: input, shape index: {}]
  %s1 = inlined_call_operand.vmem [shape: bf16[16,144], index: 1, kind: input, shape index: {}]
  %s2 = inlined_call_operand.vmem [shape: f32[16,1], index: 2, kind: input, shape index: {}]
  %s3 = inlined_call_operand.vmem [shape: bf16[2,16,64], index: 3, kind: output, shape index: {}]
  %s4 = sld [smem:[#allocation0]]
  $region45: #{fuseblock_forward.14} parent=0
    _
  %s6 = ssub.s32 1, %s4
  %s7 = scalar_select 0, %s6, %s4
  loop: start=0, step=1, limit=4
  $region2: #{fuseblock_forward.14} parent=0 // loop_pre_header
    _
  $region3: #{fuseblock_forward.14} parent=0 // loop_header
    %s9 = sphi 0, %s13
    %p10 = scmp.ge.s32.totalorder %s9, 4
    %s19 = sphi 0, %s21
    %s22 = sphi 0, %s19
    %s23 = sphi 0, %s22
    %s39 = sphi 0, %s23
    %s43 = sphi 0, %s43
    %s45 = sphi 0, %s43
    %s46 = sphi 0, %s45
    %s60 = sphi 0, %s46
    %s64 = sphi 0, %s64
    %s66 = sphi 0, %s64
    %s67 = sphi 0, %s66
    %s81 = sphi 0, %s67
    %s87 = sphi 0, %s89
    %s90 = sphi 0, %s87
    %s91 = sphi 0, %s90
    %s107 = sphi 0, %s91
  $region4: #{fuseblock_forward.14} parent=0 // loop_header_branch
    %12 = sbr.rel (%p10) target = $region8
  $region5: #{fuseblock_forward.14} parent=0 // loop_body
    %s14 = ssub.s32 %s9, 1
    %s15 = ssub.s32 %s9, 2
    %s16 = sadd.s32 %s9, 1
    %s17 = ssub.s32 %s9, %s16
    %p18 = scmp.eq.s32.totalorder %s17, 0
    %s20 = sadd.s32 %s19, 1
    %s21 = scalar_select %p18, %s19, %s20
    %p24 = pneg %p18
    %p25 = scmp.eq.s32.totalorder %s9, 1
    %p26 = por %p24, %p25
    %p27 = scmp.ne.s32.totalorder %s19, %s22
    %p28 = scmp.eq.s32.totalorder %s9, 0
    %p29 = por %p27, %p28
    %p30 = scmp.ne.s32.totalorder %s19, %s22
    %p31 = scmp.eq.s32.totalorder %s14, 1
    %p32 = por %p30, %p31
    %p33 = scmp.ne.s32.totalorder %s22, %s23
    %p34 = scmp.eq.s32.totalorder %s14, 0
    %p35 = por %p33, %p34
    %p36 = scmp.ne.s32.totalorder %s22, %s23
    %p37 = scmp.eq.s32.totalorder %s15, 1
    %p38 = por %p36, %p37
    %p40 = scmp.ne.s32.totalorder %s23, %s39
    %p41 = scmp.eq.s32.totalorder %s15, 0
    %p42 = por %p40, %p41
    %s44 = sadd.s32 %s43, 1
    %p47 = scmp.eq.s32.totalorder %s9, 1
    %p48 = scmp.ne.s32.totalorder %s43, %s45
    %p49 = scmp.eq.s32.totalorder %s9, 0
    %p50 = por %p48, %p49
    %p51 = scmp.ne.s32.totalorder %s43, %s45
    %p52 = scmp.eq.s32.totalorder %s14, 1
    %p53 = por %p51, %p52
    %p54 = scmp.ne.s32.totalorder %s45, %s46
    %p55 = scmp.eq.s32.totalorder %s14, 0
    %p56 = por %p54, %p55
    %p57 = scmp.ne.s32.totalorder %s45, %s46
    %p58 = scmp.eq.s32.totalorder %s15, 1
    %p59 = por %p57, %p58
    %p61 = scmp.ne.s32.totalorder %s46, %s60
    %p62 = scmp.eq.s32.totalorder %s15, 0
    %p63 = por %p61, %p62
    %s65 = sadd.s32 %s64, 1
    %p68 = scmp.eq.s32.totalorder %s9, 1
    %p69 = scmp.ne.s32.totalorder %s64, %s66
    %p70 = scmp.eq.s32.totalorder %s9, 0
    %p71 = por %p69, %p70
    %p72 = scmp.ne.s32.totalorder %s64, %s66
    %p73 = scmp.eq.s32.totalorder %s14, 1
    %p74 = por %p72, %p73
    %p75 = scmp.ne.s32.totalorder %s66, %s67
    %p76 = scmp.eq.s32.totalorder %s14, 0
    %p77 = por %p75, %p76
    %p78 = scmp.ne.s32.totalorder %s66, %s67
    %p79 = scmp.eq.s32.totalorder %s15, 1
    %p80 = por %p78, %p79
    %p82 = scmp.ne.s32.totalorder %s67, %s81
    %p83 = scmp.eq.s32.totalorder %s15, 0
    %p84 = por %p82, %p83
    %s85 = ssub.s32 %s9, %s16
    %p86 = scmp.eq.s32.totalorder %s85, 0
    %s88 = sadd.s32 %s87, 1
    %s89 = scalar_select %p86, %s87, %s88
    %p92 = pneg %p86
    %p93 = scmp.eq.s32.totalorder %s9, 1
    %p94 = por %p92, %p93
    %p95 = scmp.ne.s32.totalorder %s87, %s90
    %p96 = scmp.eq.s32.totalorder %s9, 0
    %p97 = por %p95, %p96
    %p98 = scmp.ne.s32.totalorder %s87, %s90
    %p99 = scmp.eq.s32.totalorder %s14, 1
    %p100 = por %p98, %p99
    %p101 = scmp.ne.s32.totalorder %s90, %s91
    %p102 = scmp.eq.s32.totalorder %s14, 0
    %p103 = por %p101, %p102
    %p104 = scmp.ne.s32.totalorder %s90, %s91
    %p105 = scmp.eq.s32.totalorder %s15, 1
    %p106 = por %p104, %p105
    %p108 = scmp.ne.s32.totalorder %s91, %s107
    %p109 = scmp.eq.s32.totalorder %s15, 0
    %p110 = por %p108, %p109
    %p111 = scmp.le.s32.totalorder 1, %s9
    %p112 = scmp.lt.s32.totalorder %s9, 3
    %p113 = pnand %p111, %p112
    %p114 = pneg %p113
    // Predicated region
    $region9: #{fuseblock_forward.14} parent=5 // pred_check
      _
    $region10: #{fuseblock_forward.14} parent=5 // pred_check_branch
      %116 = sbr.rel (%p113) target = $region12
    $region11: #{fuseblock_forward.14} parent=5 // pred_region
      %s117 = ssub.s32 %s9, 1
      // Predicated region
      $region13: #{fuseblock_forward.14} parent=11 // pred_check
        %p118 = pneg %p56
      $region14: #{fuseblock_forward.14} parent=11 // pred_check_branch
        %120 = sbr.rel (%p118) target = $region16
      $region15: #{fuseblock_forward.14} parent=11 // pred_region
        _
      $region16: #{fuseblock_forward.14} parent=11 // pred_fallthru
        _
      // Predicated region
      $region17: #{fuseblock_forward.14} parent=11 // pred_check
        %p121 = pneg %p77
      $region18: #{fuseblock_forward.14} parent=11 // pred_check_branch
        %123 = sbr.rel (%p121) target = $region20
      $region19: #{fuseblock_forward.14} parent=11 // pred_region
        _
      $region20: #{fuseblock_forward.14} parent=11 // pred_fallthru
        _
    $region12: #{fuseblock_forward.14} parent=5 // pred_fallthru
      _
    %p124 = scmp.lt.s32.totalorder %s9, 2
    // Predicated region
    $region21: #{fuseblock_forward.14} parent=5 // pred_check
      %p125 = pneg %p124
    $region22: #{fuseblock_forward.14} parent=5 // pred_check_branch
      %127 = sbr.rel (%p125) target = $region24
    $region23: #{fuseblock_forward.14} parent=5 // pred_region
      // Predicated region
      $region25: #{fuseblock_forward.14} parent=23 // pred_check
        %p128 = pneg %p29
      $region26: #{fuseblock_forward.14} parent=23 // pred_check_branch
        %130 = sbr.rel (%p128) target = $region28
      $region27: #{fuseblock_forward.14} parent=23 // pred_region
        %p131 = scmp.lt.s32.totalorder %s9, 1
        %s132 = scalar_select %p131, %s9, 1
        %s133 = smul.addr %s132, 2
        %s134 = smul.addr %s133, 4
        %s135 = scalar_lea.vmem %s0, %s134
      $region28: #{fuseblock_forward.14} parent=23 // pred_fallthru
        _
    $region24: #{fuseblock_forward.14} parent=5 // pred_fallthru
      _
    %p136 = scmp.le.s32.totalorder 1, %s9
    %p137 = scmp.lt.s32.totalorder %s9, 3
    %p138 = pnand %p136, %p137
    %p139 = pneg %p138
    // Predicated region
    $region29: #{fuseblock_forward.14} parent=5 // pred_check
      _
    $region30: #{fuseblock_forward.14} parent=5 // pred_check_branch
      %141 = sbr.rel (%p138) target = $region32
    $region31: #{fuseblock_forward.14} parent=5 // pred_region
      %s142 = ssub.s32 %s9, 1
      %p143 = scmp.lt.s32.totalorder %s14, 1
      %s144 = scalar_select %p143, %s14, 1
      %s145 = smul.addr %s144, 2
      %s146 = smul.addr %s145, 4
      %s147 = scalar_lea.vmem %s0, %s146
      %p148 = pneg %p35
      %p149 = pneg %p32
      %p150 = pneg %p56
      %p151 = pneg %p53
      %p152 = pneg %p77
      %p153 = pneg %p74
      %p154 = pneg %p103
      %p155 = pneg %p100
      %p156 = scmp.lt.s32.totalorder %s14, 1
      %s157 = scalar_select %p156, %s14, 1
      %s158 = smul.addr %s157, 2
      %s159 = smul.addr %s158, 4
      %s160 = scalar_lea.vmem %s3, %s159
      %p161 = scmp.lt.s32.totalorder %s14, 1
      %s162 = scalar_select %p161, %s14, 1
      %s163 = smul.addr %s162, 2
      %s164 = smul.addr %s163, 4
      %s165 = scalar_lea.vmem %s0, %s164
      %p166 = scmp.lt.s32.totalorder %s14, 1
      %s167 = scalar_select %p166, %s14, 1
      %s168 = smul.addr %s167, 2
      %s169 = smul.addr %s168, 4
      %s170 = scalar_lea.vmem %s3, %s169
      %v174 = vld [vmem:[%s1] sm:$0xff]
      %v175 = vld [vmem:[%s1 + $0x8] sm:$0xff]
      %v176 = vlaneseq
      %v177 = vand.u32 %v176, 127
      %vm178 = vcmp.lt.s32.totalorder %v177, 0
      %v179 = vsub.s32 0, %v177
      %v180 = vsel %vm178, %v179, %v177
      %v181 = vshrl.u32 %v180, 3
      %v182 = vand.u32 %v180, 7
      %v183 = vsub.s32 0, %v182
      %v184 = vsel %vm178, %v183, %v182
      %vm185 = vcmp.ne.s32.totalorder %v184, 0
      %vm186 = vcmp.lt.s32.totalorder %v184, 0
      %vm187 = vmand %vm186, %vm185
      %v188 = vadd.s32 %v184, 8
      %v189 = vsel %vm187, %v188, %v184
      %vm190 = vcmp.ge.s32.totalorder %v189, 1
      %vm191 = vcmp.le.s32.totalorder %v189, 6
      %v192 = vld [vmem:[%s165] sm:$0xf]
      %v193 = vld [vmem:[%s165 + $0x4] sm:$0xf]
      %v194 = vsel %vm190, 1, 0
      %vm195 = vcmp.eq.s32.totalorder %v194, 1
      %vm196 = vmpackc.low %vm195, %vm195
      %v197 = vsel %vm196, %v192, 0
      %v198 = vsel %vm196, %v193, 0
      %v199 = vsel %vm191, 1, 0
      %vm200 = vcmp.eq.s32.totalorder %v199, 1
      %vm201 = vmpackc.low %vm200, %vm200
      %v202 = vsel %vm201, 65537, 0
      %203 = vrot.lane.b32.xlu0 %v202, 2
      %v204 = vpop.permute.xlu0 %203
      %vm205 = vcmp.ne.s16.totalorder %v204, 0
      %v206 = vsel %vm205, %v192, 0
      %v207 = vsel %vm205, %v193, 0
      %v208 = vsel %vm196, 65537, 0
      %209 = vrot.lane.b32.xlu0 %v208, 8
      %v210 = vpop.permute.xlu0 %209
      %vm211 = vcmp.ne.s16.totalorder %v210, 0
      %v212 = vsel %vm211, %v192, 0
      %v213 = vsel %vm211, %v193, 0
      %214 = vrot.lane.b32.xlu0 %v202, 10
      %v215 = vpop.permute.xlu0 %214
      %vm216 = vcmp.ne.s16.totalorder %v215, 0
      %v217 = vsel %vm216, %v192, 0
      %v218 = vsel %vm216, %v193, 0
      %219 = vrot.lane.b32.xlu0 %v208, 16
      %v220 = vpop.permute.xlu0 %219
      %vm221 = vcmp.ne.s16.totalorder %v220, 0
      %v222 = vsel %vm221, %v192, 0
      %v223 = vsel %vm221, %v193, 0
      %224 = vrot.lane.b32.xlu0 %v202, 18
      %v225 = vpop.permute.xlu0 %224
      %vm226 = vcmp.ne.s16.totalorder %v225, 0
      %v227 = vsel %vm226, %v192, 0
      %v228 = vsel %vm226, %v193, 0
      %v231 = vunpack.c.l.b16 %v197
      %v232 = vunpack.c.l.b16 %v198
      %v233 = vpack.c.b16 %v232, %v231
      %v237 = vunpack.c.l.b16 %v192
      %v238 = vunpack.c.l.b16 %v193
      %v239 = vpack.c.b16 %v238, %v237
      %240 = vrot.lane.b32.xlu0 %v239, 127
      %v241 = vpop.permute.xlu0 %240
      %v245 = vunpack.c.l.b16 %v206
      %v246 = vunpack.c.l.b16 %v207
      %v247 = vpack.c.b16 %v246, %v245
      %248 = vrot.lane.b32.xlu0 %v247, 126
      %v249 = vpop.permute.xlu0 %248
      %v253 = vunpack.c.l.b16 %v212
      %v254 = vunpack.c.l.b16 %v213
      %v255 = vpack.c.b16 %v254, %v253
      %256 = vrot.lane.b32.xlu0 %v255, 120
      %v257 = vpop.permute.xlu0 %256
      %259 = vrot.lane.b32.xlu0 %v239, 119
      %v260 = vpop.permute.xlu0 %259
      %v264 = vunpack.c.l.b16 %v217
      %v265 = vunpack.c.l.b16 %v218
      %v266 = vpack.c.b16 %v265, %v264
      %267 = vrot.lane.b32.xlu0 %v266, 118
      %v268 = vpop.permute.xlu0 %267
      %v272 = vunpack.c.l.b16 %v222
      %v273 = vunpack.c.l.b16 %v223
      %v274 = vpack.c.b16 %v273, %v272
      %275 = vrot.lane.b32.xlu0 %v274, 112
      %v276 = vpop.permute.xlu0 %275
      %278 = vrot.lane.b32.xlu0 %v239, 111
      %v279 = vpop.permute.xlu0 %278
      %v283 = vunpack.c.l.b16 %v227
      %v284 = vunpack.c.l.b16 %v228
      %v285 = vpack.c.b16 %v284, %v283
      %286 = vrot.lane.b32.xlu0 %v285, 110
      %v287 = vpop.permute.xlu0 %286
      %v289 = vld [vmem:[%s2] sm:$0xff]
      %v290 = vld [vmem:[%s2 + $0x8] sm:$0xff]
      %292 = vset.pattern.permute.xlu0 0
      %293 = vperm.xlu0 %292, %v289
      %v294 = vpop.permute.xlu0 %293
      %297 = vset.pattern.permute.xlu0 0
      %298 = vperm.xlu0 %297, %v290
      %v299 = vpop.permute.xlu0 %298
      %v303 = vunpack.c.l.b16 %v174
      %v304 = vunpack.c.h.b16 %v174
      %v305 = vunpack.c.l.b16 %v175
      %v306 = vunpack.c.h.b16 %v175
      %v307 = vpack.c.b16 %v305, %v303
      %v308 = vpack.c.b16 %v306, %v304
      %vm310 = vcmask 130048
      %v312 = vsel %vm310, %v308, 0
      %314 = vmatprep.subr.bf16.mxu0 0
      %315 = vmatpush1.bf16.msra.mxu0 %v233
      %316 = vmatprep.subr.bf16.mxu0 0
      %317 = vmatpush1.bf16.msra.mxu0 %v241
      %318 = vmatprep.subr.bf16.mxu0 0
      %319 = vmatpush1.bf16.msra.mxu0 %v249
      %320 = vmatprep.subr.bf16.mxu0 0
      %321 = vmatpush1.bf16.msra.mxu0 %v257
      %322 = vmatprep.subr.bf16.mxu0 0
      %323 = vmatpush1.bf16.msra.mxu0 %v260
      %324 = vmatprep.subr.bf16.mxu0 0
      %325 = vmatpush1.bf16.msra.mxu0 %v268
      %326 = vmatprep.subr.bf16.mxu0 0
      %327 = vmatpush1.bf16.msra.mxu0 %v276
      %328 = vmatprep.subr.bf16.mxu0 0
      %329 = vmatpush1.bf16.msra.mxu0 %v279
      %330 = vmatprep.subr.bf16.mxu0 0
      %331 = vmatpush1.bf16.msra.mxu0 %v287
      %332 = vmatprep.subr.bf16.mxu0 0
      %333 = vmatpush1.bf16.msra.mxu0 0
      %334 = vmatprep.subr.bf16.mxu0 0
      %335 = vmatpush1.bf16.msra.mxu0 0
      %336 = vmatprep.subr.bf16.mxu0 0
      %337 = vmatpush1.bf16.msra.mxu0 0
      %338 = vmatprep.subr.bf16.mxu0 0
      %339 = vmatpush1.bf16.msra.mxu0 0
      %340 = vmatprep.subr.bf16.mxu0 0
      %341 = vmatpush1.bf16.msra.mxu0 0
      %342 = vmatprep.subr.bf16.mxu0 0
      %343 = vmatpush1.bf16.msra.mxu0 0
      %344 = vmatprep.subr.bf16.mxu0 0
      %345 = vmatpush1.bf16.msra.mxu0 0
      %346 = vmatprep.mubr.bf16.mxu0 %v312
      %347 = vmatmul.mubr.bf16.gmra.mrb[0].mxu0 %v307
      %v348 = vpop.f32.mrb[0].mxu0
      %v349 = vadd.f32 %v294, %v348
      %v350 = vpop.f32.mrb[0].mxu0
      %v351 = vpop.f32.mrb[0].mxu0
      %v352 = vadd.f32 %v299, %v351
      %v353 = vpop.f32.mrb[0].mxu0
      %354 = vdwg.mxu0
      %v355 = vpack.c.bf16 %v352, %v349
      %v357 = vunpack.c.l.b16 %v355
      %v358 = vunpack.c.h.b16 %v355
      %v359 = vpack.c.b16 %v357, %v357
      %v360 = vpack.c.b16 %v358, %v358
      %vm363 = vcmask 519168
      %364 = vst.msk [vmem:[%s170] sm:$0xf] %vm363, %v359
      %365 = vst.msk [vmem:[%s170 + $0x4] sm:$0xf] %vm363, %v360
      %p366 = scmp.lt.s32.totalorder %s14, 1
      %s367 = scalar_select %p366, %s14, 1
      %s368 = smul.addr %s367, 2
      %s369 = smul.addr %s368, 4
      %s370 = scalar_lea.vmem %s3, %s369
      // Predicated region
      $region33: #{fuseblock_forward.14} parent=31 // pred_check
        %p371 = pneg %p100
      $region34: #{fuseblock_forward.14} parent=31 // pred_check_branch
        %373 = sbr.rel (%p371) target = $region36
      $region35: #{fuseblock_forward.14} parent=31 // pred_region
        _
      $region36: #{fuseblock_forward.14} parent=31 // pred_fallthru
        _
    $region32: #{fuseblock_forward.14} parent=5 // pred_fallthru
      _
    %p374 = scmp.le.s32.totalorder 2, %s9
    // Predicated region
    $region37: #{fuseblock_forward.14} parent=5 // pred_check
      %p375 = pneg %p374
    $region38: #{fuseblock_forward.14} parent=5 // pred_check_branch
      %377 = sbr.rel (%p375) target = $region40
    $region39: #{fuseblock_forward.14} parent=5 // pred_region
      %s378 = ssub.s32 %s9, 2
      // Predicated region
      $region41: #{fuseblock_forward.14} parent=39 // pred_check
        %p379 = pneg %p106
      $region42: #{fuseblock_forward.14} parent=39 // pred_check_branch
        %381 = sbr.rel (%p379) target = $region44
      $region43: #{fuseblock_forward.14} parent=39 // pred_region
        %p382 = scmp.lt.s32.totalorder %s15, 1
        %s383 = scalar_select %p382, %s15, 1
        %s384 = smul.addr %s383, 2
        %s385 = smul.addr %s384, 4
        %s386 = scalar_lea.vmem %s3, %s385
      $region44: #{fuseblock_forward.14} parent=39 // pred_fallthru
        _
    $region40: #{fuseblock_forward.14} parent=5 // pred_fallthru
      _
  $region6: #{fuseblock_forward.14} parent=0 // loop_footer
    %s13 = sadd.s32 1, %s9
  $region7: #{fuseblock_forward.14} parent=0 // loop_footer_branch
    %8 = sbr.rel target = $region3
  $region8: #{fuseblock_forward.14} parent=0 // loop_exit
    _

// kernel: fuseblock_forward.15
$region0: #{fuseblock_forward.15}
  #allocation0 [shape = 'u32[]', space=smem, size = 0x4, offset = 0x4, fixed_abs, tag = 'smem constant byte address 0x4 - core index']
  #allocation1 [shape = 'u32[144,128]{1,0:T(1,128)}', space=vmem, size = 0x12000, scoped, tag = 'internal scratch']
  %s0 = inlined_call_operand.vmem [shape: bf16[2,16,128], index: 0, kind: input, shape index: {}]
  %s1 = inlined_call_operand.vmem [shape: bf16[32,144], index: 1, kind: input, shape index: {}]
  %s2 = inlined_call_operand.vmem [shape: f32[32,1], index: 2, kind: input, shape index: {}]
  %s3 = inlined_call_operand.vmem [shape: bf16[2,32,64], index: 3, kind: output, shape index: {}]
  %s4 = sld [smem:[#allocation0]]
  $region45: #{fuseblock_forward.15} parent=0
    _
  %s6 = ssub.s32 1, %s4
  %s7 = scalar_select 0, %s6, %s4
  loop: start=0, step=1, limit=4
  $region2: #{fuseblock_forward.15} parent=0 // loop_pre_header
    _
  $region3: #{fuseblock_forward.15} parent=0 // loop_header
    %s9 = sphi 0, %s13
    %p10 = scmp.ge.s32.totalorder %s9, 4
    %s19 = sphi 0, %s21
    %s22 = sphi 0, %s19
    %s23 = sphi 0, %s22
    %s39 = sphi 0, %s23
    %s43 = sphi 0, %s43
    %s45 = sphi 0, %s43
    %s46 = sphi 0, %s45
    %s60 = sphi 0, %s46
    %s64 = sphi 0, %s64
    %s66 = sphi 0, %s64
    %s67 = sphi 0, %s66
    %s81 = sphi 0, %s67
    %s87 = sphi 0, %s89
    %s90 = sphi 0, %s87
    %s91 = sphi 0, %s90
    %s107 = sphi 0, %s91
  $region4: #{fuseblock_forward.15} parent=0 // loop_header_branch
    %12 = sbr.rel (%p10) target = $region8
  $region5: #{fuseblock_forward.15} parent=0 // loop_body
    %s14 = ssub.s32 %s9, 1
    %s15 = ssub.s32 %s9, 2
    %s16 = sadd.s32 %s9, 1
    %s17 = ssub.s32 %s9, %s16
    %p18 = scmp.eq.s32.totalorder %s17, 0
    %s20 = sadd.s32 %s19, 1
    %s21 = scalar_select %p18, %s19, %s20
    %p24 = pneg %p18
    %p25 = scmp.eq.s32.totalorder %s9, 1
    %p26 = por %p24, %p25
    %p27 = scmp.ne.s32.totalorder %s19, %s22
    %p28 = scmp.eq.s32.totalorder %s9, 0
    %p29 = por %p27, %p28
    %p30 = scmp.ne.s32.totalorder %s19, %s22
    %p31 = scmp.eq.s32.totalorder %s14, 1
    %p32 = por %p30, %p31
    %p33 = scmp.ne.s32.totalorder %s22, %s23
    %p34 = scmp.eq.s32.totalorder %s14, 0
    %p35 = por %p33, %p34
    %p36 = scmp.ne.s32.totalorder %s22, %s23
    %p37 = scmp.eq.s32.totalorder %s15, 1
    %p38 = por %p36, %p37
    %p40 = scmp.ne.s32.totalorder %s23, %s39
    %p41 = scmp.eq.s32.totalorder %s15, 0
    %p42 = por %p40, %p41
    %s44 = sadd.s32 %s43, 1
    %p47 = scmp.eq.s32.totalorder %s9, 1
    %p48 = scmp.ne.s32.totalorder %s43, %s45
    %p49 = scmp.eq.s32.totalorder %s9, 0
    %p50 = por %p48, %p49
    %p51 = scmp.ne.s32.totalorder %s43, %s45
    %p52 = scmp.eq.s32.totalorder %s14, 1
    %p53 = por %p51, %p52
    %p54 = scmp.ne.s32.totalorder %s45, %s46
    %p55 = scmp.eq.s32.totalorder %s14, 0
    %p56 = por %p54, %p55
    %p57 = scmp.ne.s32.totalorder %s45, %s46
    %p58 = scmp.eq.s32.totalorder %s15, 1
    %p59 = por %p57, %p58
    %p61 = scmp.ne.s32.totalorder %s46, %s60
    %p62 = scmp.eq.s32.totalorder %s15, 0
    %p63 = por %p61, %p62
    %s65 = sadd.s32 %s64, 1
    %p68 = scmp.eq.s32.totalorder %s9, 1
    %p69 = scmp.ne.s32.totalorder %s64, %s66
    %p70 = scmp.eq.s32.totalorder %s9, 0
    %p71 = por %p69, %p70
    %p72 = scmp.ne.s32.totalorder %s64, %s66
    %p73 = scmp.eq.s32.totalorder %s14, 1
    %p74 = por %p72, %p73
    %p75 = scmp.ne.s32.totalorder %s66, %s67
    %p76 = scmp.eq.s32.totalorder %s14, 0
    %p77 = por %p75, %p76
    %p78 = scmp.ne.s32.totalorder %s66, %s67
    %p79 = scmp.eq.s32.totalorder %s15, 1
    %p80 = por %p78, %p79
    %p82 = scmp.ne.s32.totalorder %s67, %s81
    %p83 = scmp.eq.s32.totalorder %s15, 0
    %p84 = por %p82, %p83
    %s85 = ssub.s32 %s9, %s16
    %p86 = scmp.eq.s32.totalorder %s85, 0
    %s88 = sadd.s32 %s87, 1
    %s89 = scalar_select %p86, %s87, %s88
    %p92 = pneg %p86
    %p93 = scmp.eq.s32.totalorder %s9, 1
    %p94 = por %p92, %p93
    %p95 = scmp.ne.s32.totalorder %s87, %s90
    %p96 = scmp.eq.s32.totalorder %s9, 0
    %p97 = por %p95, %p96
    %p98 = scmp.ne.s32.totalorder %s87, %s90
    %p99 = scmp.eq.s32.totalorder %s14, 1
    %p100 = por %p98, %p99
    %p101 = scmp.ne.s32.totalorder %s90, %s91
    %p102 = scmp.eq.s32.totalorder %s14, 0
    %p103 = por %p101, %p102
    %p104 = scmp.ne.s32.totalorder %s90, %s91
    %p105 = scmp.eq.s32.totalorder %s15, 1
    %p106 = por %p104, %p105
    %p108 = scmp.ne.s32.totalorder %s91, %s107
    %p109 = scmp.eq.s32.totalorder %s15, 0
    %p110 = por %p108, %p109
    %p111 = scmp.le.s32.totalorder 1, %s9
    %p112 = scmp.lt.s32.totalorder %s9, 3
    %p113 = pnand %p111, %p112
    %p114 = pneg %p113
    // Predicated region
    $region9: #{fuseblock_forward.15} parent=5 // pred_check
      _
    $region10: #{fuseblock_forward.15} parent=5 // pred_check_branch
      %116 = sbr.rel (%p113) target = $region12
    $region11: #{fuseblock_forward.15} parent=5 // pred_region
      %s117 = ssub.s32 %s9, 1
      // Predicated region
      $region13: #{fuseblock_forward.15} parent=11 // pred_check
        %p118 = pneg %p56
      $region14: #{fuseblock_forward.15} parent=11 // pred_check_branch
        %120 = sbr.rel (%p118) target = $region16
      $region15: #{fuseblock_forward.15} parent=11 // pred_region
        _
      $region16: #{fuseblock_forward.15} parent=11 // pred_fallthru
        _
      // Predicated region
      $region17: #{fuseblock_forward.15} parent=11 // pred_check
        %p121 = pneg %p77
      $region18: #{fuseblock_forward.15} parent=11 // pred_check_branch
        %123 = sbr.rel (%p121) target = $region20
      $region19: #{fuseblock_forward.15} parent=11 // pred_region
        _
      $region20: #{fuseblock_forward.15} parent=11 // pred_fallthru
        _
    $region12: #{fuseblock_forward.15} parent=5 // pred_fallthru
      _
    %p124 = scmp.lt.s32.totalorder %s9, 2
    // Predicated region
    $region21: #{fuseblock_forward.15} parent=5 // pred_check
      %p125 = pneg %p124
    $region22: #{fuseblock_forward.15} parent=5 // pred_check_branch
      %127 = sbr.rel (%p125) target = $region24
    $region23: #{fuseblock_forward.15} parent=5 // pred_region
      // Predicated region
      $region25: #{fuseblock_forward.15} parent=23 // pred_check
        %p128 = pneg %p29
      $region26: #{fuseblock_forward.15} parent=23 // pred_check_branch
        %130 = sbr.rel (%p128) target = $region28
      $region27: #{fuseblock_forward.15} parent=23 // pred_region
        %p131 = scmp.lt.s32.totalorder %s9, 1
        %s132 = scalar_select %p131, %s9, 1
        %s133 = smul.addr %s132, 2
        %s134 = smul.addr %s133, 4
        %s135 = scalar_lea.vmem %s0, %s134
      $region28: #{fuseblock_forward.15} parent=23 // pred_fallthru
        _
    $region24: #{fuseblock_forward.15} parent=5 // pred_fallthru
      _
    %p136 = scmp.le.s32.totalorder 1, %s9
    %p137 = scmp.lt.s32.totalorder %s9, 3
    %p138 = pnand %p136, %p137
    %p139 = pneg %p138
    // Predicated region
    $region29: #{fuseblock_forward.15} parent=5 // pred_check
      _
    $region30: #{fuseblock_forward.15} parent=5 // pred_check_branch
      %141 = sbr.rel (%p138) target = $region32
    $region31: #{fuseblock_forward.15} parent=5 // pred_region
      %s142 = ssub.s32 %s9, 1
      %p143 = scmp.lt.s32.totalorder %s14, 1
      %s144 = scalar_select %p143, %s14, 1
      %s145 = smul.addr %s144, 2
      %s146 = smul.addr %s145, 4
      %s147 = scalar_lea.vmem %s0, %s146
      %p148 = pneg %p35
      %p149 = pneg %p32
      %p150 = pneg %p56
      %p151 = pneg %p53
      %p152 = pneg %p77
      %p153 = pneg %p74
      %p154 = pneg %p103
      %p155 = pneg %p100
      %p156 = scmp.lt.s32.totalorder %s14, 1
      %s157 = scalar_select %p156, %s14, 1
      %s158 = smul.addr %s157, 4
      %s159 = smul.addr %s158, 4
      %s160 = scalar_lea.vmem %s3, %s159
      %p161 = scmp.lt.s32.totalorder %s14, 1
      %s162 = scalar_select %p161, %s14, 1
      %s163 = smul.addr %s162, 2
      %s164 = smul.addr %s163, 4
      %s165 = scalar_lea.vmem %s0, %s164
      %p166 = scmp.lt.s32.totalorder %s14, 1
      %s167 = scalar_select %p166, %s14, 1
      %s168 = smul.addr %s167, 4
      %s169 = smul.addr %s168, 4
      %s170 = scalar_lea.vmem %s3, %s169
      %v174 = vld [vmem:[%s1] sm:$0xff]
      %v175 = vld [vmem:[%s1 + $0x8] sm:$0xff]
      %v176 = vld [vmem:[%s1 + $0x10] sm:$0xff]
      %v177 = vld [vmem:[%s1 + $0x18] sm:$0xff]
      %v178 = vlaneseq
      %v179 = vand.u32 %v178, 127
      %vm180 = vcmp.lt.s32.totalorder %v179, 0
      %v181 = vsub.s32 0, %v179
      %v182 = vsel %vm180, %v181, %v179
      %v183 = vshrl.u32 %v182, 3
      %v184 = vand.u32 %v182, 7
      %v185 = vsub.s32 0, %v184
      %v186 = vsel %vm180, %v185, %v184
      %vm187 = vcmp.ne.s32.totalorder %v186, 0
      %vm188 = vcmp.lt.s32.totalorder %v186, 0
      %vm189 = vmand %vm188, %vm187
      %v190 = vadd.s32 %v186, 8
      %v191 = vsel %vm189, %v190, %v186
      %vm192 = vcmp.ge.s32.totalorder %v191, 1
      %vm193 = vcmp.le.s32.totalorder %v191, 6
      %v194 = vld [vmem:[%s165] sm:$0xf]
      %v195 = vld [vmem:[%s165 + $0x4] sm:$0xf]
      %v196 = vsel %vm192, 1, 0
      %vm197 = vcmp.eq.s32.totalorder %v196, 1
      %vm198 = vmpackc.low %vm197, %vm197
      %v199 = vsel %vm198, %v194, 0
      %v200 = vsel %vm198, %v195, 0
      %v201 = vsel %vm193, 1, 0
      %vm202 = vcmp.eq.s32.totalorder %v201, 1
      %vm203 = vmpackc.low %vm202, %vm202
      %v204 = vsel %vm203, 65537, 0
      %205 = vrot.lane.b32.xlu0 %v204, 2
      %v206 = vpop.permute.xlu0 %205
      %vm207 = vcmp.ne.s16.totalorder %v206, 0
      %v208 = vsel %vm207, %v194, 0
      %v209 = vsel %vm207, %v195, 0
      %v210 = vsel %vm198, 65537, 0
      %211 = vrot.lane.b32.xlu0 %v210, 8
      %v212 = vpop.permute.xlu0 %211
      %vm213 = vcmp.ne.s16.totalorder %v212, 0
      %v214 = vsel %vm213, %v194, 0
      %v215 = vsel %vm213, %v195, 0
      %216 = vrot.lane.b32.xlu0 %v204, 10
      %v217 = vpop.permute.xlu0 %216
      %vm218 = vcmp.ne.s16.totalorder %v217, 0
      %v219 = vsel %vm218, %v194, 0
      %v220 = vsel %vm218, %v195, 0
      %221 = vrot.lane.b32.xlu0 %v210, 16
      %v222 = vpop.permute.xlu0 %221
      %vm223 = vcmp.ne.s16.totalorder %v222, 0
      %v224 = vsel %vm223, %v194, 0
      %v225 = vsel %vm223, %v195, 0
      %226 = vrot.lane.b32.xlu0 %v204, 18
      %v227 = vpop.permute.xlu0 %226
      %vm228 = vcmp.ne.s16.totalorder %v227, 0
      %v229 = vsel %vm228, %v194, 0
      %v230 = vsel %vm228, %v195, 0
      %v233 = vunpack.c.l.b16 %v199
      %v234 = vunpack.c.l.b16 %v200
      %v235 = vpack.c.b16 %v234, %v233
      %v239 = vunpack.c.l.b16 %v194
      %v240 = vunpack.c.l.b16 %v195
      %v241 = vpack.c.b16 %v240, %v239
      %242 = vrot.lane.b32.xlu0 %v241, 127
      %v243 = vpop.permute.xlu0 %242
      %v247 = vunpack.c.l.b16 %v208
      %v248 = vunpack.c.l.b16 %v209
      %v249 = vpack.c.b16 %v248, %v247
      %250 = vrot.lane.b32.xlu0 %v249, 126
      %v251 = vpop.permute.xlu0 %250
      %v255 = vunpack.c.l.b16 %v214
      %v256 = vunpack.c.l.b16 %v215
      %v257 = vpack.c.b16 %v256, %v255
      %258 = vrot.lane.b32.xlu0 %v257, 120
      %v259 = vpop.permute.xlu0 %258
      %261 = vrot.lane.b32.xlu0 %v241, 119
      %v262 = vpop.permute.xlu0 %261
      %v266 = vunpack.c.l.b16 %v219
      %v267 = vunpack.c.l.b16 %v220
      %v268 = vpack.c.b16 %v267, %v266
      %269 = vrot.lane.b32.xlu0 %v268, 118
      %v270 = vpop.permute.xlu0 %269
      %v274 = vunpack.c.l.b16 %v224
      %v275 = vunpack.c.l.b16 %v225
      %v276 = vpack.c.b16 %v275, %v274
      %277 = vrot.lane.b32.xlu0 %v276, 112
      %v278 = vpop.permute.xlu0 %277
      %280 = vrot.lane.b32.xlu0 %v241, 111
      %v281 = vpop.permute.xlu0 %280
      %v285 = vunpack.c.l.b16 %v229
      %v286 = vunpack.c.l.b16 %v230
      %v287 = vpack.c.b16 %v286, %v285
      %288 = vrot.lane.b32.xlu0 %v287, 110
      %v289 = vpop.permute.xlu0 %288
      %v291 = vld [vmem:[%s2] sm:$0xff]
      %v292 = vld [vmem:[%s2 + $0x8] sm:$0xff]
      %v293 = vld [vmem:[%s2 + $0x10] sm:$0xff]
      %v294 = vld [vmem:[%s2 + $0x18] sm:$0xff]
      %296 = vset.pattern.permute.xlu0 0
      %297 = vperm.xlu0 %296, %v291
      %v298 = vpop.permute.xlu0 %297
      %301 = vset.pattern.permute.xlu0 0
      %302 = vperm.xlu0 %301, %v292
      %v303 = vpop.permute.xlu0 %302
      %306 = vset.pattern.permute.xlu0 0
      %307 = vperm.xlu0 %306, %v293
      %v308 = vpop.permute.xlu0 %307
      %311 = vset.pattern.permute.xlu0 0
      %312 = vperm.xlu0 %311, %v294
      %v313 = vpop.permute.xlu0 %312
      %v319 = vunpack.c.l.b16 %v174
      %v320 = vunpack.c.h.b16 %v174
      %v321 = vunpack.c.l.b16 %v175
      %v322 = vunpack.c.h.b16 %v175
      %v323 = vunpack.c.l.b16 %v176
      %v324 = vunpack.c.h.b16 %v176
      %v325 = vunpack.c.l.b16 %v177
      %v326 = vunpack.c.h.b16 %v177
      %v327 = vpack.c.b16 %v321, %v319
      %v328 = vpack.c.b16 %v322, %v320
      %v329 = vpack.c.b16 %v325, %v323
      %v330 = vpack.c.b16 %v326, %v324
      %vm333 = vcmask 130048
      %v335 = vsel %vm333, %v328, 0
      %v338 = vsel %vm333, %v330, 0
      %340 = vmatprep.subr.bf16.mxu0 0
      %341 = vmatpush1.bf16.msra.mxu0 %v235
      %342 = vmatprep.subr.bf16.mxu0 0
      %343 = vmatpush1.bf16.msra.mxu0 %v243
      %344 = vmatprep.subr.bf16.mxu0 0
      %345 = vmatpush1.bf16.msra.mxu0 %v251
      %346 = vmatprep.subr.bf16.mxu0 0
      %347 = vmatpush1.bf16.msra.mxu0 %v259
      %348 = vmatprep.subr.bf16.mxu0 0
      %349 = vmatpush1.bf16.msra.mxu0 %v262
      %350 = vmatprep.subr.bf16.mxu0 0
      %351 = vmatpush1.bf16.msra.mxu0 %v270
      %352 = vmatprep.subr.bf16.mxu0 0
      %353 = vmatpush1.bf16.msra.mxu0 %v278
      %354 = vmatprep.subr.bf16.mxu0 0
      %355 = vmatpush1.bf16.msra.mxu0 %v281
      %356 = vmatprep.subr.bf16.mxu0 0
      %357 = vmatpush1.bf16.msra.mxu0 %v289
      %358 = vmatprep.subr.bf16.mxu0 0
      %359 = vmatpush1.bf16.msra.mxu0 0
      %360 = vmatprep.subr.bf16.mxu0 0
      %361 = vmatpush1.bf16.msra.mxu0 0
      %362 = vmatprep.subr.bf16.mxu0 0
      %363 = vmatpush1.bf16.msra.mxu0 0
      %364 = vmatprep.subr.bf16.mxu0 0
      %365 = vmatpush1.bf16.msra.mxu0 0
      %366 = vmatprep.subr.bf16.mxu0 0
      %367 = vmatpush1.bf16.msra.mxu0 0
      %368 = vmatprep.subr.bf16.mxu0 0
      %369 = vmatpush1.bf16.msra.mxu0 0
      %370 = vmatprep.subr.bf16.mxu0 0
      %371 = vmatpush1.bf16.msra.mxu0 0
      %372 = vmatprep.mubr.bf16.mxu0 %v335
      %373 = vmatmul.mubr.bf16.gmra.mrb[0].mxu0 %v327
      %v374 = vpop.f32.mrb[0].mxu0
      %v375 = vadd.f32 %v298, %v374
      %v376 = vpop.f32.mrb[0].mxu0
      %v377 = vpop.f32.mrb[0].mxu0
      %v378 = vadd.f32 %v303, %v377
      %v379 = vpop.f32.mrb[0].mxu0
      %380 = vmatprep.mubr.bf16.mxu0 %v338
      %381 = vmatmul.mubr.bf16.gmra.mrb[0].mxu0 %v329
      %v382 = vpop.f32.mrb[0].mxu0
      %v383 = vadd.f32 %v308, %v382
      %v384 = vpop.f32.mrb[0].mxu0
      %v385 = vpop.f32.mrb[0].mxu0
      %v386 = vadd.f32 %v313, %v385
      %v387 = vpop.f32.mrb[0].mxu0
      %388 = vdwg.mxu0
      %v389 = vpack.c.bf16 %v378, %v375
      %v390 = vpack.c.bf16 %v386, %v383
      %v393 = vunpack.c.l.b16 %v389
      %v394 = vunpack.c.h.b16 %v389
      %v395 = vunpack.c.l.b16 %v390
      %v396 = vunpack.c.h.b16 %v390
      %v397 = vpack.c.b16 %v393, %v393
      %v398 = vpack.c.b16 %v394, %v394
      %v399 = vpack.c.b16 %v395, %v395
      %v400 = vpack.c.b16 %v396, %v396
      %vm405 = vcmask 519168
      %406 = vst.msk [vmem:[%s170] sm:$0xf] %vm405, %v397
      %407 = vst.msk [vmem:[%s170 + $0x4] sm:$0xf] %vm405, %v398
      %408 = vst.msk [vmem:[%s170 + $0x8] sm:$0xf] %vm405, %v399
      %409 = vst.msk [vmem:[%s170 + $0xc] sm:$0xf] %vm405, %v400
      %p410 = scmp.lt.s32.totalorder %s14, 1
      %s411 = scalar_select %p410, %s14, 1
      %s412 = smul.addr %s411, 4
      %s413 = smul.addr %s412, 4
      %s414 = scalar_lea.vmem %s3, %s413
      // Predicated region
      $region33: #{fuseblock_forward.15} parent=31 // pred_check
        %p415 = pneg %p100
      $region34: #{fuseblock_forward.15} parent=31 // pred_check_branch
        %417 = sbr.rel (%p415) target = $region36
      $region35: #{fuseblock_forward.15} parent=31 // pred_region
        _
      $region36: #{fuseblock_forward.15} parent=31 // pred_fallthru
        _
    $region32: #{fuseblock_forward.15} parent=5 // pred_fallthru
      _
    %p418 = scmp.le.s32.totalorder 2, %s9
    // Predicated region
    $region37: #{fuseblock_forward.15} parent=5 // pred_check
      %p419 = pneg %p418
    $region38: #{fuseblock_forward.15} parent=5 // pred_check_branch
      %421 = sbr.rel (%p419) target = $region40
    $region39: #{fuseblock_forward.15} parent=5 // pred_region
      %s422 = ssub.s32 %s9, 2
      // Predicated region
      $region41: #{fuseblock_forward.15} parent=39 // pred_check
        %p423 = pneg %p106
      $region42: #{fuseblock_forward.15} parent=39 // pred_check_branch
        %425 = sbr.rel (%p423) target = $region44
      $region43: #{fuseblock_forward.15} parent=39 // pred_region
        %p426 = scmp.lt.s32.totalorder %s15, 1
        %s427 = scalar_select %p426, %s15, 1
        %s428 = smul.addr %s427, 4
        %s429 = smul.addr %s428, 4
        %s430 = scalar_lea.vmem %s3, %s429
      $region44: #{fuseblock_forward.15} parent=39 // pred_fallthru
        _
    $region40: #{fuseblock_forward.15} parent=5 // pred_fallthru
      _
  $region6: #{fuseblock_forward.15} parent=0 // loop_footer
    %s13 = sadd.s32 1, %s9
  $region7: #{fuseblock_forward.15} parent=0 // loop_footer_branch
    %8 = sbr.rel target = $region3
  $region8: #{fuseblock_forward.15} parent=0 // loop_exit
    _

// kernel: fuseblock_forward.16
$region0: #{fuseblock_forward.16}
  #allocation0 [shape = 'u32[]', space=smem, size = 0x4, offset = 0x4, fixed_abs, tag = 'smem constant byte address 0x4 - core index']
  #allocation1 [shape = 'u32[144,128]{1,0:T(1,128)}', space=vmem, size = 0x12000, scoped, tag = 'internal scratch']
  %s0 = inlined_call_operand.vmem [shape: bf16[2,8,2,64], index: 0, kind: input, shape index: {}]
  %s1 = inlined_call_operand.vmem [shape: bf16[2,2,8,2,64], index: 1, kind: input, shape index: {}, may-alias: {1,2}]
  %s2 = inlined_call_operand.vmem [shape: bf16[2,2,8,2,64], index: 2, kind: input, shape index: {}, may-alias: {1,2}]
  %s3 = inlined_call_operand.vmem [shape: f32[8,1,1], index: 3, kind: input, shape index: {}]
  %s4 = inlined_call_operand.vmem [shape: bf16[2,8,2,64], index: 4, kind: output, shape index: {}]
  %s5 = sld [smem:[#allocation0]]
  $region49: #{fuseblock_forward.16} parent=0
    _
  %s7 = ssub.s32 1, %s5
  %s8 = scalar_select 0, %s7, %s5
  loop: start=0, step=1, limit=18
  $region2: #{fuseblock_forward.16} parent=0 // loop_pre_header
    _
  $region3: #{fuseblock_forward.16} parent=0 // loop_header
    %s10 = sphi 0, %s14
    %p11 = scmp.ge.s32.totalorder %s10, 18
    %s17 = sphi 0, %s29
    %s18 = sphi 0, %s25
    %s19 = sphi 0, %s17
    %s20 = sphi 0, %s18
    %s21 = sphi 0, %s19
    %s22 = sphi 0, %s20
    %s34 = sphi 0, %s36
    %s37 = sphi 0, %s34
    %s38 = sphi 0, %s37
    %s54 = sphi 0, %s38
    %s62 = sphi 0, %s64
    %s65 = sphi 0, %s62
    %s66 = sphi 0, %s65
    %s82 = sphi 0, %s66
    %s90 = sphi 0, %s92
    %s93 = sphi 0, %s90
    %s94 = sphi 0, %s93
    %s110 = sphi 0, %s94
    %s116 = sphi 0, %s118
    %s119 = sphi 0, %s116
    %s120 = sphi 0, %s119
    %s136 = sphi 0, %s120
    %s144 = sphi 0, %s146
    %s147 = sphi 0, %s144
    %s148 = sphi 0, %s147
    %s164 = sphi 0, %s148
  $region4: #{fuseblock_forward.16} parent=0 // loop_header_branch
    %13 = sbr.rel (%p11) target = $region8
  $region5: #{fuseblock_forward.16} parent=0 // loop_body
    %s15 = ssub.s32 %s10, 1
    %s16 = ssub.s32 %s10, 2
    %s23 = sadd.s32 1, %s18
    %p24 = scmp.ge.s32.totalorder %s23, 8
    %s25 = scalar_select %p24, 0, %s23
    %s26 = sadd.s32 1, %s17
    %s27 = scalar_select %p24, %s26, %s17
    %p28 = scmp.ge.s32.totalorder %s27, 2
    %s29 = scalar_select %p28, 0, %s27
    %s30 = ssub.s32 %s17, %s29
    %s31 = ssub.s32 %s18, %s25
    %s32 = sor.u32 %s30, %s31
    %p33 = scmp.eq.s32.totalorder %s32, 0
    %s35 = sadd.s32 %s34, 1
    %s36 = scalar_select %p33, %s34, %s35
    %p39 = pneg %p33
    %p40 = scmp.eq.s32.totalorder %s10, 15
    %p41 = por %p39, %p40
    %p42 = scmp.ne.s32.totalorder %s34, %s37
    %p43 = scmp.eq.s32.totalorder %s10, 0
    %p44 = por %p42, %p43
    %p45 = scmp.ne.s32.totalorder %s34, %s37
    %p46 = scmp.eq.s32.totalorder %s15, 15
    %p47 = por %p45, %p46
    %p48 = scmp.ne.s32.totalorder %s37, %s38
    %p49 = scmp.eq.s32.totalorder %s15, 0
    %p50 = por %p48, %p49
    %p51 = scmp.ne.s32.totalorder %s37, %s38
    %p52 = scmp.eq.s32.totalorder %s16, 15
    %p53 = por %p51, %p52
    %p55 = scmp.ne.s32.totalorder %s38, %s54
    %p56 = scmp.eq.s32.totalorder %s16, 0
    %p57 = por %p55, %p56
    %s58 = ssub.s32 %s17, %s29
    %s59 = ssub.s32 %s18, %s25
    %s60 = sor.u32 %s58, %s59
    %p61 = scmp.eq.s32.totalorder %s60, 0
    %s63 = sadd.s32 %s62, 1
    %s64 = scalar_select %p61, %s62, %s63
    %p67 = pneg %p61
    %p68 = scmp.eq.s32.totalorder %s10, 15
    %p69 = por %p67, %p68
    %p70 = scmp.ne.s32.totalorder %s62, %s65
    %p71 = scmp.eq.s32.totalorder %s10, 0
    %p72 = por %p70, %p71
    %p73 = scmp.ne.s32.totalorder %s62, %s65
    %p74 = scmp.eq.s32.totalorder %s15, 15
    %p75 = por %p73, %p74
    %p76 = scmp.ne.s32.totalorder %s65, %s66
    %p77 = scmp.eq.s32.totalorder %s15, 0
    %p78 = por %p76, %p77
    %p79 = scmp.ne.s32.totalorder %s65, %s66
    %p80 = scmp.eq.s32.totalorder %s16, 15
    %p81 = por %p79, %p80
    %p83 = scmp.ne.s32.totalorder %s66, %s82
    %p84 = scmp.eq.s32.totalorder %s16, 0
    %p85 = por %p83, %p84
    %s86 = ssub.s32 %s17, %s29
    %s87 = ssub.s32 %s18, %s25
    %s88 = sor.u32 %s86, %s87
    %p89 = scmp.eq.s32.totalorder %s88, 0
    %s91 = sadd.s32 %s90, 1
    %s92 = scalar_select %p89, %s90, %s91
    %p95 = pneg %p89
    %p96 = scmp.eq.s32.totalorder %s10, 15
    %p97 = por %p95, %p96
    %p98 = scmp.ne.s32.totalorder %s90, %s93
    %p99 = scmp.eq.s32.totalorder %s10, 0
    %p100 = por %p98, %p99
    %p101 = scmp.ne.s32.totalorder %s90, %s93
    %p102 = scmp.eq.s32.totalorder %s15, 15
    %p103 = por %p101, %p102
    %p104 = scmp.ne.s32.totalorder %s93, %s94
    %p105 = scmp.eq.s32.totalorder %s15, 0
    %p106 = por %p104, %p105
    %p107 = scmp.ne.s32.totalorder %s93, %s94
    %p108 = scmp.eq.s32.totalorder %s16, 15
    %p109 = por %p107, %p108
    %p111 = scmp.ne.s32.totalorder %s94, %s110
    %p112 = scmp.eq.s32.totalorder %s16, 0
    %p113 = por %p111, %p112
    %s114 = ssub.s32 %s18, %s25
    %p115 = scmp.eq.s32.totalorder %s114, 0
    %s117 = sadd.s32 %s116, 1
    %s118 = scalar_select %p115, %s116, %s117
    %p121 = pneg %p115
    %p122 = scmp.eq.s32.totalorder %s10, 15
    %p123 = por %p121, %p122
    %p124 = scmp.ne.s32.totalorder %s116, %s119
    %p125 = scmp.eq.s32.totalorder %s10, 0
    %p126 = por %p124, %p125
    %p127 = scmp.ne.s32.totalorder %s116, %s119
    %p128 = scmp.eq.s32.totalorder %s15, 15
    %p129 = por %p127, %p128
    %p130 = scmp.ne.s32.totalorder %s119, %s120
    %p131 = scmp.eq.s32.totalorder %s15, 0
    %p132 = por %p130, %p131
    %p133 = scmp.ne.s32.totalorder %s119, %s120
    %p134 = scmp.eq.s32.totalorder %s16, 15
    %p135 = por %p133, %p134
    %p137 = scmp.ne.s32.totalorder %s120, %s136
    %p138 = scmp.eq.s32.totalorder %s16, 0
    %p139 = por %p137, %p138
    %s140 = ssub.s32 %s17, %s29
    %s141 = ssub.s32 %s18, %s25
    %s142 = sor.u32 %s140, %s141
    %p143 = scmp.eq.s32.totalorder %s142, 0
    %s145 = sadd.s32 %s144, 1
    %s146 = scalar_select %p143, %s144, %s145
    %p149 = pneg %p143
    %p150 = scmp.eq.s32.totalorder %s10, 15
    %p151 = por %p149, %p150
    %p152 = scmp.ne.s32.totalorder %s144, %s147
    %p153 = scmp.eq.s32.totalorder %s10, 0
    %p154 = por %p152, %p153
    %p155 = scmp.ne.s32.totalorder %s144, %s147
    %p156 = scmp.eq.s32.totalorder %s15, 15
    %p157 = por %p155, %p156
    %p158 = scmp.ne.s32.totalorder %s147, %s148
    %p159 = scmp.eq.s32.totalorder %s15, 0
    %p160 = por %p158, %p159
    %p161 = scmp.ne.s32.totalorder %s147, %s148
    %p162 = scmp.eq.s32.totalorder %s16, 15
    %p163 = por %p161, %p162
    %p165 = scmp.ne.s32.totalorder %s148, %s164
    %p166 = scmp.eq.s32.totalorder %s16, 0
    %p167 = por %p165, %p166
    %p168 = scmp.le.s32.totalorder 1, %s10
    %p169 = scmp.lt.s32.totalorder %s10, 17
    %p170 = pnand %p168, %p169
    %p171 = pneg %p170
    // Predicated region
    $region9: #{fuseblock_forward.16} parent=5 // pred_check
      _
    $region10: #{fuseblock_forward.16} parent=5 // pred_check_branch
      %173 = sbr.rel (%p170) target = $region12
    $region11: #{fuseblock_forward.16} parent=5 // pred_region
      %s174 = ssub.s32 %s10, 1
    $region12: #{fuseblock_forward.16} parent=5 // pred_fallthru
      _
    %p175 = scmp.lt.s32.totalorder %s10, 16
    // Predicated region
    $region13: #{fuseblock_forward.16} parent=5 // pred_check
      %p176 = pneg %p175
    $region14: #{fuseblock_forward.16} parent=5 // pred_check_branch
      %178 = sbr.rel (%p176) target = $region16
    $region15: #{fuseblock_forward.16} parent=5 // pred_region
      // Predicated region
      $region17: #{fuseblock_forward.16} parent=15 // pred_check
        %p179 = pneg %p44
      $region18: #{fuseblock_forward.16} parent=15 // pred_check_branch
        %181 = sbr.rel (%p179) target = $region20
      $region19: #{fuseblock_forward.16} parent=15 // pred_region
        %p182 = scmp.lt.s32.totalorder %s17, 1
        %s183 = scalar_select %p182, %s17, 1
        %p184 = scmp.lt.s32.totalorder %s18, 7
        %s185 = scalar_select %p184, %s18, 7
        %s186 = smul.addr %s183, 8
        %s187 = sadd.s32 %s185, %s186
        %s188 = scalar_lea.vmem %s0, %s187
      $region20: #{fuseblock_forward.16} parent=15 // pred_fallthru
        _
      // Predicated region
      $region21: #{fuseblock_forward.16} parent=15 // pred_check
        %p189 = pneg %p72
      $region22: #{fuseblock_forward.16} parent=15 // pred_check_branch
        %191 = sbr.rel (%p189) target = $region24
      $region23: #{fuseblock_forward.16} parent=15 // pred_region
        %p192 = scmp.lt.s32.totalorder %s17, 1
        %s193 = scalar_select %p192, %s17, 1
        %p194 = scmp.lt.s32.totalorder %s18, 7
        %s195 = scalar_select %p194, %s18, 7
        %s196 = smul.addr %s193, 16
        %s197 = sadd.s32 %s195, %s196
        %s198 = scalar_lea.vmem %s1, %s197
      $region24: #{fuseblock_forward.16} parent=15 // pred_fallthru
        _
      // Predicated region
      $region25: #{fuseblock_forward.16} parent=15 // pred_check
        %p199 = pneg %p100
      $region26: #{fuseblock_forward.16} parent=15 // pred_check_branch
        %201 = sbr.rel (%p199) target = $region28
      $region27: #{fuseblock_forward.16} parent=15 // pred_region
        %p202 = scmp.lt.s32.totalorder %s17, 1
        %s203 = scalar_select %p202, %s17, 1
        %p204 = scmp.lt.s32.totalorder %s18, 7
        %s205 = scalar_select %p204, %s18, 7
        %s206 = sadd.s32 %s205, 8
        %s207 = smul.addr %s203, 16
        %s208 = sadd.s32 %s206, %s207
        %s209 = scalar_lea.vmem %s2, %s208
      $region28: #{fuseblock_forward.16} parent=15 // pred_fallthru
        _
      // Predicated region
      $region29: #{fuseblock_forward.16} parent=15 // pred_check
        %p210 = pneg %p126
      $region30: #{fuseblock_forward.16} parent=15 // pred_check_branch
        %212 = sbr.rel (%p210) target = $region32
      $region31: #{fuseblock_forward.16} parent=15 // pred_region
        %p213 = scmp.lt.s32.totalorder %s18, 7
        %s214 = scalar_select %p213, %s18, 7
        %s215 = scalar_lea.vmem %s3, %s214
      $region32: #{fuseblock_forward.16} parent=15 // pred_fallthru
        _
    $region16: #{fuseblock_forward.16} parent=5 // pred_fallthru
      _
    %p216 = scmp.le.s32.totalorder 1, %s10
    %p217 = scmp.lt.s32.totalorder %s10, 17
    %p218 = pnand %p216, %p217
    %p219 = pneg %p218
    // Predicated region
    $region33: #{fuseblock_forward.16} parent=5 // pred_check
      _
    $region34: #{fuseblock_forward.16} parent=5 // pred_check_branch
      %221 = sbr.rel (%p218) target = $region36
    $region35: #{fuseblock_forward.16} parent=5 // pred_region
      %s222 = ssub.s32 %s10, 1
      %p223 = scmp.lt.s32.totalorder %s19, 1
      %s224 = scalar_select %p223, %s19, 1
      %p225 = scmp.lt.s32.totalorder %s20, 7
      %s226 = scalar_select %p225, %s20, 7
      %s227 = smul.addr %s224, 8
      %s228 = sadd.s32 %s226, %s227
      %s229 = scalar_lea.vmem %s0, %s228
      %p230 = pneg %p50
      %p231 = pneg %p47
      %p232 = scmp.lt.s32.totalorder %s19, 1
      %s233 = scalar_select %p232, %s19, 1
      %p234 = scmp.lt.s32.totalorder %s20, 7
      %s235 = scalar_select %p234, %s20, 7
      %s236 = smul.addr %s233, 16
      %s237 = sadd.s32 %s235, %s236
      %s238 = scalar_lea.vmem %s1, %s237
      %p239 = pneg %p78
      %p240 = pneg %p75
      %p241 = scmp.lt.s32.totalorder %s19, 1
      %s242 = scalar_select %p241, %s19, 1
      %p243 = scmp.lt.s32.totalorder %s20, 7
      %s244 = scalar_select %p243, %s20, 7
      %s245 = sadd.s32 %s244, 8
      %s246 = smul.addr %s242, 16
      %s247 = sadd.s32 %s245, %s246
      %s248 = scalar_lea.vmem %s2, %s247
      %p249 = pneg %p106
      %p250 = pneg %p103
      %p251 = scmp.lt.s32.totalorder %s20, 7
      %s252 = scalar_select %p251, %s20, 7
      %s253 = scalar_lea.vmem %s3, %s252
      %p254 = pneg %p132
      %p255 = pneg %p129
      %p256 = pneg %p160
      %p257 = pneg %p157
      %p258 = scmp.lt.s32.totalorder %s19, 1
      %s259 = scalar_select %p258, %s19, 1
      %p260 = scmp.lt.s32.totalorder %s20, 7
      %s261 = scalar_select %p260, %s20, 7
      %s262 = smul.addr %s259, 8
      %s263 = sadd.s32 %s261, %s262
      %s264 = scalar_lea.vmem %s4, %s263
      %p265 = scmp.lt.s32.totalorder %s19, 1
      %s266 = scalar_select %p265, %s19, 1
      %p267 = scmp.lt.s32.totalorder %s20, 7
      %s268 = scalar_select %p267, %s20, 7
      %s269 = smul.addr %s266, 8
      %s270 = sadd.s32 %s268, %s269
      %s271 = scalar_lea.vmem %s0, %s270
      %p272 = scmp.lt.s32.totalorder %s19, 1
      %s273 = scalar_select %p272, %s19, 1
      %p274 = scmp.lt.s32.totalorder %s20, 7
      %s275 = scalar_select %p274, %s20, 7
      %s276 = smul.addr %s273, 16
      %s277 = sadd.s32 %s275, %s276
      %s278 = scalar_lea.vmem %s1, %s277
      %p279 = scmp.lt.s32.totalorder %s19, 1
      %s280 = scalar_select %p279, %s19, 1
      %p281 = scmp.lt.s32.totalorder %s20, 7
      %s282 = scalar_select %p281, %s20, 7
      %s283 = sadd.s32 %s282, 8
      %s284 = smul.addr %s280, 16
      %s285 = sadd.s32 %s283, %s284
      %s286 = scalar_lea.vmem %s2, %s285
      %p287 = scmp.lt.s32.totalorder %s20, 7
      %s288 = scalar_select %p287, %s20, 7
      %s289 = scalar_lea.vmem %s3, %s288
      %p290 = scmp.lt.s32.totalorder %s19, 1
      %s291 = scalar_select %p290, %s19, 1
      %p292 = scmp.lt.s32.totalorder %s20, 7
      %s293 = scalar_select %p292, %s20, 7
      %s294 = smul.addr %s291, 8
      %s295 = sadd.s32 %s293, %s294
      %s296 = scalar_lea.vmem %s4, %s295
      %v298 = vld [vmem:[%s271] sm:$0x1]
      %v299 = vunpack.c.l.bf16 %v298
      %v300 = vld [vmem:[%s278] sm:$0x1]
      %v301 = vunpack.c.l.bf16 %v300
      %v302 = vmul.f32 %v299, %v299
      %vm303 = vcmask 517120
      %v304 = vsel %vm303, %v302, 0.0
      %305 = vadd.xlane.f32.xlu0 %v304
      %v306 = vpop.xlane.xlu0 %305
      %v307 = vmax.f32 %v306, 1e-24
      %v308 = vrsqrt.pop %v307
      %v309 = vmul.f32 %v299, %v308
      %v310 = vmul.f32 %v301, %v301
      %v311 = vsel %vm303, %v310, 0.0
      %312 = vadd.xlane.f32.xlu0 %v311
      %v313 = vpop.xlane.xlu0 %312
      %v314 = vmax.f32 %v313, 1e-24
      %v315 = vrsqrt.pop %v314
      %v316 = vmul.f32 %v301, %v315
      %v317 = vpack.c.bf16 %v309, %v309
      %v318 = vpack.c.bf16 %v316, %v316
      %vm319 = vcmask 523264
      %v321 = vsel %vm319, %v317, 0
      %v324 = vsel %vm319, %v318, 0
      %326 = vmatprep.subr.bf16.mxu0 0
      %327 = vmatpush1.bf16.xpose.msra.mxu0 %v324
      %328 = vmatprep.subr.bf16.mxu0 0
      %329 = vmatpush1.bf16.xpose.msra.mxu0 0
      %330 = vmatprep.subr.bf16.mxu0 0
      %331 = vmatpush1.bf16.xpose.msra.mxu0 0
      %332 = vmatprep.subr.bf16.mxu0 0
      %333 = vmatpush1.bf16.xpose.msra.mxu0 0
      %334 = vmatprep.subr.bf16.mxu0 0
      %335 = vmatpush1.bf16.xpose.msra.mxu0 0
      %336 = vmatprep.subr.bf16.mxu0 0
      %337 = vmatpush1.bf16.xpose.msra.mxu0 0
      %338 = vmatprep.subr.bf16.mxu0 0
      %339 = vmatpush1.bf16.xpose.msra.mxu0 0
      %340 = vmatprep.subr.bf16.mxu0 0
      %341 = vmatpush1.bf16.xpose.msra.mxu0 0
      %342 = vmatprep.subr.bf16.mxu0 0
      %343 = vmatpush1.bf16.xpose.msra.mxu0 0
      %344 = vmatprep.subr.bf16.mxu0 0
      %345 = vmatpush1.bf16.xpose.msra.mxu0 0
      %346 = vmatprep.subr.bf16.mxu0 0
      %347 = vmatpush1.bf16.xpose.msra.mxu0 0
      %348 = vmatprep.subr.bf16.mxu0 0
      %349 = vmatpush1.bf16.xpose.msra.mxu0 0
      %350 = vmatprep.subr.bf16.mxu0 0
      %351 = vmatpush1.bf16.xpose.msra.mxu0 0
      %352 = vmatprep.subr.bf16.mxu0 0
      %353 = vmatpush1.bf16.xpose.msra.mxu0 0
      %354 = vmatprep.subr.bf16.mxu0 0
      %355 = vmatpush1.bf16.xpose.msra.mxu0 0
      %356 = vmatprep.subr.bf16.mxu0 0
      %357 = vmatpush1.bf16.xpose.msra.mxu0 0
      %358 = vmatprep.mubr.bf16.mxu0 0
      %359 = vmatmul.mubr.bf16.gmra.mrb[0].mxu0 %v321
      %v360 = vpop.f32.mrb[0].mxu0
      %v361 = vadd.f32 0.0, %v360
      %v362 = vpop.f32.mrb[0].mxu0
      %v363 = vpop.f32.mrb[0].mxu0
      %v364 = vpop.f32.mrb[0].mxu0
      %365 = vdwg.mxu0
      %v366 = vld [vmem:[%s289] sm:$0x1]
      %v368 = vlaneseq
      %v369 = vshrl.u32 %v368, 7
      %v370 = vsub.s32 0, %v369
      %v371 = vrot.slane %v366, %v370
      %372 = vset.pattern.permute.xlu0 0
      %373 = vperm.xlu0 %372, %v371
      %v374 = vpop.permute.xlu0 %373
      %v376 = vmul.f32 %v361, %v374
      %vm377 = vcmask 9216
      %v378 = vsel %vm377, %v376, -inf
      %379 = vmax.xlane.f32.xlu0 %v378
      %v380 = vpop.xlane.xlu0 %379
      %v381 = vsub.f32 %v376, %v380
      %v382 = vmul.f32 %v381, 1.442695
      %v383 = vpow.pop %v382
      %v384 = vsel %vm377, %v383, 0.0
      %385 = vadd.xlane.f32.xlu0 %v384
      %v386 = vpop.xlane.xlu0 %385
      %v387 = vrcp.pop %v386
      %v388 = vmul.f32 %v383, %v387
      %v389 = vpack.c.bf16 %v388, %v388
      %v390 = vld [vmem:[%s286] sm:$0x1]
      %vm391 = vcmask 15360
      %v393 = vsel %vm391, %v389, 0
      %vm395 = vcmask 1040384
      %v397 = vsel %vm395, %v390, 0
      %399 = vmatprep.subr.bf16.mxu0 0
      %400 = vmatpush1.bf16.msra.mxu0 %v397
      %401 = vmatprep.subr.bf16.mxu0 0
      %402 = vmatpush1.bf16.msra.mxu0 0
      %403 = vmatprep.subr.bf16.mxu0 0
      %404 = vmatpush1.bf16.msra.mxu0 0
      %405 = vmatprep.subr.bf16.mxu0 0
      %406 = vmatpush1.bf16.msra.mxu0 0
      %407 = vmatprep.subr.bf16.mxu0 0
      %408 = vmatpush1.bf16.msra.mxu0 0
      %409 = vmatprep.subr.bf16.mxu0 0
      %410 = vmatpush1.bf16.msra.mxu0 0
      %411 = vmatprep.subr.bf16.mxu0 0
      %412 = vmatpush1.bf16.msra.mxu0 0
      %413 = vmatprep.subr.bf16.mxu0 0
      %414 = vmatpush1.bf16.msra.mxu0 0
      %415 = vmatprep.subr.bf16.mxu0 0
      %416 = vmatpush1.bf16.msra.mxu0 0
      %417 = vmatprep.subr.bf16.mxu0 0
      %418 = vmatpush1.bf16.msra.mxu0 0
      %419 = vmatprep.subr.bf16.mxu0 0
      %420 = vmatpush1.bf16.msra.mxu0 0
      %421 = vmatprep.subr.bf16.mxu0 0
      %422 = vmatpush1.bf16.msra.mxu0 0
      %423 = vmatprep.subr.bf16.mxu0 0
      %424 = vmatpush1.bf16.msra.mxu0 0
      %425 = vmatprep.subr.bf16.mxu0 0
      %426 = vmatpush1.bf16.msra.mxu0 0
      %427 = vmatprep.subr.bf16.mxu0 0
      %428 = vmatpush1.bf16.msra.mxu0 0
      %429 = vmatprep.subr.bf16.mxu0 0
      %430 = vmatpush1.bf16.msra.mxu0 0
      %431 = vmatprep.mubr.bf16.mxu0 0
      %432 = vmatmul.mubr.bf16.gmra.mrb[0].mxu0 %v393
      %v433 = vpop.f32.mrb[0].mxu0
      %v434 = vadd.f32 0.0, %v433
      %v435 = vpop.f32.mrb[0].mxu0
      %v436 = vpop.f32.mrb[0].mxu0
      %v437 = vpop.f32.mrb[0].mxu0
      %438 = vdwg.mxu0
      %v439 = vpack.c.bf16 %v434, %v434
      %vm440 = vcmask 516096
      %441 = vst.msk [vmem:[%s296] sm:$0x1] %vm440, %v439
      %p442 = scmp.lt.s32.totalorder %s19, 1
      %s443 = scalar_select %p442, %s19, 1
      %p444 = scmp.lt.s32.totalorder %s20, 7
      %s445 = scalar_select %p444, %s20, 7
      %s446 = smul.addr %s443, 8
      %s447 = sadd.s32 %s445, %s446
      %s448 = scalar_lea.vmem %s4, %s447
      // Predicated region
      $region37: #{fuseblock_forward.16} parent=35 // pred_check
        %p449 = pneg %p157
      $region38: #{fuseblock_forward.16} parent=35 // pred_check_branch
        %451 = sbr.rel (%p449) target = $region40
      $region39: #{fuseblock_forward.16} parent=35 // pred_region
        _
      $region40: #{fuseblock_forward.16} parent=35 // pred_fallthru
        _
    $region36: #{fuseblock_forward.16} parent=5 // pred_fallthru
      _
    %p452 = scmp.le.s32.totalorder 2, %s10
    // Predicated region
    $region41: #{fuseblock_forward.16} parent=5 // pred_check
      %p453 = pneg %p452
    $region42: #{fuseblock_forward.16} parent=5 // pred_check_branch
      %455 = sbr.rel (%p453) target = $region44
    $region43: #{fuseblock_forward.16} parent=5 // pred_region
      %s456 = ssub.s32 %s10, 2
      // Predicated region
      $region45: #{fuseblock_forward.16} parent=43 // pred_check
        %p457 = pneg %p163
      $region46: #{fuseblock_forward.16} parent=43 // pred_check_branch
        %459 = sbr.rel (%p457) target = $region48
      $region47: #{fuseblock_forward.16} parent=43 // pred_region
        %p460 = scmp.lt.s32.totalorder %s21, 1
        %s461 = scalar_select %p460, %s21, 1
        %p462 = scmp.lt.s32.totalorder %s22, 7
        %s463 = scalar_select %p462, %s22, 7
        %s464 = smul.addr %s461, 8
        %s465 = sadd.s32 %s463, %s464
        %s466 = scalar_lea.vmem %s4, %s465
      $region48: #{fuseblock_forward.16} parent=43 // pred_fallthru
        _
    $region44: #{fuseblock_forward.16} parent=5 // pred_fallthru
      _
  $region6: #{fuseblock_forward.16} parent=0 // loop_footer
    %s14 = sadd.s32 1, %s10
  $region7: #{fuseblock_forward.16} parent=0 // loop_footer_branch
    %9 = sbr.rel target = $region3
  $region8: #{fuseblock_forward.16} parent=0 // loop_exit
    _

// kernel: fuseblock_forward.12
$region0: #{fuseblock_forward.12}
  #allocation0 [shape = 'u32[]', space=smem, size = 0x4, offset = 0x4, fixed_abs, tag = 'smem constant byte address 0x4 - core index']
  #allocation1 [shape = 'u32[144,128]{1,0:T(1,128)}', space=vmem, size = 0x12000, scoped, tag = 'internal scratch']
  %s0 = inlined_call_operand.vmem [shape: bf16[2,16,128], index: 0, kind: input, shape index: {}]
  %s1 = inlined_call_operand.vmem [shape: bf16[16,144], index: 1, kind: input, shape index: {}]
  %s2 = inlined_call_operand.vmem [shape: f32[16,1], index: 2, kind: input, shape index: {}]
  %s3 = inlined_call_operand.vmem [shape: bf16[2,16,128], index: 3, kind: output, shape index: {}]
  %s4 = sld [smem:[#allocation0]]
  $region45: #{fuseblock_forward.12} parent=0
    _
  %s6 = ssub.s32 1, %s4
  %s7 = scalar_select 0, %s6, %s4
  loop: start=0, step=1, limit=4
  $region2: #{fuseblock_forward.12} parent=0 // loop_pre_header
    _
  $region3: #{fuseblock_forward.12} parent=0 // loop_header
    %s9 = sphi 0, %s13
    %p10 = scmp.ge.s32.totalorder %s9, 4
    %s19 = sphi 0, %s21
    %s22 = sphi 0, %s19
    %s23 = sphi 0, %s22
    %s39 = sphi 0, %s23
    %s43 = sphi 0, %s43
    %s45 = sphi 0, %s43
    %s46 = sphi 0, %s45
    %s60 = sphi 0, %s46
    %s64 = sphi 0, %s64
    %s66 = sphi 0, %s64
    %s67 = sphi 0, %s66
    %s81 = sphi 0, %s67
    %s87 = sphi 0, %s89
    %s90 = sphi 0, %s87
    %s91 = sphi 0, %s90
    %s107 = sphi 0, %s91
  $region4: #{fuseblock_forward.12} parent=0 // loop_header_branch
    %12 = sbr.rel (%p10) target = $region8
  $region5: #{fuseblock_forward.12} parent=0 // loop_body
    %s14 = ssub.s32 %s9, 1
    %s15 = ssub.s32 %s9, 2
    %s16 = sadd.s32 %s9, 1
    %s17 = ssub.s32 %s9, %s16
    %p18 = scmp.eq.s32.totalorder %s17, 0
    %s20 = sadd.s32 %s19, 1
    %s21 = scalar_select %p18, %s19, %s20
    %p24 = pneg %p18
    %p25 = scmp.eq.s32.totalorder %s9, 1
    %p26 = por %p24, %p25
    %p27 = scmp.ne.s32.totalorder %s19, %s22
    %p28 = scmp.eq.s32.totalorder %s9, 0
    %p29 = por %p27, %p28
    %p30 = scmp.ne.s32.totalorder %s19, %s22
    %p31 = scmp.eq.s32.totalorder %s14, 1
    %p32 = por %p30, %p31
    %p33 = scmp.ne.s32.totalorder %s22, %s23
    %p34 = scmp.eq.s32.totalorder %s14, 0
    %p35 = por %p33, %p34
    %p36 = scmp.ne.s32.totalorder %s22, %s23
    %p37 = scmp.eq.s32.totalorder %s15, 1
    %p38 = por %p36, %p37
    %p40 = scmp.ne.s32.totalorder %s23, %s39
    %p41 = scmp.eq.s32.totalorder %s15, 0
    %p42 = por %p40, %p41
    %s44 = sadd.s32 %s43, 1
    %p47 = scmp.eq.s32.totalorder %s9, 1
    %p48 = scmp.ne.s32.totalorder %s43, %s45
    %p49 = scmp.eq.s32.totalorder %s9, 0
    %p50 = por %p48, %p49
    %p51 = scmp.ne.s32.totalorder %s43, %s45
    %p52 = scmp.eq.s32.totalorder %s14, 1
    %p53 = por %p51, %p52
    %p54 = scmp.ne.s32.totalorder %s45, %s46
    %p55 = scmp.eq.s32.totalorder %s14, 0
    %p56 = por %p54, %p55
    %p57 = scmp.ne.s32.totalorder %s45, %s46
    %p58 = scmp.eq.s32.totalorder %s15, 1
    %p59 = por %p57, %p58
    %p61 = scmp.ne.s32.totalorder %s46, %s60
    %p62 = scmp.eq.s32.totalorder %s15, 0
    %p63 = por %p61, %p62
    %s65 = sadd.s32 %s64, 1
    %p68 = scmp.eq.s32.totalorder %s9, 1
    %p69 = scmp.ne.s32.totalorder %s64, %s66
    %p70 = scmp.eq.s32.totalorder %s9, 0
    %p71 = por %p69, %p70
    %p72 = scmp.ne.s32.totalorder %s64, %s66
    %p73 = scmp.eq.s32.totalorder %s14, 1
    %p74 = por %p72, %p73
    %p75 = scmp.ne.s32.totalorder %s66, %s67
    %p76 = scmp.eq.s32.totalorder %s14, 0
    %p77 = por %p75, %p76
    %p78 = scmp.ne.s32.totalorder %s66, %s67
    %p79 = scmp.eq.s32.totalorder %s15, 1
    %p80 = por %p78, %p79
    %p82 = scmp.ne.s32.totalorder %s67, %s81
    %p83 = scmp.eq.s32.totalorder %s15, 0
    %p84 = por %p82, %p83
    %s85 = ssub.s32 %s9, %s16
    %p86 = scmp.eq.s32.totalorder %s85, 0
    %s88 = sadd.s32 %s87, 1
    %s89 = scalar_select %p86, %s87, %s88
    %p92 = pneg %p86
    %p93 = scmp.eq.s32.totalorder %s9, 1
    %p94 = por %p92, %p93
    %p95 = scmp.ne.s32.totalorder %s87, %s90
    %p96 = scmp.eq.s32.totalorder %s9, 0
    %p97 = por %p95, %p96
    %p98 = scmp.ne.s32.totalorder %s87, %s90
    %p99 = scmp.eq.s32.totalorder %s14, 1
    %p100 = por %p98, %p99
    %p101 = scmp.ne.s32.totalorder %s90, %s91
    %p102 = scmp.eq.s32.totalorder %s14, 0
    %p103 = por %p101, %p102
    %p104 = scmp.ne.s32.totalorder %s90, %s91
    %p105 = scmp.eq.s32.totalorder %s15, 1
    %p106 = por %p104, %p105
    %p108 = scmp.ne.s32.totalorder %s91, %s107
    %p109 = scmp.eq.s32.totalorder %s15, 0
    %p110 = por %p108, %p109
    %p111 = scmp.le.s32.totalorder 1, %s9
    %p112 = scmp.lt.s32.totalorder %s9, 3
    %p113 = pnand %p111, %p112
    %p114 = pneg %p113
    // Predicated region
    $region9: #{fuseblock_forward.12} parent=5 // pred_check
      _
    $region10: #{fuseblock_forward.12} parent=5 // pred_check_branch
      %116 = sbr.rel (%p113) target = $region12
    $region11: #{fuseblock_forward.12} parent=5 // pred_region
      %s117 = ssub.s32 %s9, 1
      // Predicated region
      $region13: #{fuseblock_forward.12} parent=11 // pred_check
        %p118 = pneg %p56
      $region14: #{fuseblock_forward.12} parent=11 // pred_check_branch
        %120 = sbr.rel (%p118) target = $region16
      $region15: #{fuseblock_forward.12} parent=11 // pred_region
        _
      $region16: #{fuseblock_forward.12} parent=11 // pred_fallthru
        _
      // Predicated region
      $region17: #{fuseblock_forward.12} parent=11 // pred_check
        %p121 = pneg %p77
      $region18: #{fuseblock_forward.12} parent=11 // pred_check_branch
        %123 = sbr.rel (%p121) target = $region20
      $region19: #{fuseblock_forward.12} parent=11 // pred_region
        _
      $region20: #{fuseblock_forward.12} parent=11 // pred_fallthru
        _
    $region12: #{fuseblock_forward.12} parent=5 // pred_fallthru
      _
    %p124 = scmp.lt.s32.totalorder %s9, 2
    // Predicated region
    $region21: #{fuseblock_forward.12} parent=5 // pred_check
      %p125 = pneg %p124
    $region22: #{fuseblock_forward.12} parent=5 // pred_check_branch
      %127 = sbr.rel (%p125) target = $region24
    $region23: #{fuseblock_forward.12} parent=5 // pred_region
      // Predicated region
      $region25: #{fuseblock_forward.12} parent=23 // pred_check
        %p128 = pneg %p29
      $region26: #{fuseblock_forward.12} parent=23 // pred_check_branch
        %130 = sbr.rel (%p128) target = $region28
      $region27: #{fuseblock_forward.12} parent=23 // pred_region
        %p131 = scmp.lt.s32.totalorder %s9, 1
        %s132 = scalar_select %p131, %s9, 1
        %s133 = smul.addr %s132, 2
        %s134 = smul.addr %s133, 4
        %s135 = scalar_lea.vmem %s0, %s134
      $region28: #{fuseblock_forward.12} parent=23 // pred_fallthru
        _
    $region24: #{fuseblock_forward.12} parent=5 // pred_fallthru
      _
    %p136 = scmp.le.s32.totalorder 1, %s9
    %p137 = scmp.lt.s32.totalorder %s9, 3
    %p138 = pnand %p136, %p137
    %p139 = pneg %p138
    // Predicated region
    $region29: #{fuseblock_forward.12} parent=5 // pred_check
      _
    $region30: #{fuseblock_forward.12} parent=5 // pred_check_branch
      %141 = sbr.rel (%p138) target = $region32
    $region31: #{fuseblock_forward.12} parent=5 // pred_region
      %s142 = ssub.s32 %s9, 1
      %p143 = scmp.lt.s32.totalorder %s14, 1
      %s144 = scalar_select %p143, %s14, 1
      %s145 = smul.addr %s144, 2
      %s146 = smul.addr %s145, 4
      %s147 = scalar_lea.vmem %s0, %s146
      %p148 = pneg %p35
      %p149 = pneg %p32
      %p150 = pneg %p56
      %p151 = pneg %p53
      %p152 = pneg %p77
      %p153 = pneg %p74
      %p154 = pneg %p103
      %p155 = pneg %p100
      %p156 = scmp.lt.s32.totalorder %s14, 1
      %s157 = scalar_select %p156, %s14, 1
      %s158 = smul.addr %s157, 2
      %s159 = smul.addr %s158, 4
      %s160 = scalar_lea.vmem %s3, %s159
      %p161 = scmp.lt.s32.totalorder %s14, 1
      %s162 = scalar_select %p161, %s14, 1
      %s163 = smul.addr %s162, 2
      %s164 = smul.addr %s163, 4
      %s165 = scalar_lea.vmem %s0, %s164
      %p166 = scmp.lt.s32.totalorder %s14, 1
      %s167 = scalar_select %p166, %s14, 1
      %s168 = smul.addr %s167, 2
      %s169 = smul.addr %s168, 4
      %s170 = scalar_lea.vmem %s3, %s169
      %v174 = vld [vmem:[%s1] sm:$0xff]
      %v175 = vld [vmem:[%s1 + $0x8] sm:$0xff]
      %v176 = vlaneseq
      %v177 = vand.u32 %v176, 127
      %vm178 = vcmp.lt.s32.totalorder %v177, 0
      %v179 = vsub.s32 0, %v177
      %v180 = vsel %vm178, %v179, %v177
      %v181 = vshrl.u32 %v180, 3
      %v182 = vand.u32 %v180, 7
      %v183 = vsub.s32 0, %v182
      %v184 = vsel %vm178, %v183, %v182
      %vm185 = vcmp.ne.s32.totalorder %v184, 0
      %vm186 = vcmp.lt.s32.totalorder %v184, 0
      %vm187 = vmand %vm186, %vm185
      %v188 = vadd.s32 %v184, 8
      %v189 = vsel %vm187, %v188, %v184
      %vm190 = vcmp.ge.s32.totalorder %v189, 1
      %vm191 = vcmp.le.s32.totalorder %v189, 6
      %v192 = vld [vmem:[%s165] sm:$0xf]
      %v193 = vld [vmem:[%s165 + $0x4] sm:$0xf]
      %v194 = vsel %vm190, 1, 0
      %vm195 = vcmp.eq.s32.totalorder %v194, 1
      %vm196 = vmpackc.low %vm195, %vm195
      %v197 = vsel %vm196, %v192, 0
      %v198 = vsel %vm196, %v193, 0
      %v199 = vsel %vm191, 1, 0
      %vm200 = vcmp.eq.s32.totalorder %v199, 1
      %vm201 = vmpackc.low %vm200, %vm200
      %v202 = vsel %vm201, 65537, 0
      %203 = vrot.lane.b32.xlu0 %v202, 2
      %v204 = vpop.permute.xlu0 %203
      %vm205 = vcmp.ne.s16.totalorder %v204, 0
      %v206 = vsel %vm205, %v192, 0
      %v207 = vsel %vm205, %v193, 0
      %v208 = vsel %vm196, 65537, 0
      %209 = vrot.lane.b32.xlu0 %v208, 8
      %v210 = vpop.permute.xlu0 %209
      %vm211 = vcmp.ne.s16.totalorder %v210, 0
      %v212 = vsel %vm211, %v192, 0
      %v213 = vsel %vm211, %v193, 0
      %214 = vrot.lane.b32.xlu0 %v202, 10
      %v215 = vpop.permute.xlu0 %214
      %vm216 = vcmp.ne.s16.totalorder %v215, 0
      %v217 = vsel %vm216, %v192, 0
      %v218 = vsel %vm216, %v193, 0
      %219 = vrot.lane.b32.xlu0 %v208, 16
      %v220 = vpop.permute.xlu0 %219
      %vm221 = vcmp.ne.s16.totalorder %v220, 0
      %v222 = vsel %vm221, %v192, 0
      %v223 = vsel %vm221, %v193, 0
      %224 = vrot.lane.b32.xlu0 %v202, 18
      %v225 = vpop.permute.xlu0 %224
      %vm226 = vcmp.ne.s16.totalorder %v225, 0
      %v227 = vsel %vm226, %v192, 0
      %v228 = vsel %vm226, %v193, 0
      %v231 = vunpack.c.l.b16 %v197
      %v232 = vunpack.c.l.b16 %v198
      %v233 = vpack.c.b16 %v232, %v231
      %v237 = vunpack.c.l.b16 %v192
      %v238 = vunpack.c.l.b16 %v193
      %v239 = vpack.c.b16 %v238, %v237
      %240 = vrot.lane.b32.xlu0 %v239, 127
      %v241 = vpop.permute.xlu0 %240
      %v245 = vunpack.c.l.b16 %v206
      %v246 = vunpack.c.l.b16 %v207
      %v247 = vpack.c.b16 %v246, %v245
      %248 = vrot.lane.b32.xlu0 %v247, 126
      %v249 = vpop.permute.xlu0 %248
      %v253 = vunpack.c.l.b16 %v212
      %v254 = vunpack.c.l.b16 %v213
      %v255 = vpack.c.b16 %v254, %v253
      %256 = vrot.lane.b32.xlu0 %v255, 120
      %v257 = vpop.permute.xlu0 %256
      %259 = vrot.lane.b32.xlu0 %v239, 119
      %v260 = vpop.permute.xlu0 %259
      %v264 = vunpack.c.l.b16 %v217
      %v265 = vunpack.c.l.b16 %v218
      %v266 = vpack.c.b16 %v265, %v264
      %267 = vrot.lane.b32.xlu0 %v266, 118
      %v268 = vpop.permute.xlu0 %267
      %v272 = vunpack.c.l.b16 %v222
      %v273 = vunpack.c.l.b16 %v223
      %v274 = vpack.c.b16 %v273, %v272
      %275 = vrot.lane.b32.xlu0 %v274, 112
      %v276 = vpop.permute.xlu0 %275
      %278 = vrot.lane.b32.xlu0 %v239, 111
      %v279 = vpop.permute.xlu0 %278
      %v283 = vunpack.c.l.b16 %v227
      %v284 = vunpack.c.l.b16 %v228
      %v285 = vpack.c.b16 %v284, %v283
      %286 = vrot.lane.b32.xlu0 %v285, 110
      %v287 = vpop.permute.xlu0 %286
      %v289 = vld [vmem:[%s2] sm:$0xff]
      %v290 = vld [vmem:[%s2 + $0x8] sm:$0xff]
      %292 = vset.pattern.permute.xlu0 0
      %293 = vperm.xlu0 %292, %v289
      %v294 = vpop.permute.xlu0 %293
      %297 = vset.pattern.permute.xlu0 0
      %298 = vperm.xlu0 %297, %v290
      %v299 = vpop.permute.xlu0 %298
      %v303 = vunpack.c.l.b16 %v174
      %v304 = vunpack.c.h.b16 %v174
      %v305 = vunpack.c.l.b16 %v175
      %v306 = vunpack.c.h.b16 %v175
      %v307 = vpack.c.b16 %v305, %v303
      %v308 = vpack.c.b16 %v306, %v304
      %vm310 = vcmask 130048
      %v312 = vsel %vm310, %v308, 0
      %314 = vmatprep.subr.bf16.mxu0 0
      %315 = vmatpush1.bf16.msra.mxu0 %v233
      %316 = vmatprep.subr.bf16.mxu0 0
      %317 = vmatpush1.bf16.msra.mxu0 %v241
      %318 = vmatprep.subr.bf16.mxu0 0
      %319 = vmatpush1.bf16.msra.mxu0 %v249
      %320 = vmatprep.subr.bf16.mxu0 0
      %321 = vmatpush1.bf16.msra.mxu0 %v257
      %322 = vmatprep.subr.bf16.mxu0 0
      %323 = vmatpush1.bf16.msra.mxu0 %v260
      %324 = vmatprep.subr.bf16.mxu0 0
      %325 = vmatpush1.bf16.msra.mxu0 %v268
      %326 = vmatprep.subr.bf16.mxu0 0
      %327 = vmatpush1.bf16.msra.mxu0 %v276
      %328 = vmatprep.subr.bf16.mxu0 0
      %329 = vmatpush1.bf16.msra.mxu0 %v279
      %330 = vmatprep.subr.bf16.mxu0 0
      %331 = vmatpush1.bf16.msra.mxu0 %v287
      %332 = vmatprep.subr.bf16.mxu0 0
      %333 = vmatpush1.bf16.msra.mxu0 0
      %334 = vmatprep.subr.bf16.mxu0 0
      %335 = vmatpush1.bf16.msra.mxu0 0
      %336 = vmatprep.subr.bf16.mxu0 0
      %337 = vmatpush1.bf16.msra.mxu0 0
      %338 = vmatprep.subr.bf16.mxu0 0
      %339 = vmatpush1.bf16.msra.mxu0 0
      %340 = vmatprep.subr.bf16.mxu0 0
      %341 = vmatpush1.bf16.msra.mxu0 0
      %342 = vmatprep.subr.bf16.mxu0 0
      %343 = vmatpush1.bf16.msra.mxu0 0
      %344 = vmatprep.subr.bf16.mxu0 0
      %345 = vmatpush1.bf16.msra.mxu0 0
      %346 = vmatprep.mubr.bf16.mxu0 %v312
      %347 = vmatmul.mubr.bf16.gmra.mrb[0].mxu0 %v307
      %v348 = vpop.f32.mrb[0].mxu0
      %v349 = vadd.f32 %v294, %v348
      %v350 = vpop.f32.mrb[0].mxu0
      %v351 = vpop.f32.mrb[0].mxu0
      %v352 = vadd.f32 %v299, %v351
      %v353 = vpop.f32.mrb[0].mxu0
      %354 = vdwg.mxu0
      %v355 = vpack.c.bf16 %v352, %v349
      %357 = vrot.lane.b32.xlu0 %v355, 9
      %v358 = vpop.permute.xlu0 %357
      %vm359 = vcmask 72704
      %v362 = vsel %vm359, 0, %v358
      %vm363 = vcmask 596992
      %v364 = vsel %vm363, %v362, 0
      %v366 = vunpack.c.l.b16 %v364
      %v367 = vunpack.c.h.b16 %v364
      %v368 = vpack.c.b16 %v366, %v366
      %v369 = vpack.c.b16 %v367, %v367
      %372 = vst [vmem:[%s170] sm:$0xf] %v368
      %373 = vst [vmem:[%s170 + $0x4] sm:$0xf] %v369
      %p374 = scmp.lt.s32.totalorder %s14, 1
      %s375 = scalar_select %p374, %s14, 1
      %s376 = smul.addr %s375, 2
      %s377 = smul.addr %s376, 4
      %s378 = scalar_lea.vmem %s3, %s377
      // Predicated region
      $region33: #{fuseblock_forward.12} parent=31 // pred_check
        %p379 = pneg %p100
      $region34: #{fuseblock_forward.12} parent=31 // pred_check_branch
        %381 = sbr.rel (%p379) target = $region36
      $region35: #{fuseblock_forward.12} parent=31 // pred_region
        _
      $region36: #{fuseblock_forward.12} parent=31 // pred_fallthru
        _
    $region32: #{fuseblock_forward.12} parent=5 // pred_fallthru
      _
    %p382 = scmp.le.s32.totalorder 2, %s9
    // Predicated region
    $region37: #{fuseblock_forward.12} parent=5 // pred_check
      %p383 = pneg %p382
    $region38: #{fuseblock_forward.12} parent=5 // pred_check_branch
      %385 = sbr.rel (%p383) target = $region40
    $region39: #{fuseblock_forward.12} parent=5 // pred_region
      %s386 = ssub.s32 %s9, 2
      // Predicated region
      $region41: #{fuseblock_forward.12} parent=39 // pred_check
        %p387 = pneg %p106
      $region42: #{fuseblock_forward.12} parent=39 // pred_check_branch
        %389 = sbr.rel (%p387) target = $region44
      $region43: #{fuseblock_forward.12} parent=39 // pred_region
        %p390 = scmp.lt.s32.totalorder %s15, 1
        %s391 = scalar_select %p390, %s15, 1
        %s392 = smul.addr %s391, 2
        %s393 = smul.addr %s392, 4
        %s394 = scalar_lea.vmem %s3, %s393
      $region44: #{fuseblock_forward.12} parent=39 // pred_fallthru
        _
    $region40: #{fuseblock_forward.12} parent=5 // pred_fallthru
      _
  $region6: #{fuseblock_forward.12} parent=0 // loop_footer
    %s13 = sadd.s32 1, %s9
  $region7: #{fuseblock_forward.12} parent=0 // loop_footer_branch
    %8 = sbr.rel target = $region3
  $region8: #{fuseblock_forward.12} parent=0 // loop_exit
    _

// kernel: fuseblock_forward.17
$region0: #{fuseblock_forward.17}
  #allocation0 [shape = 'u32[]', space=smem, size = 0x4, offset = 0x4, fixed_abs, tag = 'smem constant byte address 0x4 - core index']
  #allocation1 [shape = 'u32[144,128]{1,0:T(1,128)}', space=vmem, size = 0x12000, scoped, tag = 'internal scratch']
  %s0 = inlined_call_operand.vmem [shape: bf16[2,16,64], index: 0, kind: input, shape index: {}]
  %s1 = inlined_call_operand.vmem [shape: bf16[16,16], index: 1, kind: input, shape index: {}]
  %s2 = inlined_call_operand.vmem [shape: bf16[2,16,128], index: 2, kind: input, shape index: {}]
  %s3 = inlined_call_operand.vmem [shape: bf16[2,16,128], index: 3, kind: output, shape index: {}]
  %s4 = sld [smem:[#allocation0]]
  $region45: #{fuseblock_forward.17} parent=0
    _
  %s6 = ssub.s32 1, %s4
  %s7 = scalar_select 0, %s6, %s4
  loop: start=0, step=1, limit=4
  $region2: #{fuseblock_forward.17} parent=0 // loop_pre_header
    _
  $region3: #{fuseblock_forward.17} parent=0 // loop_header
    %s9 = sphi 0, %s13
    %p10 = scmp.ge.s32.totalorder %s9, 4
    %s19 = sphi 0, %s21
    %s22 = sphi 0, %s19
    %s23 = sphi 0, %s22
    %s39 = sphi 0, %s23
    %s43 = sphi 0, %s43
    %s45 = sphi 0, %s43
    %s46 = sphi 0, %s45
    %s60 = sphi 0, %s46
    %s66 = sphi 0, %s68
    %s69 = sphi 0, %s66
    %s70 = sphi 0, %s69
    %s86 = sphi 0, %s70
    %s92 = sphi 0, %s94
    %s95 = sphi 0, %s92
    %s96 = sphi 0, %s95
    %s112 = sphi 0, %s96
  $region4: #{fuseblock_forward.17} parent=0 // loop_header_branch
    %12 = sbr.rel (%p10) target = $region8
  $region5: #{fuseblock_forward.17} parent=0 // loop_body
    %s14 = ssub.s32 %s9, 1
    %s15 = ssub.s32 %s9, 2
    %s16 = sadd.s32 %s9, 1
    %s17 = ssub.s32 %s9, %s16
    %p18 = scmp.eq.s32.totalorder %s17, 0
    %s20 = sadd.s32 %s19, 1
    %s21 = scalar_select %p18, %s19, %s20
    %p24 = pneg %p18
    %p25 = scmp.eq.s32.totalorder %s9, 1
    %p26 = por %p24, %p25
    %p27 = scmp.ne.s32.totalorder %s19, %s22
    %p28 = scmp.eq.s32.totalorder %s9, 0
    %p29 = por %p27, %p28
    %p30 = scmp.ne.s32.totalorder %s19, %s22
    %p31 = scmp.eq.s32.totalorder %s14, 1
    %p32 = por %p30, %p31
    %p33 = scmp.ne.s32.totalorder %s22, %s23
    %p34 = scmp.eq.s32.totalorder %s14, 0
    %p35 = por %p33, %p34
    %p36 = scmp.ne.s32.totalorder %s22, %s23
    %p37 = scmp.eq.s32.totalorder %s15, 1
    %p38 = por %p36, %p37
    %p40 = scmp.ne.s32.totalorder %s23, %s39
    %p41 = scmp.eq.s32.totalorder %s15, 0
    %p42 = por %p40, %p41
    %s44 = sadd.s32 %s43, 1
    %p47 = scmp.eq.s32.totalorder %s9, 1
    %p48 = scmp.ne.s32.totalorder %s43, %s45
    %p49 = scmp.eq.s32.totalorder %s9, 0
    %p50 = por %p48, %p49
    %p51 = scmp.ne.s32.totalorder %s43, %s45
    %p52 = scmp.eq.s32.totalorder %s14, 1
    %p53 = por %p51, %p52
    %p54 = scmp.ne.s32.totalorder %s45, %s46
    %p55 = scmp.eq.s32.totalorder %s14, 0
    %p56 = por %p54, %p55
    %p57 = scmp.ne.s32.totalorder %s45, %s46
    %p58 = scmp.eq.s32.totalorder %s15, 1
    %p59 = por %p57, %p58
    %p61 = scmp.ne.s32.totalorder %s46, %s60
    %p62 = scmp.eq.s32.totalorder %s15, 0
    %p63 = por %p61, %p62
    %s64 = ssub.s32 %s9, %s16
    %p65 = scmp.eq.s32.totalorder %s64, 0
    %s67 = sadd.s32 %s66, 1
    %s68 = scalar_select %p65, %s66, %s67
    %p71 = pneg %p65
    %p72 = scmp.eq.s32.totalorder %s9, 1
    %p73 = por %p71, %p72
    %p74 = scmp.ne.s32.totalorder %s66, %s69
    %p75 = scmp.eq.s32.totalorder %s9, 0
    %p76 = por %p74, %p75
    %p77 = scmp.ne.s32.totalorder %s66, %s69
    %p78 = scmp.eq.s32.totalorder %s14, 1
    %p79 = por %p77, %p78
    %p80 = scmp.ne.s32.totalorder %s69, %s70
    %p81 = scmp.eq.s32.totalorder %s14, 0
    %p82 = por %p80, %p81
    %p83 = scmp.ne.s32.totalorder %s69, %s70
    %p84 = scmp.eq.s32.totalorder %s15, 1
    %p85 = por %p83, %p84
    %p87 = scmp.ne.s32.totalorder %s70, %s86
    %p88 = scmp.eq.s32.totalorder %s15, 0
    %p89 = por %p87, %p88
    %s90 = ssub.s32 %s9, %s16
    %p91 = scmp.eq.s32.totalorder %s90, 0
    %s93 = sadd.s32 %s92, 1
    %s94 = scalar_select %p91, %s92, %s93
    %p97 = pneg %p91
    %p98 = scmp.eq.s32.totalorder %s9, 1
    %p99 = por %p97, %p98
    %p100 = scmp.ne.s32.totalorder %s92, %s95
    %p101 = scmp.eq.s32.totalorder %s9, 0
    %p102 = por %p100, %p101
    %p103 = scmp.ne.s32.totalorder %s92, %s95
    %p104 = scmp.eq.s32.totalorder %s14, 1
    %p105 = por %p103, %p104
    %p106 = scmp.ne.s32.totalorder %s95, %s96
    %p107 = scmp.eq.s32.totalorder %s14, 0
    %p108 = por %p106, %p107
    %p109 = scmp.ne.s32.totalorder %s95, %s96
    %p110 = scmp.eq.s32.totalorder %s15, 1
    %p111 = por %p109, %p110
    %p113 = scmp.ne.s32.totalorder %s96, %s112
    %p114 = scmp.eq.s32.totalorder %s15, 0
    %p115 = por %p113, %p114
    %p116 = scmp.le.s32.totalorder 1, %s9
    %p117 = scmp.lt.s32.totalorder %s9, 3
    %p118 = pnand %p116, %p117
    %p119 = pneg %p118
    // Predicated region
    $region9: #{fuseblock_forward.17} parent=5 // pred_check
      _
    $region10: #{fuseblock_forward.17} parent=5 // pred_check_branch
      %121 = sbr.rel (%p118) target = $region12
    $region11: #{fuseblock_forward.17} parent=5 // pred_region
      %s122 = ssub.s32 %s9, 1
      // Predicated region
      $region13: #{fuseblock_forward.17} parent=11 // pred_check
        %p123 = pneg %p56
      $region14: #{fuseblock_forward.17} parent=11 // pred_check_branch
        %125 = sbr.rel (%p123) target = $region16
      $region15: #{fuseblock_forward.17} parent=11 // pred_region
        _
      $region16: #{fuseblock_forward.17} parent=11 // pred_fallthru
        _
    $region12: #{fuseblock_forward.17} parent=5 // pred_fallthru
      _
    %p126 = scmp.lt.s32.totalorder %s9, 2
    // Predicated region
    $region17: #{fuseblock_forward.17} parent=5 // pred_check
      %p127 = pneg %p126
    $region18: #{fuseblock_forward.17} parent=5 // pred_check_branch
      %129 = sbr.rel (%p127) target = $region20
    $region19: #{fuseblock_forward.17} parent=5 // pred_region
      // Predicated region
      $region21: #{fuseblock_forward.17} parent=19 // pred_check
        %p130 = pneg %p29
      $region22: #{fuseblock_forward.17} parent=19 // pred_check_branch
        %132 = sbr.rel (%p130) target = $region24
      $region23: #{fuseblock_forward.17} parent=19 // pred_region
        %p133 = scmp.lt.s32.totalorder %s9, 1
        %s134 = scalar_select %p133, %s9, 1
        %s135 = smul.addr %s134, 2
        %s136 = smul.addr %s135, 4
        %s137 = scalar_lea.vmem %s0, %s136
      $region24: #{fuseblock_forward.17} parent=19 // pred_fallthru
        _
      // Predicated region
      $region25: #{fuseblock_forward.17} parent=19 // pred_check
        %p138 = pneg %p76
      $region26: #{fuseblock_forward.17} parent=19 // pred_check_branch
        %140 = sbr.rel (%p138) target = $region28
      $region27: #{fuseblock_forward.17} parent=19 // pred_region
        %p141 = scmp.lt.s32.totalorder %s9, 1
        %s142 = scalar_select %p141, %s9, 1
        %s143 = smul.addr %s142, 2
        %s144 = smul.addr %s143, 4
        %s145 = scalar_lea.vmem %s2, %s144
      $region28: #{fuseblock_forward.17} parent=19 // pred_fallthru
        _
    $region20: #{fuseblock_forward.17} parent=5 // pred_fallthru
      _
    %p146 = scmp.le.s32.totalorder 1, %s9
    %p147 = scmp.lt.s32.totalorder %s9, 3
    %p148 = pnand %p146, %p147
    %p149 = pneg %p148
    // Predicated region
    $region29: #{fuseblock_forward.17} parent=5 // pred_check
      _
    $region30: #{fuseblock_forward.17} parent=5 // pred_check_branch
      %151 = sbr.rel (%p148) target = $region32
    $region31: #{fuseblock_forward.17} parent=5 // pred_region
      %s152 = ssub.s32 %s9, 1
      %p153 = scmp.lt.s32.totalorder %s14, 1
      %s154 = scalar_select %p153, %s14, 1
      %s155 = smul.addr %s154, 2
      %s156 = smul.addr %s155, 4
      %s157 = scalar_lea.vmem %s0, %s156
      %p158 = pneg %p35
      %p159 = pneg %p32
      %p160 = pneg %p56
      %p161 = pneg %p53
      %p162 = scmp.lt.s32.totalorder %s14, 1
      %s163 = scalar_select %p162, %s14, 1
      %s164 = smul.addr %s163, 2
      %s165 = smul.addr %s164, 4
      %s166 = scalar_lea.vmem %s2, %s165
      %p167 = pneg %p82
      %p168 = pneg %p79
      %p169 = pneg %p108
      %p170 = pneg %p105
      %p171 = scmp.lt.s32.totalorder %s14, 1
      %s172 = scalar_select %p171, %s14, 1
      %s173 = smul.addr %s172, 2
      %s174 = smul.addr %s173, 4
      %s175 = scalar_lea.vmem %s3, %s174
      %p176 = scmp.lt.s32.totalorder %s14, 1
      %s177 = scalar_select %p176, %s14, 1
      %s178 = smul.addr %s177, 2
      %s179 = smul.addr %s178, 4
      %s180 = scalar_lea.vmem %s0, %s179
      %p181 = scmp.lt.s32.totalorder %s14, 1
      %s182 = scalar_select %p181, %s14, 1
      %s183 = smul.addr %s182, 2
      %s184 = smul.addr %s183, 4
      %s185 = scalar_lea.vmem %s2, %s184
      %p186 = scmp.lt.s32.totalorder %s14, 1
      %s187 = scalar_select %p186, %s14, 1
      %s188 = smul.addr %s187, 2
      %s189 = smul.addr %s188, 4
      %s190 = scalar_lea.vmem %s3, %s189
      %v192 = vld [vmem:[%s1] sm:$0xf]
      %v193 = vld [vmem:[%s1 + $0x4] sm:$0xf]
      %v194 = vld [vmem:[%s180] sm:$0xf]
      %v195 = vld [vmem:[%s180 + $0x4] sm:$0xf]
      %v198 = vunpack.c.l.b16 %v192
      %v199 = vunpack.c.l.b16 %v193
      %v200 = vpack.c.b16 %v199, %v198
      %v203 = vunpack.c.l.b16 %v194
      %v204 = vunpack.c.l.b16 %v195
      %v205 = vpack.c.b16 %v204, %v203
      %vm207 = vcmask 130048
      %v209 = vsel %vm207, %v200, 0
      %211 = vmatprep.subr.bf16.mxu0 0
      %212 = vmatpush1.bf16.msra.mxu0 %v205
      %213 = vmatprep.subr.bf16.mxu0 0
      %214 = vmatpush1.bf16.msra.mxu0 0
      %215 = vmatprep.subr.bf16.mxu0 0
      %216 = vmatpush1.bf16.msra.mxu0 0
      %217 = vmatprep.subr.bf16.mxu0 0
      %218 = vmatpush1.bf16.msra.mxu0 0
      %219 = vmatprep.subr.bf16.mxu0 0
      %220 = vmatpush1.bf16.msra.mxu0 0
      %221 = vmatprep.subr.bf16.mxu0 0
      %222 = vmatpush1.bf16.msra.mxu0 0
      %223 = vmatprep.subr.bf16.mxu0 0
      %224 = vmatpush1.bf16.msra.mxu0 0
      %225 = vmatprep.subr.bf16.mxu0 0
      %226 = vmatpush1.bf16.msra.mxu0 0
      %227 = vmatprep.subr.bf16.mxu0 0
      %228 = vmatpush1.bf16.msra.mxu0 0
      %229 = vmatprep.subr.bf16.mxu0 0
      %230 = vmatpush1.bf16.msra.mxu0 0
      %231 = vmatprep.subr.bf16.mxu0 0
      %232 = vmatpush1.bf16.msra.mxu0 0
      %233 = vmatprep.subr.bf16.mxu0 0
      %234 = vmatpush1.bf16.msra.mxu0 0
      %235 = vmatprep.subr.bf16.mxu0 0
      %236 = vmatpush1.bf16.msra.mxu0 0
      %237 = vmatprep.subr.bf16.mxu0 0
      %238 = vmatpush1.bf16.msra.mxu0 0
      %239 = vmatprep.subr.bf16.mxu0 0
      %240 = vmatpush1.bf16.msra.mxu0 0
      %241 = vmatprep.subr.bf16.mxu0 0
      %242 = vmatpush1.bf16.msra.mxu0 0
      %243 = vmatprep.mubr.bf16.mxu0 0
      %244 = vmatmul.mubr.bf16.gmra.mrb[0].mxu0 %v209
      %v245 = vpop.f32.mrb[0].mxu0
      %v246 = vadd.f32 0.0, %v245
      %v247 = vpop.f32.mrb[0].mxu0
      %v248 = vpop.f32.mrb[0].mxu0
      %v249 = vadd.f32 0.0, %v248
      %v250 = vpop.f32.mrb[0].mxu0
      %251 = vdwg.mxu0
      %254 = vrot.lane.b32.xlu0 %v246, 9
      %v255 = vpop.permute.xlu0 %254
      %256 = vrot.lane.b32.xlu0 %v249, 9
      %v257 = vpop.permute.xlu0 %256
      %vm260 = vcmask 72704
      %v261 = vsel %vm260, 0.0, %v255
      %v262 = vsel %vm260, 0.0, %v257
      %vm263 = vcmask 596992
      %v264 = vsel %vm263, %v261, 0.0
      %v265 = vsel %vm263, %v262, 0.0
      %v266 = vld [vmem:[%s185] sm:$0xf]
      %v267 = vld [vmem:[%s185 + $0x4] sm:$0xf]
      %v268 = vunpack.c.l.bf16 %v266
      %v269 = vunpack.c.l.bf16 %v267
      %v270 = vadd.f32 %v264, %v268
      %v271 = vadd.f32 %v265, %v269
      %v272 = vpack.c.bf16 %v271, %v270
      %v274 = vunpack.c.l.b16 %v272
      %v275 = vunpack.c.h.b16 %v272
      %v276 = vpack.c.b16 %v274, %v274
      %v277 = vpack.c.b16 %v275, %v275
      %280 = vst [vmem:[%s190] sm:$0xf] %v276
      %281 = vst [vmem:[%s190 + $0x4] sm:$0xf] %v277
      %p282 = scmp.lt.s32.totalorder %s14, 1
      %s283 = scalar_select %p282, %s14, 1
      %s284 = smul.addr %s283, 2
      %s285 = smul.addr %s284, 4
      %s286 = scalar_lea.vmem %s3, %s285
      // Predicated region
      $region33: #{fuseblock_forward.17} parent=31 // pred_check
        %p287 = pneg %p105
      $region34: #{fuseblock_forward.17} parent=31 // pred_check_branch
        %289 = sbr.rel (%p287) target = $region36
      $region35: #{fuseblock_forward.17} parent=31 // pred_region
        _
      $region36: #{fuseblock_forward.17} parent=31 // pred_fallthru
        _
    $region32: #{fuseblock_forward.17} parent=5 // pred_fallthru
      _
    %p290 = scmp.le.s32.totalorder 2, %s9
    // Predicated region
    $region37: #{fuseblock_forward.17} parent=5 // pred_check
      %p291 = pneg %p290
    $region38: #{fuseblock_forward.17} parent=5 // pred_check_branch
      %293 = sbr.rel (%p291) target = $region40
    $region39: #{fuseblock_forward.17} parent=5 // pred_region
      %s294 = ssub.s32 %s9, 2
      // Predicated region
      $region41: #{fuseblock_forward.17} parent=39 // pred_check
        %p295 = pneg %p111
      $region42: #{fuseblock_forward.17} parent=39 // pred_check_branch
        %297 = sbr.rel (%p295) target = $region44
      $region43: #{fuseblock_forward.17} parent=39 // pred_region
        %p298 = scmp.lt.s32.totalorder %s15, 1
        %s299 = scalar_select %p298, %s15, 1
        %s300 = smul.addr %s299, 2
        %s301 = smul.addr %s300, 4
        %s302 = scalar_lea.vmem %s3, %s301
      $region44: #{fuseblock_forward.17} parent=39 // pred_fallthru
        _
    $region40: #{fuseblock_forward.17} parent=5 // pred_fallthru
      _
  $region6: #{fuseblock_forward.17} parent=0 // loop_footer
    %s13 = sadd.s32 1, %s9
  $region7: #{fuseblock_forward.17} parent=0 // loop_footer_branch
    %8 = sbr.rel target = $region3
  $region8: #{fuseblock_forward.17} parent=0 // loop_exit
    _

// kernel: fuseblock_forward.23
$region0: #{fuseblock_forward.23}
  #allocation0 [shape = 'u32[]', space=smem, size = 0x4, offset = 0x4, fixed_abs, tag = 'smem constant byte address 0x4 - core index']
  #allocation1 [shape = 'u32[144,128]{1,0:T(1,128)}', space=vmem, size = 0x12000, scoped, tag = 'internal scratch']
  %s0 = inlined_call_operand.vmem [shape: bf16[2,16,128], index: 0, kind: input, shape index: {}]
  %s1 = inlined_call_operand.vmem [shape: bf16[2,16,128], index: 1, kind: input, shape index: {}]
  %s2 = inlined_call_operand.vmem [shape: bf16[2,16,128], index: 2, kind: input, shape index: {}]
  %s3 = inlined_call_operand.vmem [shape: bf16[16,144], index: 3, kind: input, shape index: {}]
  %s4 = inlined_call_operand.vmem [shape: bf16[16,144], index: 4, kind: input, shape index: {}]
  %s5 = inlined_call_operand.vmem [shape: f32[16,1], index: 5, kind: input, shape index: {}]
  %s6 = inlined_call_operand.vmem [shape: f32[16,1], index: 6, kind: input, shape index: {}]
  %s7 = inlined_call_operand.vmem [shape: f32[2,16,64], index: 7, kind: output, shape index: {}]
  %s8 = sld [smem:[#allocation0]]
  $region61: #{fuseblock_forward.23} parent=0
    _
  %s10 = ssub.s32 1, %s8
  %s11 = scalar_select 0, %s10, %s8
  loop: start=0, step=1, limit=4
  $region2: #{fuseblock_forward.23} parent=0 // loop_pre_header
    _
  $region3: #{fuseblock_forward.23} parent=0 // loop_header
    %s13 = sphi 0, %s17
    %p14 = scmp.ge.s32.totalorder %s13, 4
    %s23 = sphi 0, %s25
    %s26 = sphi 0, %s23
    %s27 = sphi 0, %s26
    %s43 = sphi 0, %s27
    %s49 = sphi 0, %s51
    %s52 = sphi 0, %s49
    %s53 = sphi 0, %s52
    %s69 = sphi 0, %s53
    %s75 = sphi 0, %s77
    %s78 = sphi 0, %s75
    %s79 = sphi 0, %s78
    %s95 = sphi 0, %s79
    %s99 = sphi 0, %s99
    %s101 = sphi 0, %s99
    %s102 = sphi 0, %s101
    %s116 = sphi 0, %s102
    %s120 = sphi 0, %s120
    %s122 = sphi 0, %s120
    %s123 = sphi 0, %s122
    %s137 = sphi 0, %s123
    %s141 = sphi 0, %s141
    %s143 = sphi 0, %s141
    %s144 = sphi 0, %s143
    %s158 = sphi 0, %s144
    %s162 = sphi 0, %s162
    %s164 = sphi 0, %s162
    %s165 = sphi 0, %s164
    %s179 = sphi 0, %s165
    %s185 = sphi 0, %s187
    %s188 = sphi 0, %s185
    %s189 = sphi 0, %s188
    %s205 = sphi 0, %s189
  $region4: #{fuseblock_forward.23} parent=0 // loop_header_branch
    %16 = sbr.rel (%p14) target = $region8
  $region5: #{fuseblock_forward.23} parent=0 // loop_body
    %s18 = ssub.s32 %s13, 1
    %s19 = ssub.s32 %s13, 2
    %s20 = sadd.s32 %s13, 1
    %s21 = ssub.s32 %s13, %s20
    %p22 = scmp.eq.s32.totalorder %s21, 0
    %s24 = sadd.s32 %s23, 1
    %s25 = scalar_select %p22, %s23, %s24
    %p28 = pneg %p22
    %p29 = scmp.eq.s32.totalorder %s13, 1
    %p30 = por %p28, %p29
    %p31 = scmp.ne.s32.totalorder %s23, %s26
    %p32 = scmp.eq.s32.totalorder %s13, 0
    %p33 = por %p31, %p32
    %p34 = scmp.ne.s32.totalorder %s23, %s26
    %p35 = scmp.eq.s32.totalorder %s18, 1
    %p36 = por %p34, %p35
    %p37 = scmp.ne.s32.totalorder %s26, %s27
    %p38 = scmp.eq.s32.totalorder %s18, 0
    %p39 = por %p37, %p38
    %p40 = scmp.ne.s32.totalorder %s26, %s27
    %p41 = scmp.eq.s32.totalorder %s19, 1
    %p42 = por %p40, %p41
    %p44 = scmp.ne.s32.totalorder %s27, %s43
    %p45 = scmp.eq.s32.totalorder %s19, 0
    %p46 = por %p44, %p45
    %s47 = ssub.s32 %s13, %s20
    %p48 = scmp.eq.s32.totalorder %s47, 0
    %s50 = sadd.s32 %s49, 1
    %s51 = scalar_select %p48, %s49, %s50
    %p54 = pneg %p48
    %p55 = scmp.eq.s32.totalorder %s13, 1
    %p56 = por %p54, %p55
    %p57 = scmp.ne.s32.totalorder %s49, %s52
    %p58 = scmp.eq.s32.totalorder %s13, 0
    %p59 = por %p57, %p58
    %p60 = scmp.ne.s32.totalorder %s49, %s52
    %p61 = scmp.eq.s32.totalorder %s18, 1
    %p62 = por %p60, %p61
    %p63 = scmp.ne.s32.totalorder %s52, %s53
    %p64 = scmp.eq.s32.totalorder %s18, 0
    %p65 = por %p63, %p64
    %p66 = scmp.ne.s32.totalorder %s52, %s53
    %p67 = scmp.eq.s32.totalorder %s19, 1
    %p68 = por %p66, %p67
    %p70 = scmp.ne.s32.totalorder %s53, %s69
    %p71 = scmp.eq.s32.totalorder %s19, 0
    %p72 = por %p70, %p71
    %s73 = ssub.s32 %s13, %s20
    %p74 = scmp.eq.s32.totalorder %s73, 0
    %s76 = sadd.s32 %s75, 1
    %s77 = scalar_select %p74, %s75, %s76
    %p80 = pneg %p74
    %p81 = scmp.eq.s32.totalorder %s13, 1
    %p82 = por %p80, %p81
    %p83 = scmp.ne.s32.totalorder %s75, %s78
    %p84 = scmp.eq.s32.totalorder %s13, 0
    %p85 = por %p83, %p84
    %p86 = scmp.ne.s32.totalorder %s75, %s78
    %p87 = scmp.eq.s32.totalorder %s18, 1
    %p88 = por %p86, %p87
    %p89 = scmp.ne.s32.totalorder %s78, %s79
    %p90 = scmp.eq.s32.totalorder %s18, 0
    %p91 = por %p89, %p90
    %p92 = scmp.ne.s32.totalorder %s78, %s79
    %p93 = scmp.eq.s32.totalorder %s19, 1
    %p94 = por %p92, %p93
    %p96 = scmp.ne.s32.totalorder %s79, %s95
    %p97 = scmp.eq.s32.totalorder %s19, 0
    %p98 = por %p96, %p97
    %s100 = sadd.s32 %s99, 1
    %p103 = scmp.eq.s32.totalorder %s13, 1
    %p104 = scmp.ne.s32.totalorder %s99, %s101
    %p105 = scmp.eq.s32.totalorder %s13, 0
    %p106 = por %p104, %p105
    %p107 = scmp.ne.s32.totalorder %s99, %s101
    %p108 = scmp.eq.s32.totalorder %s18, 1
    %p109 = por %p107, %p108
    %p110 = scmp.ne.s32.totalorder %s101, %s102
    %p111 = scmp.eq.s32.totalorder %s18, 0
    %p112 = por %p110, %p111
    %p113 = scmp.ne.s32.totalorder %s101, %s102
    %p114 = scmp.eq.s32.totalorder %s19, 1
    %p115 = por %p113, %p114
    %p117 = scmp.ne.s32.totalorder %s102, %s116
    %p118 = scmp.eq.s32.totalorder %s19, 0
    %p119 = por %p117, %p118
    %s121 = sadd.s32 %s120, 1
    %p124 = scmp.eq.s32.totalorder %s13, 1
    %p125 = scmp.ne.s32.totalorder %s120, %s122
    %p126 = scmp.eq.s32.totalorder %s13, 0
    %p127 = por %p125, %p126
    %p128 = scmp.ne.s32.totalorder %s120, %s122
    %p129 = scmp.eq.s32.totalorder %s18, 1
    %p130 = por %p128, %p129
    %p131 = scmp.ne.s32.totalorder %s122, %s123
    %p132 = scmp.eq.s32.totalorder %s18, 0
    %p133 = por %p131, %p132
    %p134 = scmp.ne.s32.totalorder %s122, %s123
    %p135 = scmp.eq.s32.totalorder %s19, 1
    %p136 = por %p134, %p135
    %p138 = scmp.ne.s32.totalorder %s123, %s137
    %p139 = scmp.eq.s32.totalorder %s19, 0
    %p140 = por %p138, %p139
    %s142 = sadd.s32 %s141, 1
    %p145 = scmp.eq.s32.totalorder %s13, 1
    %p146 = scmp.ne.s32.totalorder %s141, %s143
    %p147 = scmp.eq.s32.totalorder %s13, 0
    %p148 = por %p146, %p147
    %p149 = scmp.ne.s32.totalorder %s141, %s143
    %p150 = scmp.eq.s32.totalorder %s18, 1
    %p151 = por %p149, %p150
    %p152 = scmp.ne.s32.totalorder %s143, %s144
    %p153 = scmp.eq.s32.totalorder %s18, 0
    %p154 = por %p152, %p153
    %p155 = scmp.ne.s32.totalorder %s143, %s144
    %p156 = scmp.eq.s32.totalorder %s19, 1
    %p157 = por %p155, %p156
    %p159 = scmp.ne.s32.totalorder %s144, %s158
    %p160 = scmp.eq.s32.totalorder %s19, 0
    %p161 = por %p159, %p160
    %s163 = sadd.s32 %s162, 1
    %p166 = scmp.eq.s32.totalorder %s13, 1
    %p167 = scmp.ne.s32.totalorder %s162, %s164
    %p168 = scmp.eq.s32.totalorder %s13, 0
    %p169 = por %p167, %p168
    %p170 = scmp.ne.s32.totalorder %s162, %s164
    %p171 = scmp.eq.s32.totalorder %s18, 1
    %p172 = por %p170, %p171
    %p173 = scmp.ne.s32.totalorder %s164, %s165
    %p174 = scmp.eq.s32.totalorder %s18, 0
    %p175 = por %p173, %p174
    %p176 = scmp.ne.s32.totalorder %s164, %s165
    %p177 = scmp.eq.s32.totalorder %s19, 1
    %p178 = por %p176, %p177
    %p180 = scmp.ne.s32.totalorder %s165, %s179
    %p181 = scmp.eq.s32.totalorder %s19, 0
    %p182 = por %p180, %p181
    %s183 = ssub.s32 %s13, %s20
    %p184 = scmp.eq.s32.totalorder %s183, 0
    %s186 = sadd.s32 %s185, 1
    %s187 = scalar_select %p184, %s185, %s186
    %p190 = pneg %p184
    %p191 = scmp.eq.s32.totalorder %s13, 1
    %p192 = por %p190, %p191
    %p193 = scmp.ne.s32.totalorder %s185, %s188
    %p194 = scmp.eq.s32.totalorder %s13, 0
    %p195 = por %p193, %p194
    %p196 = scmp.ne.s32.totalorder %s185, %s188
    %p197 = scmp.eq.s32.totalorder %s18, 1
    %p198 = por %p196, %p197
    %p199 = scmp.ne.s32.totalorder %s188, %s189
    %p200 = scmp.eq.s32.totalorder %s18, 0
    %p201 = por %p199, %p200
    %p202 = scmp.ne.s32.totalorder %s188, %s189
    %p203 = scmp.eq.s32.totalorder %s19, 1
    %p204 = por %p202, %p203
    %p206 = scmp.ne.s32.totalorder %s189, %s205
    %p207 = scmp.eq.s32.totalorder %s19, 0
    %p208 = por %p206, %p207
    %p209 = scmp.le.s32.totalorder 1, %s13
    %p210 = scmp.lt.s32.totalorder %s13, 3
    %p211 = pnand %p209, %p210
    %p212 = pneg %p211
    // Predicated region
    $region9: #{fuseblock_forward.23} parent=5 // pred_check
      _
    $region10: #{fuseblock_forward.23} parent=5 // pred_check_branch
      %214 = sbr.rel (%p211) target = $region12
    $region11: #{fuseblock_forward.23} parent=5 // pred_region
      %s215 = ssub.s32 %s13, 1
      // Predicated region
      $region13: #{fuseblock_forward.23} parent=11 // pred_check
        %p216 = pneg %p112
      $region14: #{fuseblock_forward.23} parent=11 // pred_check_branch
        %218 = sbr.rel (%p216) target = $region16
      $region15: #{fuseblock_forward.23} parent=11 // pred_region
        _
      $region16: #{fuseblock_forward.23} parent=11 // pred_fallthru
        _
      // Predicated region
      $region17: #{fuseblock_forward.23} parent=11 // pred_check
        %p219 = pneg %p133
      $region18: #{fuseblock_forward.23} parent=11 // pred_check_branch
        %221 = sbr.rel (%p219) target = $region20
      $region19: #{fuseblock_forward.23} parent=11 // pred_region
        _
      $region20: #{fuseblock_forward.23} parent=11 // pred_fallthru
        _
      // Predicated region
      $region21: #{fuseblock_forward.23} parent=11 // pred_check
        %p222 = pneg %p154
      $region22: #{fuseblock_forward.23} parent=11 // pred_check_branch
        %224 = sbr.rel (%p222) target = $region24
      $region23: #{fuseblock_forward.23} parent=11 // pred_region
        _
      $region24: #{fuseblock_forward.23} parent=11 // pred_fallthru
        _
      // Predicated region
      $region25: #{fuseblock_forward.23} parent=11 // pred_check
        %p225 = pneg %p175
      $region26: #{fuseblock_forward.23} parent=11 // pred_check_branch
        %227 = sbr.rel (%p225) target = $region28
      $region27: #{fuseblock_forward.23} parent=11 // pred_region
        _
      $region28: #{fuseblock_forward.23} parent=11 // pred_fallthru
        _
    $region12: #{fuseblock_forward.23} parent=5 // pred_fallthru
      _
    %p228 = scmp.lt.s32.totalorder %s13, 2
    // Predicated region
    $region29: #{fuseblock_forward.23} parent=5 // pred_check
      %p229 = pneg %p228
    $region30: #{fuseblock_forward.23} parent=5 // pred_check_branch
      %231 = sbr.rel (%p229) target = $region32
    $region31: #{fuseblock_forward.23} parent=5 // pred_region
      // Predicated region
      $region33: #{fuseblock_forward.23} parent=31 // pred_check
        %p232 = pneg %p33
      $region34: #{fuseblock_forward.23} parent=31 // pred_check_branch
        %234 = sbr.rel (%p232) target = $region36
      $region35: #{fuseblock_forward.23} parent=31 // pred_region
        %p235 = scmp.lt.s32.totalorder %s13, 1
        %s236 = scalar_select %p235, %s13, 1
        %s237 = smul.addr %s236, 2
        %s238 = smul.addr %s237, 4
        %s239 = scalar_lea.vmem %s0, %s238
      $region36: #{fuseblock_forward.23} parent=31 // pred_fallthru
        _
      // Predicated region
      $region37: #{fuseblock_forward.23} parent=31 // pred_check
        %p240 = pneg %p59
      $region38: #{fuseblock_forward.23} parent=31 // pred_check_branch
        %242 = sbr.rel (%p240) target = $region40
      $region39: #{fuseblock_forward.23} parent=31 // pred_region
        %p243 = scmp.lt.s32.totalorder %s13, 1
        %s244 = scalar_select %p243, %s13, 1
        %s245 = smul.addr %s244, 2
        %s246 = smul.addr %s245, 4
        %s247 = scalar_lea.vmem %s1, %s246
      $region40: #{fuseblock_forward.23} parent=31 // pred_fallthru
        _
      // Predicated region
      $region41: #{fuseblock_forward.23} parent=31 // pred_check
        %p248 = pneg %p85
      $region42: #{fuseblock_forward.23} parent=31 // pred_check_branch
        %250 = sbr.rel (%p248) target = $region44
      $region43: #{fuseblock_forward.23} parent=31 // pred_region
        %p251 = scmp.lt.s32.totalorder %s13, 1
        %s252 = scalar_select %p251, %s13, 1
        %s253 = smul.addr %s252, 2
        %s254 = smul.addr %s253, 4
        %s255 = scalar_lea.vmem %s2, %s254
      $region44: #{fuseblock_forward.23} parent=31 // pred_fallthru
        _
    $region32: #{fuseblock_forward.23} parent=5 // pred_fallthru
      _
    %p256 = scmp.le.s32.totalorder 1, %s13
    %p257 = scmp.lt.s32.totalorder %s13, 3
    %p258 = pnand %p256, %p257
    %p259 = pneg %p258
    // Predicated region
    $region45: #{fuseblock_forward.23} parent=5 // pred_check
      _
    $region46: #{fuseblock_forward.23} parent=5 // pred_check_branch
      %261 = sbr.rel (%p258) target = $region48
    $region47: #{fuseblock_forward.23} parent=5 // pred_region
      %s262 = ssub.s32 %s13, 1
      %p263 = scmp.lt.s32.totalorder %s18, 1
      %s264 = scalar_select %p263, %s18, 1
      %s265 = smul.addr %s264, 2
      %s266 = smul.addr %s265, 4
      %s267 = scalar_lea.vmem %s0, %s266
      %p268 = pneg %p39
      %p269 = pneg %p36
      %p270 = scmp.lt.s32.totalorder %s18, 1
      %s271 = scalar_select %p270, %s18, 1
      %s272 = smul.addr %s271, 2
      %s273 = smul.addr %s272, 4
      %s274 = scalar_lea.vmem %s1, %s273
      %p275 = pneg %p65
      %p276 = pneg %p62
      %p277 = scmp.lt.s32.totalorder %s18, 1
      %s278 = scalar_select %p277, %s18, 1
      %s279 = smul.addr %s278, 2
      %s280 = smul.addr %s279, 4
      %s281 = scalar_lea.vmem %s2, %s280
      %p282 = pneg %p91
      %p283 = pneg %p88
      %p284 = pneg %p112
      %p285 = pneg %p109
      %p286 = pneg %p133
      %p287 = pneg %p130
      %p288 = pneg %p154
      %p289 = pneg %p151
      %p290 = pneg %p175
      %p291 = pneg %p172
      %p292 = pneg %p201
      %p293 = pneg %p198
      %p294 = scmp.lt.s32.totalorder %s18, 1
      %s295 = scalar_select %p294, %s18, 1
      %s296 = smul.addr %s295, 2
      %s297 = smul.addr %s296, 8
      %s298 = scalar_lea.vmem %s7, %s297
      %p299 = scmp.lt.s32.totalorder %s18, 1
      %s300 = scalar_select %p299, %s18, 1
      %s301 = smul.addr %s300, 2
      %s302 = smul.addr %s301, 4
      %s303 = scalar_lea.vmem %s0, %s302
      %p304 = scmp.lt.s32.totalorder %s18, 1
      %s305 = scalar_select %p304, %s18, 1
      %s306 = smul.addr %s305, 2
      %s307 = smul.addr %s306, 4
      %s308 = scalar_lea.vmem %s1, %s307
      %p309 = scmp.lt.s32.totalorder %s18, 1
      %s310 = scalar_select %p309, %s18, 1
      %s311 = smul.addr %s310, 2
      %s312 = smul.addr %s311, 4
      %s313 = scalar_lea.vmem %s2, %s312
      %p314 = scmp.lt.s32.totalorder %s18, 1
      %s315 = scalar_select %p314, %s18, 1
      %s316 = smul.addr %s315, 2
      %s317 = smul.addr %s316, 8
      %s318 = scalar_lea.vmem %s7, %s317
      %v322 = vlaneseq
      %v323 = vand.u32 %v322, 127
      %vm324 = vcmp.lt.s32.totalorder %v323, 0
      %v325 = vsub.s32 0, %v323
      %v326 = vsel %vm324, %v325, %v323
      %v327 = vshrl.u32 %v326, 3
      %v328 = vand.u32 %v326, 7
      %v329 = vsub.s32 0, %v328
      %v330 = vsel %vm324, %v329, %v328
      %vm331 = vcmp.ne.s32.totalorder %v330, 0
      %vm332 = vcmp.lt.s32.totalorder %v330, 0
      %vm333 = vmand %vm332, %vm331
      %v334 = vadd.s32 %v330, 8
      %v335 = vsel %vm333, %v334, %v330
      %vm336 = vcmp.ge.s32.totalorder %v335, 1
      %vm337 = vcmp.le.s32.totalorder %v335, 6
      %v338 = vld [vmem:[%s303] sm:$0xf]
      %v339 = vld [vmem:[%s303 + $0x4] sm:$0xf]
      %v340 = vsel %vm336, 1, 0
      %vm341 = vcmp.eq.s32.totalorder %v340, 1
      %vm342 = vmpackc.low %vm341, %vm341
      %v343 = vsel %vm342, %v338, 0
      %v344 = vsel %vm342, %v339, 0
      %v345 = vsel %vm337, 1, 0
      %vm346 = vcmp.eq.s32.totalorder %v345, 1
      %vm347 = vmpackc.low %vm346, %vm346
      %v348 = vsel %vm347, 65537, 0
      %349 = vrot.lane.b32.xlu0 %v348, 2
      %v350 = vpop.permute.xlu0 %349
      %vm351 = vcmp.ne.s16.totalorder %v350, 0
      %v352 = vsel %vm351, %v338, 0
      %v353 = vsel %vm351, %v339, 0
      %v354 = vsel %vm342, 65537, 0
      %355 = vrot.lane.b32.xlu0 %v354, 8
      %v356 = vpop.permute.xlu0 %355
      %vm357 = vcmp.ne.s16.totalorder %v356, 0
      %v358 = vsel %vm357, %v338, 0
      %v359 = vsel %vm357, %v339, 0
      %360 = vrot.lane.b32.xlu0 %v348, 10
      %v361 = vpop.permute.xlu0 %360
      %vm362 = vcmp.ne.s16.totalorder %v361, 0
      %v363 = vsel %vm362, %v338, 0
      %v364 = vsel %vm362, %v339, 0
      %365 = vrot.lane.b32.xlu0 %v354, 16
      %v366 = vpop.permute.xlu0 %365
      %vm367 = vcmp.ne.s16.totalorder %v366, 0
      %v368 = vsel %vm367, %v338, 0
      %v369 = vsel %vm367, %v339, 0
      %370 = vrot.lane.b32.xlu0 %v348, 18
      %v371 = vpop.permute.xlu0 %370
      %vm372 = vcmp.ne.s16.totalorder %v371, 0
      %v373 = vsel %vm372, %v338, 0
      %v374 = vsel %vm372, %v339, 0
      %v377 = vunpack.c.l.b16 %v343
      %v378 = vunpack.c.l.b16 %v344
      %v379 = vpack.c.b16 %v378, %v377
      %v383 = vunpack.c.l.b16 %v338
      %v384 = vunpack.c.l.b16 %v339
      %v385 = vpack.c.b16 %v384, %v383
      %386 = vrot.lane.b32.xlu0 %v385, 127
      %v387 = vpop.permute.xlu0 %386
      %v391 = vunpack.c.l.b16 %v352
      %v392 = vunpack.c.l.b16 %v353
      %v393 = vpack.c.b16 %v392, %v391
      %394 = vrot.lane.b32.xlu0 %v393, 126
      %v395 = vpop.permute.xlu0 %394
      %v399 = vunpack.c.l.b16 %v358
      %v400 = vunpack.c.l.b16 %v359
      %v401 = vpack.c.b16 %v400, %v399
      %402 = vrot.lane.b32.xlu0 %v401, 120
      %v403 = vpop.permute.xlu0 %402
      %405 = vrot.lane.b32.xlu0 %v385, 119
      %v406 = vpop.permute.xlu0 %405
      %v410 = vunpack.c.l.b16 %v363
      %v411 = vunpack.c.l.b16 %v364
      %v412 = vpack.c.b16 %v411, %v410
      %413 = vrot.lane.b32.xlu0 %v412, 118
      %v414 = vpop.permute.xlu0 %413
      %v418 = vunpack.c.l.b16 %v368
      %v419 = vunpack.c.l.b16 %v369
      %v420 = vpack.c.b16 %v419, %v418
      %421 = vrot.lane.b32.xlu0 %v420, 112
      %v422 = vpop.permute.xlu0 %421
      %424 = vrot.lane.b32.xlu0 %v385, 111
      %v425 = vpop.permute.xlu0 %424
      %v429 = vunpack.c.l.b16 %v373
      %v430 = vunpack.c.l.b16 %v374
      %v431 = vpack.c.b16 %v430, %v429
      %432 = vrot.lane.b32.xlu0 %v431, 110
      %v433 = vpop.permute.xlu0 %432
      %v435 = vld [vmem:[%s3] sm:$0xff]
      %v436 = vld [vmem:[%s3 + $0x8] sm:$0xff]
      %v437 = vld [vmem:[%s5] sm:$0xff]
      %v438 = vld [vmem:[%s5 + $0x8] sm:$0xff]
      %440 = vset.pattern.permute.xlu0 0
      %441 = vperm.xlu0 %440, %v437
      %v442 = vpop.permute.xlu0 %441
      %445 = vset.pattern.permute.xlu0 0
      %446 = vperm.xlu0 %445, %v438
      %v447 = vpop.permute.xlu0 %446
      %v451 = vunpack.c.l.b16 %v435
      %v452 = vunpack.c.h.b16 %v435
      %v453 = vunpack.c.l.b16 %v436
      %v454 = vunpack.c.h.b16 %v436
      %v455 = vpack.c.b16 %v453, %v451
      %v456 = vpack.c.b16 %v454, %v452
      %vm458 = vcmask 130048
      %v460 = vsel %vm458, %v456, 0
      %462 = vmatprep.subr.bf16.mxu0 0
      %463 = vmatpush1.bf16.msra.mxu0 %v379
      %464 = vmatprep.subr.bf16.mxu0 0
      %465 = vmatpush1.bf16.msra.mxu0 %v387
      %466 = vmatprep.subr.bf16.mxu0 0
      %467 = vmatpush1.bf16.msra.mxu0 %v395
      %468 = vmatprep.subr.bf16.mxu0 0
      %469 = vmatpush1.bf16.msra.mxu0 %v403
      %470 = vmatprep.subr.bf16.mxu0 0
      %471 = vmatpush1.bf16.msra.mxu0 %v406
      %472 = vmatprep.subr.bf16.mxu0 0
      %473 = vmatpush1.bf16.msra.mxu0 %v414
      %474 = vmatprep.subr.bf16.mxu0 0
      %475 = vmatpush1.bf16.msra.mxu0 %v422
      %476 = vmatprep.subr.bf16.mxu0 0
      %477 = vmatpush1.bf16.msra.mxu0 %v425
      %478 = vmatprep.subr.bf16.mxu0 0
      %479 = vmatpush1.bf16.msra.mxu0 %v433
      %480 = vmatprep.subr.bf16.mxu0 0
      %481 = vmatpush1.bf16.msra.mxu0 0
      %482 = vmatprep.subr.bf16.mxu0 0
      %483 = vmatpush1.bf16.msra.mxu0 0
      %484 = vmatprep.subr.bf16.mxu0 0
      %485 = vmatpush1.bf16.msra.mxu0 0
      %486 = vmatprep.subr.bf16.mxu0 0
      %487 = vmatpush1.bf16.msra.mxu0 0
      %488 = vmatprep.subr.bf16.mxu0 0
      %489 = vmatpush1.bf16.msra.mxu0 0
      %490 = vmatprep.subr.bf16.mxu0 0
      %491 = vmatpush1.bf16.msra.mxu0 0
      %492 = vmatprep.subr.bf16.mxu0 0
      %493 = vmatpush1.bf16.msra.mxu0 0
      %494 = vmatprep.mubr.bf16.mxu0 %v460
      %495 = vmatmul.mubr.bf16.gmra.mrb[0].mxu0 %v455
      %v496 = vpop.f32.mrb[0].mxu0
      %v497 = vadd.f32 %v442, %v496
      %v498 = vpop.f32.mrb[0].mxu0
      %v499 = vpop.f32.mrb[0].mxu0
      %v500 = vadd.f32 %v447, %v499
      %v501 = vpop.f32.mrb[0].mxu0
      %502 = vdwg.mxu0
      %v503 = vsub.f32 0.0, %v497
      %v504 = vsub.f32 0.0, %v500
      %v505 = vmul.f32 %v503, 1.442695
      %v506 = vpow.pop %v505
      %v507 = vmul.f32 %v504, 1.442695
      %v508 = vpow.pop %v507
      %v509 = vadd.f32 %v506, 1.0
      %v510 = vadd.f32 %v508, 1.0
      %v511 = vrcp.pop %v509
      %v512 = vrcp.pop %v510
      %v513 = vld [vmem:[%s4] sm:$0xff]
      %v514 = vld [vmem:[%s4 + $0x8] sm:$0xff]
      %v515 = vld [vmem:[%s6] sm:$0xff]
      %v516 = vld [vmem:[%s6 + $0x8] sm:$0xff]
      %518 = vset.pattern.permute.xlu0 0
      %519 = vperm.xlu0 %518, %v515
      %v520 = vpop.permute.xlu0 %519
      %523 = vset.pattern.permute.xlu0 0
      %524 = vperm.xlu0 %523, %v516
      %v525 = vpop.permute.xlu0 %524
      %v529 = vunpack.c.l.b16 %v513
      %v530 = vunpack.c.h.b16 %v513
      %v531 = vunpack.c.l.b16 %v514
      %v532 = vunpack.c.h.b16 %v514
      %v533 = vpack.c.b16 %v531, %v529
      %v534 = vpack.c.b16 %v532, %v530
      %v537 = vsel %vm458, %v534, 0
      %539 = vmatprep.subr.bf16.mxu0 0
      %540 = vmatpush1.bf16.msra.mxu0 %v379
      %541 = vmatprep.subr.bf16.mxu0 0
      %542 = vmatpush1.bf16.msra.mxu0 %v387
      %543 = vmatprep.subr.bf16.mxu0 0
      %544 = vmatpush1.bf16.msra.mxu0 %v395
      %545 = vmatprep.subr.bf16.mxu0 0
      %546 = vmatpush1.bf16.msra.mxu0 %v403
      %547 = vmatprep.subr.bf16.mxu0 0
      %548 = vmatpush1.bf16.msra.mxu0 %v406
      %549 = vmatprep.subr.bf16.mxu0 0
      %550 = vmatpush1.bf16.msra.mxu0 %v414
      %551 = vmatprep.subr.bf16.mxu0 0
      %552 = vmatpush1.bf16.msra.mxu0 %v422
      %553 = vmatprep.subr.bf16.mxu0 0
      %554 = vmatpush1.bf16.msra.mxu0 %v425
      %555 = vmatprep.subr.bf16.mxu0 0
      %556 = vmatpush1.bf16.msra.mxu0 %v433
      %557 = vmatprep.subr.bf16.mxu0 0
      %558 = vmatpush1.bf16.msra.mxu0 0
      %559 = vmatprep.subr.bf16.mxu0 0
      %560 = vmatpush1.bf16.msra.mxu0 0
      %561 = vmatprep.subr.bf16.mxu0 0
      %562 = vmatpush1.bf16.msra.mxu0 0
      %563 = vmatprep.subr.bf16.mxu0 0
      %564 = vmatpush1.bf16.msra.mxu0 0
      %565 = vmatprep.subr.bf16.mxu0 0
      %566 = vmatpush1.bf16.msra.mxu0 0
      %567 = vmatprep.subr.bf16.mxu0 0
      %568 = vmatpush1.bf16.msra.mxu0 0
      %569 = vmatprep.subr.bf16.mxu0 0
      %570 = vmatpush1.bf16.msra.mxu0 0
      %571 = vmatprep.mubr.bf16.mxu0 %v537
      %572 = vmatmul.mubr.bf16.gmra.mrb[0].mxu0 %v533
      %v573 = vpop.f32.mrb[0].mxu0
      %v574 = vadd.f32 %v520, %v573
      %v575 = vpop.f32.mrb[0].mxu0
      %v576 = vpop.f32.mrb[0].mxu0
      %v577 = vadd.f32 %v525, %v576
      %v578 = vpop.f32.mrb[0].mxu0
      %579 = vdwg.mxu0
      %v580 = vsub.f32 0.0, %v574
      %v581 = vsub.f32 0.0, %v577
      %v582 = vmul.f32 %v580, 1.442695
      %v583 = vpow.pop %v582
      %v584 = vmul.f32 %v581, 1.442695
      %v585 = vpow.pop %v584
      %v586 = vadd.f32 %v583, 1.0
      %v587 = vadd.f32 %v585, 1.0
      %v588 = vrcp.pop %v586
      %v589 = vrcp.pop %v587
      %v590 = vld [vmem:[%s308] sm:$0xf]
      %v591 = vld [vmem:[%s308 + $0x4] sm:$0xf]
      %v592 = vunpack.c.l.bf16 %v590
      %v593 = vunpack.c.l.bf16 %v591
      %v594 = vld [vmem:[%s313] sm:$0xf]
      %v595 = vld [vmem:[%s313 + $0x4] sm:$0xf]
      %v596 = vunpack.c.l.bf16 %v594
      %v597 = vunpack.c.l.bf16 %v595
      %600 = vrot.lane.b32.xlu0 %v511, 9
      %v601 = vpop.permute.xlu0 %600
      %602 = vrot.lane.b32.xlu0 %v512, 9
      %v603 = vpop.permute.xlu0 %602
      %v606 = vmul.f32 %v592, %v601
      %v607 = vmul.f32 %v593, %v603
      %610 = vrot.lane.b32.xlu0 %v588, 9
      %v611 = vpop.permute.xlu0 %610
      %612 = vrot.lane.b32.xlu0 %v589, 9
      %v613 = vpop.permute.xlu0 %612
      %v616 = vmul.f32 %v596, %v611
      %v617 = vmul.f32 %v597, %v613
      %v618 = vadd.f32 %v606, %v616
      %v619 = vadd.f32 %v607, %v617
      %622 = vrot.lane.b32.xlu0 %v618, 119
      %v623 = vpop.permute.xlu0 %622
      %624 = vrot.lane.b32.xlu0 %v619, 119
      %v625 = vpop.permute.xlu0 %624
      %vm628 = vcmask 523264
      %629 = vst.msk [vmem:[%s318] sm:$0xff] %vm628, %v623
      %630 = vst.msk [vmem:[%s318 + $0x8] sm:$0xff] %vm628, %v625
      %p631 = scmp.lt.s32.totalorder %s18, 1
      %s632 = scalar_select %p631, %s18, 1
      %s633 = smul.addr %s632, 2
      %s634 = smul.addr %s633, 8
      %s635 = scalar_lea.vmem %s7, %s634
      // Predicated region
      $region49: #{fuseblock_forward.23} parent=47 // pred_check
        %p636 = pneg %p198
      $region50: #{fuseblock_forward.23} parent=47 // pred_check_branch
        %638 = sbr.rel (%p636) target = $region52
      $region51: #{fuseblock_forward.23} parent=47 // pred_region
        _
      $region52: #{fuseblock_forward.23} parent=47 // pred_fallthru
        _
    $region48: #{fuseblock_forward.23} parent=5 // pred_fallthru
      _
    %p639 = scmp.le.s32.totalorder 2, %s13
    // Predicated region
    $region53: #{fuseblock_forward.23} parent=5 // pred_check
      %p640 = pneg %p639
    $region54: #{fuseblock_forward.23} parent=5 // pred_check_branch
      %642 = sbr.rel (%p640) target = $region56
    $region55: #{fuseblock_forward.23} parent=5 // pred_region
      %s643 = ssub.s32 %s13, 2
      // Predicated region
      $region57: #{fuseblock_forward.23} parent=55 // pred_check
        %p644 = pneg %p204
      $region58: #{fuseblock_forward.23} parent=55 // pred_check_branch
        %646 = sbr.rel (%p644) target = $region60
      $region59: #{fuseblock_forward.23} parent=55 // pred_region
        %p647 = scmp.lt.s32.totalorder %s19, 1
        %s648 = scalar_select %p647, %s19, 1
        %s649 = smul.addr %s648, 2
        %s650 = smul.addr %s649, 8
        %s651 = scalar_lea.vmem %s7, %s650
      $region60: #{fuseblock_forward.23} parent=55 // pred_fallthru
        _
    $region56: #{fuseblock_forward.23} parent=5 // pred_fallthru
      _
  $region6: #{fuseblock_forward.23} parent=0 // loop_footer
    %s17 = sadd.s32 1, %s13
  $region7: #{fuseblock_forward.23} parent=0 // loop_footer_branch
    %12 = sbr.rel target = $region3
  $region8: #{fuseblock_forward.23} parent=0 // loop_exit
    _

// kernel: fuseblock_forward.22
$region0: #{fuseblock_forward.22}
  #allocation0 [shape = 'u32[]', space=smem, size = 0x4, offset = 0x4, fixed_abs, tag = 'smem constant byte address 0x4 - core index']
  #allocation1 [shape = 'u32[144,128]{1,0:T(1,128)}', space=vmem, size = 0x12000, scoped, tag = 'internal scratch']
  %s0 = inlined_call_operand.vmem [shape: bf16[2,16,128], index: 0, kind: input, shape index: {}]
  %s1 = inlined_call_operand.vmem [shape: bf16[2,16,128], index: 1, kind: input, shape index: {}]
  %s2 = inlined_call_operand.vmem [shape: bf16[16,144], index: 2, kind: input, shape index: {}]
  %s3 = inlined_call_operand.vmem [shape: bf16[16,144], index: 3, kind: input, shape index: {}]
  %s4 = inlined_call_operand.vmem [shape: f32[16,1], index: 4, kind: input, shape index: {}]
  %s5 = inlined_call_operand.vmem [shape: bf16[2,16,128], index: 5, kind: output, shape index: {}]
  %s6 = sld [smem:[#allocation0]]
  $region53: #{fuseblock_forward.22} parent=0
    _
  %s8 = ssub.s32 1, %s6
  %s9 = scalar_select 0, %s8, %s6
  loop: start=0, step=1, limit=4
  $region2: #{fuseblock_forward.22} parent=0 // loop_pre_header
    _
  $region3: #{fuseblock_forward.22} parent=0 // loop_header
    %s11 = sphi 0, %s15
    %p12 = scmp.ge.s32.totalorder %s11, 4
    %s21 = sphi 0, %s23
    %s24 = sphi 0, %s21
    %s25 = sphi 0, %s24
    %s41 = sphi 0, %s25
    %s47 = sphi 0, %s49
    %s50 = sphi 0, %s47
    %s51 = sphi 0, %s50
    %s67 = sphi 0, %s51
    %s71 = sphi 0, %s71
    %s73 = sphi 0, %s71
    %s74 = sphi 0, %s73
    %s88 = sphi 0, %s74
    %s92 = sphi 0, %s92
    %s94 = sphi 0, %s92
    %s95 = sphi 0, %s94
    %s109 = sphi 0, %s95
    %s113 = sphi 0, %s113
    %s115 = sphi 0, %s113
    %s116 = sphi 0, %s115
    %s130 = sphi 0, %s116
    %s136 = sphi 0, %s138
    %s139 = sphi 0, %s136
    %s140 = sphi 0, %s139
    %s156 = sphi 0, %s140
  $region4: #{fuseblock_forward.22} parent=0 // loop_header_branch
    %14 = sbr.rel (%p12) target = $region8
  $region5: #{fuseblock_forward.22} parent=0 // loop_body
    %s16 = ssub.s32 %s11, 1
    %s17 = ssub.s32 %s11, 2
    %s18 = sadd.s32 %s11, 1
    %s19 = ssub.s32 %s11, %s18
    %p20 = scmp.eq.s32.totalorder %s19, 0
    %s22 = sadd.s32 %s21, 1
    %s23 = scalar_select %p20, %s21, %s22
    %p26 = pneg %p20
    %p27 = scmp.eq.s32.totalorder %s11, 1
    %p28 = por %p26, %p27
    %p29 = scmp.ne.s32.totalorder %s21, %s24
    %p30 = scmp.eq.s32.totalorder %s11, 0
    %p31 = por %p29, %p30
    %p32 = scmp.ne.s32.totalorder %s21, %s24
    %p33 = scmp.eq.s32.totalorder %s16, 1
    %p34 = por %p32, %p33
    %p35 = scmp.ne.s32.totalorder %s24, %s25
    %p36 = scmp.eq.s32.totalorder %s16, 0
    %p37 = por %p35, %p36
    %p38 = scmp.ne.s32.totalorder %s24, %s25
    %p39 = scmp.eq.s32.totalorder %s17, 1
    %p40 = por %p38, %p39
    %p42 = scmp.ne.s32.totalorder %s25, %s41
    %p43 = scmp.eq.s32.totalorder %s17, 0
    %p44 = por %p42, %p43
    %s45 = ssub.s32 %s11, %s18
    %p46 = scmp.eq.s32.totalorder %s45, 0
    %s48 = sadd.s32 %s47, 1
    %s49 = scalar_select %p46, %s47, %s48
    %p52 = pneg %p46
    %p53 = scmp.eq.s32.totalorder %s11, 1
    %p54 = por %p52, %p53
    %p55 = scmp.ne.s32.totalorder %s47, %s50
    %p56 = scmp.eq.s32.totalorder %s11, 0
    %p57 = por %p55, %p56
    %p58 = scmp.ne.s32.totalorder %s47, %s50
    %p59 = scmp.eq.s32.totalorder %s16, 1
    %p60 = por %p58, %p59
    %p61 = scmp.ne.s32.totalorder %s50, %s51
    %p62 = scmp.eq.s32.totalorder %s16, 0
    %p63 = por %p61, %p62
    %p64 = scmp.ne.s32.totalorder %s50, %s51
    %p65 = scmp.eq.s32.totalorder %s17, 1
    %p66 = por %p64, %p65
    %p68 = scmp.ne.s32.totalorder %s51, %s67
    %p69 = scmp.eq.s32.totalorder %s17, 0
    %p70 = por %p68, %p69
    %s72 = sadd.s32 %s71, 1
    %p75 = scmp.eq.s32.totalorder %s11, 1
    %p76 = scmp.ne.s32.totalorder %s71, %s73
    %p77 = scmp.eq.s32.totalorder %s11, 0
    %p78 = por %p76, %p77
    %p79 = scmp.ne.s32.totalorder %s71, %s73
    %p80 = scmp.eq.s32.totalorder %s16, 1
    %p81 = por %p79, %p80
    %p82 = scmp.ne.s32.totalorder %s73, %s74
    %p83 = scmp.eq.s32.totalorder %s16, 0
    %p84 = por %p82, %p83
    %p85 = scmp.ne.s32.totalorder %s73, %s74
    %p86 = scmp.eq.s32.totalorder %s17, 1
    %p87 = por %p85, %p86
    %p89 = scmp.ne.s32.totalorder %s74, %s88
    %p90 = scmp.eq.s32.totalorder %s17, 0
    %p91 = por %p89, %p90
    %s93 = sadd.s32 %s92, 1
    %p96 = scmp.eq.s32.totalorder %s11, 1
    %p97 = scmp.ne.s32.totalorder %s92, %s94
    %p98 = scmp.eq.s32.totalorder %s11, 0
    %p99 = por %p97, %p98
    %p100 = scmp.ne.s32.totalorder %s92, %s94
    %p101 = scmp.eq.s32.totalorder %s16, 1
    %p102 = por %p100, %p101
    %p103 = scmp.ne.s32.totalorder %s94, %s95
    %p104 = scmp.eq.s32.totalorder %s16, 0
    %p105 = por %p103, %p104
    %p106 = scmp.ne.s32.totalorder %s94, %s95
    %p107 = scmp.eq.s32.totalorder %s17, 1
    %p108 = por %p106, %p107
    %p110 = scmp.ne.s32.totalorder %s95, %s109
    %p111 = scmp.eq.s32.totalorder %s17, 0
    %p112 = por %p110, %p111
    %s114 = sadd.s32 %s113, 1
    %p117 = scmp.eq.s32.totalorder %s11, 1
    %p118 = scmp.ne.s32.totalorder %s113, %s115
    %p119 = scmp.eq.s32.totalorder %s11, 0
    %p120 = por %p118, %p119
    %p121 = scmp.ne.s32.totalorder %s113, %s115
    %p122 = scmp.eq.s32.totalorder %s16, 1
    %p123 = por %p121, %p122
    %p124 = scmp.ne.s32.totalorder %s115, %s116
    %p125 = scmp.eq.s32.totalorder %s16, 0
    %p126 = por %p124, %p125
    %p127 = scmp.ne.s32.totalorder %s115, %s116
    %p128 = scmp.eq.s32.totalorder %s17, 1
    %p129 = por %p127, %p128
    %p131 = scmp.ne.s32.totalorder %s116, %s130
    %p132 = scmp.eq.s32.totalorder %s17, 0
    %p133 = por %p131, %p132
    %s134 = ssub.s32 %s11, %s18
    %p135 = scmp.eq.s32.totalorder %s134, 0
    %s137 = sadd.s32 %s136, 1
    %s138 = scalar_select %p135, %s136, %s137
    %p141 = pneg %p135
    %p142 = scmp.eq.s32.totalorder %s11, 1
    %p143 = por %p141, %p142
    %p144 = scmp.ne.s32.totalorder %s136, %s139
    %p145 = scmp.eq.s32.totalorder %s11, 0
    %p146 = por %p144, %p145
    %p147 = scmp.ne.s32.totalorder %s136, %s139
    %p148 = scmp.eq.s32.totalorder %s16, 1
    %p149 = por %p147, %p148
    %p150 = scmp.ne.s32.totalorder %s139, %s140
    %p151 = scmp.eq.s32.totalorder %s16, 0
    %p152 = por %p150, %p151
    %p153 = scmp.ne.s32.totalorder %s139, %s140
    %p154 = scmp.eq.s32.totalorder %s17, 1
    %p155 = por %p153, %p154
    %p157 = scmp.ne.s32.totalorder %s140, %s156
    %p158 = scmp.eq.s32.totalorder %s17, 0
    %p159 = por %p157, %p158
    %p160 = scmp.le.s32.totalorder 1, %s11
    %p161 = scmp.lt.s32.totalorder %s11, 3
    %p162 = pnand %p160, %p161
    %p163 = pneg %p162
    // Predicated region
    $region9: #{fuseblock_forward.22} parent=5 // pred_check
      _
    $region10: #{fuseblock_forward.22} parent=5 // pred_check_branch
      %165 = sbr.rel (%p162) target = $region12
    $region11: #{fuseblock_forward.22} parent=5 // pred_region
      %s166 = ssub.s32 %s11, 1
      // Predicated region
      $region13: #{fuseblock_forward.22} parent=11 // pred_check
        %p167 = pneg %p84
      $region14: #{fuseblock_forward.22} parent=11 // pred_check_branch
        %169 = sbr.rel (%p167) target = $region16
      $region15: #{fuseblock_forward.22} parent=11 // pred_region
        _
      $region16: #{fuseblock_forward.22} parent=11 // pred_fallthru
        _
      // Predicated region
      $region17: #{fuseblock_forward.22} parent=11 // pred_check
        %p170 = pneg %p105
      $region18: #{fuseblock_forward.22} parent=11 // pred_check_branch
        %172 = sbr.rel (%p170) target = $region20
      $region19: #{fuseblock_forward.22} parent=11 // pred_region
        _
      $region20: #{fuseblock_forward.22} parent=11 // pred_fallthru
        _
      // Predicated region
      $region21: #{fuseblock_forward.22} parent=11 // pred_check
        %p173 = pneg %p126
      $region22: #{fuseblock_forward.22} parent=11 // pred_check_branch
        %175 = sbr.rel (%p173) target = $region24
      $region23: #{fuseblock_forward.22} parent=11 // pred_region
        _
      $region24: #{fuseblock_forward.22} parent=11 // pred_fallthru
        _
    $region12: #{fuseblock_forward.22} parent=5 // pred_fallthru
      _
    %p176 = scmp.lt.s32.totalorder %s11, 2
    // Predicated region
    $region25: #{fuseblock_forward.22} parent=5 // pred_check
      %p177 = pneg %p176
    $region26: #{fuseblock_forward.22} parent=5 // pred_check_branch
      %179 = sbr.rel (%p177) target = $region28
    $region27: #{fuseblock_forward.22} parent=5 // pred_region
      // Predicated region
      $region29: #{fuseblock_forward.22} parent=27 // pred_check
        %p180 = pneg %p31
      $region30: #{fuseblock_forward.22} parent=27 // pred_check_branch
        %182 = sbr.rel (%p180) target = $region32
      $region31: #{fuseblock_forward.22} parent=27 // pred_region
        %p183 = scmp.lt.s32.totalorder %s11, 1
        %s184 = scalar_select %p183, %s11, 1
        %s185 = smul.addr %s184, 2
        %s186 = smul.addr %s185, 4
        %s187 = scalar_lea.vmem %s0, %s186
      $region32: #{fuseblock_forward.22} parent=27 // pred_fallthru
        _
      // Predicated region
      $region33: #{fuseblock_forward.22} parent=27 // pred_check
        %p188 = pneg %p57
      $region34: #{fuseblock_forward.22} parent=27 // pred_check_branch
        %190 = sbr.rel (%p188) target = $region36
      $region35: #{fuseblock_forward.22} parent=27 // pred_region
        %p191 = scmp.lt.s32.totalorder %s11, 1
        %s192 = scalar_select %p191, %s11, 1
        %s193 = smul.addr %s192, 2
        %s194 = smul.addr %s193, 4
        %s195 = scalar_lea.vmem %s1, %s194
      $region36: #{fuseblock_forward.22} parent=27 // pred_fallthru
        _
    $region28: #{fuseblock_forward.22} parent=5 // pred_fallthru
      _
    %p196 = scmp.le.s32.totalorder 1, %s11
    %p197 = scmp.lt.s32.totalorder %s11, 3
    %p198 = pnand %p196, %p197
    %p199 = pneg %p198
    // Predicated region
    $region37: #{fuseblock_forward.22} parent=5 // pred_check
      _
    $region38: #{fuseblock_forward.22} parent=5 // pred_check_branch
      %201 = sbr.rel (%p198) target = $region40
    $region39: #{fuseblock_forward.22} parent=5 // pred_region
      %s202 = ssub.s32 %s11, 1
      %p203 = scmp.lt.s32.totalorder %s16, 1
      %s204 = scalar_select %p203, %s16, 1
      %s205 = smul.addr %s204, 2
      %s206 = smul.addr %s205, 4
      %s207 = scalar_lea.vmem %s0, %s206
      %p208 = pneg %p37
      %p209 = pneg %p34
      %p210 = scmp.lt.s32.totalorder %s16, 1
      %s211 = scalar_select %p210, %s16, 1
      %s212 = smul.addr %s211, 2
      %s213 = smul.addr %s212, 4
      %s214 = scalar_lea.vmem %s1, %s213
      %p215 = pneg %p63
      %p216 = pneg %p60
      %p217 = pneg %p84
      %p218 = pneg %p81
      %p219 = pneg %p105
      %p220 = pneg %p102
      %p221 = pneg %p126
      %p222 = pneg %p123
      %p223 = pneg %p152
      %p224 = pneg %p149
      %p225 = scmp.lt.s32.totalorder %s16, 1
      %s226 = scalar_select %p225, %s16, 1
      %s227 = smul.addr %s226, 2
      %s228 = smul.addr %s227, 4
      %s229 = scalar_lea.vmem %s5, %s228
      %p230 = scmp.lt.s32.totalorder %s16, 1
      %s231 = scalar_select %p230, %s16, 1
      %s232 = smul.addr %s231, 2
      %s233 = smul.addr %s232, 4
      %s234 = scalar_lea.vmem %s0, %s233
      %p235 = scmp.lt.s32.totalorder %s16, 1
      %s236 = scalar_select %p235, %s16, 1
      %s237 = smul.addr %s236, 2
      %s238 = smul.addr %s237, 4
      %s239 = scalar_lea.vmem %s1, %s238
      %p240 = scmp.lt.s32.totalorder %s16, 1
      %s241 = scalar_select %p240, %s16, 1
      %s242 = smul.addr %s241, 2
      %s243 = smul.addr %s242, 4
      %s244 = scalar_lea.vmem %s5, %s243
      %v248 = vld [vmem:[%s2] sm:$0xff]
      %v249 = vld [vmem:[%s2 + $0x8] sm:$0xff]
      %v250 = vlaneseq
      %v251 = vand.u32 %v250, 127
      %vm252 = vcmp.lt.s32.totalorder %v251, 0
      %v253 = vsub.s32 0, %v251
      %v254 = vsel %vm252, %v253, %v251
      %v255 = vshrl.u32 %v254, 3
      %v256 = vand.u32 %v254, 7
      %v257 = vsub.s32 0, %v256
      %v258 = vsel %vm252, %v257, %v256
      %vm259 = vcmp.ne.s32.totalorder %v258, 0
      %vm260 = vcmp.lt.s32.totalorder %v258, 0
      %vm261 = vmand %vm260, %vm259
      %v262 = vadd.s32 %v258, 8
      %v263 = vsel %vm261, %v262, %v258
      %vm264 = vcmp.ge.s32.totalorder %v263, 1
      %vm265 = vcmp.le.s32.totalorder %v263, 6
      %v266 = vld [vmem:[%s234] sm:$0xf]
      %v267 = vld [vmem:[%s234 + $0x4] sm:$0xf]
      %v268 = vsel %vm264, 1, 0
      %vm269 = vcmp.eq.s32.totalorder %v268, 1
      %vm270 = vmpackc.low %vm269, %vm269
      %v271 = vsel %vm270, %v266, 0
      %v272 = vsel %vm270, %v267, 0
      %v273 = vsel %vm265, 1, 0
      %vm274 = vcmp.eq.s32.totalorder %v273, 1
      %vm275 = vmpackc.low %vm274, %vm274
      %v276 = vsel %vm275, 65537, 0
      %277 = vrot.lane.b32.xlu0 %v276, 2
      %v278 = vpop.permute.xlu0 %277
      %vm279 = vcmp.ne.s16.totalorder %v278, 0
      %v280 = vsel %vm279, %v266, 0
      %v281 = vsel %vm279, %v267, 0
      %v282 = vsel %vm270, 65537, 0
      %283 = vrot.lane.b32.xlu0 %v282, 8
      %v284 = vpop.permute.xlu0 %283
      %vm285 = vcmp.ne.s16.totalorder %v284, 0
      %v286 = vsel %vm285, %v266, 0
      %v287 = vsel %vm285, %v267, 0
      %288 = vrot.lane.b32.xlu0 %v276, 10
      %v289 = vpop.permute.xlu0 %288
      %vm290 = vcmp.ne.s16.totalorder %v289, 0
      %v291 = vsel %vm290, %v266, 0
      %v292 = vsel %vm290, %v267, 0
      %293 = vrot.lane.b32.xlu0 %v282, 16
      %v294 = vpop.permute.xlu0 %293
      %vm295 = vcmp.ne.s16.totalorder %v294, 0
      %v296 = vsel %vm295, %v266, 0
      %v297 = vsel %vm295, %v267, 0
      %298 = vrot.lane.b32.xlu0 %v276, 18
      %v299 = vpop.permute.xlu0 %298
      %vm300 = vcmp.ne.s16.totalorder %v299, 0
      %v301 = vsel %vm300, %v266, 0
      %v302 = vsel %vm300, %v267, 0
      %v305 = vunpack.c.l.b16 %v271
      %v306 = vunpack.c.l.b16 %v272
      %v307 = vpack.c.b16 %v306, %v305
      %v311 = vunpack.c.l.b16 %v266
      %v312 = vunpack.c.l.b16 %v267
      %v313 = vpack.c.b16 %v312, %v311
      %314 = vrot.lane.b32.xlu0 %v313, 127
      %v315 = vpop.permute.xlu0 %314
      %v319 = vunpack.c.l.b16 %v280
      %v320 = vunpack.c.l.b16 %v281
      %v321 = vpack.c.b16 %v320, %v319
      %322 = vrot.lane.b32.xlu0 %v321, 126
      %v323 = vpop.permute.xlu0 %322
      %v327 = vunpack.c.l.b16 %v286
      %v328 = vunpack.c.l.b16 %v287
      %v329 = vpack.c.b16 %v328, %v327
      %330 = vrot.lane.b32.xlu0 %v329, 120
      %v331 = vpop.permute.xlu0 %330
      %333 = vrot.lane.b32.xlu0 %v313, 119
      %v334 = vpop.permute.xlu0 %333
      %v338 = vunpack.c.l.b16 %v291
      %v339 = vunpack.c.l.b16 %v292
      %v340 = vpack.c.b16 %v339, %v338
      %341 = vrot.lane.b32.xlu0 %v340, 118
      %v342 = vpop.permute.xlu0 %341
      %v346 = vunpack.c.l.b16 %v296
      %v347 = vunpack.c.l.b16 %v297
      %v348 = vpack.c.b16 %v347, %v346
      %349 = vrot.lane.b32.xlu0 %v348, 112
      %v350 = vpop.permute.xlu0 %349
      %352 = vrot.lane.b32.xlu0 %v313, 111
      %v353 = vpop.permute.xlu0 %352
      %v357 = vunpack.c.l.b16 %v301
      %v358 = vunpack.c.l.b16 %v302
      %v359 = vpack.c.b16 %v358, %v357
      %360 = vrot.lane.b32.xlu0 %v359, 110
      %v361 = vpop.permute.xlu0 %360
      %v363 = vld [vmem:[%s3] sm:$0xff]
      %v364 = vld [vmem:[%s3 + $0x8] sm:$0xff]
      %v365 = vld [vmem:[%s239] sm:$0xf]
      %v366 = vld [vmem:[%s239 + $0x4] sm:$0xf]
      %v367 = vsel %vm270, %v365, 0
      %v368 = vsel %vm270, %v366, 0
      %v369 = vsel %vm279, %v365, 0
      %v370 = vsel %vm279, %v366, 0
      %v371 = vsel %vm285, %v365, 0
      %v372 = vsel %vm285, %v366, 0
      %v373 = vsel %vm290, %v365, 0
      %v374 = vsel %vm290, %v366, 0
      %v375 = vsel %vm295, %v365, 0
      %v376 = vsel %vm295, %v366, 0
      %v377 = vsel %vm300, %v365, 0
      %v378 = vsel %vm300, %v366, 0
      %v381 = vunpack.c.l.b16 %v367
      %v382 = vunpack.c.l.b16 %v368
      %v383 = vpack.c.b16 %v382, %v381
      %v387 = vunpack.c.l.b16 %v365
      %v388 = vunpack.c.l.b16 %v366
      %v389 = vpack.c.b16 %v388, %v387
      %390 = vrot.lane.b32.xlu0 %v389, 127
      %v391 = vpop.permute.xlu0 %390
      %v395 = vunpack.c.l.b16 %v369
      %v396 = vunpack.c.l.b16 %v370
      %v397 = vpack.c.b16 %v396, %v395
      %398 = vrot.lane.b32.xlu0 %v397, 126
      %v399 = vpop.permute.xlu0 %398
      %v403 = vunpack.c.l.b16 %v371
      %v404 = vunpack.c.l.b16 %v372
      %v405 = vpack.c.b16 %v404, %v403
      %406 = vrot.lane.b32.xlu0 %v405, 120
      %v407 = vpop.permute.xlu0 %406
      %409 = vrot.lane.b32.xlu0 %v389, 119
      %v410 = vpop.permute.xlu0 %409
      %v414 = vunpack.c.l.b16 %v373
      %v415 = vunpack.c.l.b16 %v374
      %v416 = vpack.c.b16 %v415, %v414
      %417 = vrot.lane.b32.xlu0 %v416, 118
      %v418 = vpop.permute.xlu0 %417
      %v422 = vunpack.c.l.b16 %v375
      %v423 = vunpack.c.l.b16 %v376
      %v424 = vpack.c.b16 %v423, %v422
      %425 = vrot.lane.b32.xlu0 %v424, 112
      %v426 = vpop.permute.xlu0 %425
      %428 = vrot.lane.b32.xlu0 %v389, 111
      %v429 = vpop.permute.xlu0 %428
      %v433 = vunpack.c.l.b16 %v377
      %v434 = vunpack.c.l.b16 %v378
      %v435 = vpack.c.b16 %v434, %v433
      %436 = vrot.lane.b32.xlu0 %v435, 110
      %v437 = vpop.permute.xlu0 %436
      %v441 = vunpack.c.l.b16 %v363
      %v442 = vunpack.c.h.b16 %v363
      %v443 = vunpack.c.l.b16 %v364
      %v444 = vunpack.c.h.b16 %v364
      %v445 = vpack.c.b16 %v443, %v441
      %v446 = vpack.c.b16 %v444, %v442
      %vm448 = vcmask 130048
      %v450 = vsel %vm448, %v446, 0
      %452 = vmatprep.subr.bf16.mxu0 0
      %453 = vmatpush1.bf16.msra.mxu0 %v383
      %454 = vmatprep.subr.bf16.mxu0 0
      %455 = vmatpush1.bf16.msra.mxu0 %v391
      %456 = vmatprep.subr.bf16.mxu0 0
      %457 = vmatpush1.bf16.msra.mxu0 %v399
      %458 = vmatprep.subr.bf16.mxu0 0
      %459 = vmatpush1.bf16.msra.mxu0 %v407
      %460 = vmatprep.subr.bf16.mxu0 0
      %461 = vmatpush1.bf16.msra.mxu0 %v410
      %462 = vmatprep.subr.bf16.mxu0 0
      %463 = vmatpush1.bf16.msra.mxu0 %v418
      %464 = vmatprep.subr.bf16.mxu0 0
      %465 = vmatpush1.bf16.msra.mxu0 %v426
      %466 = vmatprep.subr.bf16.mxu0 0
      %467 = vmatpush1.bf16.msra.mxu0 %v429
      %468 = vmatprep.subr.bf16.mxu0 0
      %469 = vmatpush1.bf16.msra.mxu0 %v437
      %470 = vmatprep.subr.bf16.mxu0 0
      %471 = vmatpush1.bf16.msra.mxu0 0
      %472 = vmatprep.subr.bf16.mxu0 0
      %473 = vmatpush1.bf16.msra.mxu0 0
      %474 = vmatprep.subr.bf16.mxu0 0
      %475 = vmatpush1.bf16.msra.mxu0 0
      %476 = vmatprep.subr.bf16.mxu0 0
      %477 = vmatpush1.bf16.msra.mxu0 0
      %478 = vmatprep.subr.bf16.mxu0 0
      %479 = vmatpush1.bf16.msra.mxu0 0
      %480 = vmatprep.subr.bf16.mxu0 0
      %481 = vmatpush1.bf16.msra.mxu0 0
      %482 = vmatprep.subr.bf16.mxu0 0
      %483 = vmatpush1.bf16.msra.mxu0 0
      %484 = vmatprep.mubr.bf16.mxu0 %v450
      %485 = vmatmul.mubr.bf16.gmra.mrb[0].mxu0 %v445
      %v486 = vpop.f32.mrb[0].mxu0
      %v487 = vadd.f32 0.0, %v486
      %v488 = vpop.f32.mrb[0].mxu0
      %v489 = vpop.f32.mrb[0].mxu0
      %v490 = vadd.f32 0.0, %v489
      %v491 = vpop.f32.mrb[0].mxu0
      %492 = vdwg.mxu0
      %v495 = vunpack.c.l.b16 %v248
      %v496 = vunpack.c.h.b16 %v248
      %v497 = vunpack.c.l.b16 %v249
      %v498 = vunpack.c.h.b16 %v249
      %v499 = vpack.c.b16 %v497, %v495
      %v500 = vpack.c.b16 %v498, %v496
      %v503 = vsel %vm448, %v500, 0
      %505 = vmatprep.subr.bf16.mxu0 0
      %506 = vmatpush1.bf16.msra.mxu0 %v307
      %507 = vmatprep.subr.bf16.mxu0 0
      %508 = vmatpush1.bf16.msra.mxu0 %v315
      %509 = vmatprep.subr.bf16.mxu0 0
      %510 = vmatpush1.bf16.msra.mxu0 %v323
      %511 = vmatprep.subr.bf16.mxu0 0
      %512 = vmatpush1.bf16.msra.mxu0 %v331
      %513 = vmatprep.subr.bf16.mxu0 0
      %514 = vmatpush1.bf16.msra.mxu0 %v334
      %515 = vmatprep.subr.bf16.mxu0 0
      %516 = vmatpush1.bf16.msra.mxu0 %v342
      %517 = vmatprep.subr.bf16.mxu0 0
      %518 = vmatpush1.bf16.msra.mxu0 %v350
      %519 = vmatprep.subr.bf16.mxu0 0
      %520 = vmatpush1.bf16.msra.mxu0 %v353
      %521 = vmatprep.subr.bf16.mxu0 0
      %522 = vmatpush1.bf16.msra.mxu0 %v361
      %523 = vmatprep.subr.bf16.mxu0 0
      %524 = vmatpush1.bf16.msra.mxu0 0
      %525 = vmatprep.subr.bf16.mxu0 0
      %526 = vmatpush1.bf16.msra.mxu0 0
      %527 = vmatprep.subr.bf16.mxu0 0
      %528 = vmatpush1.bf16.msra.mxu0 0
      %529 = vmatprep.subr.bf16.mxu0 0
      %530 = vmatpush1.bf16.msra.mxu0 0
      %531 = vmatprep.subr.bf16.mxu0 0
      %532 = vmatpush1.bf16.msra.mxu0 0
      %533 = vmatprep.subr.bf16.mxu0 0
      %534 = vmatpush1.bf16.msra.mxu0 0
      %535 = vmatprep.subr.bf16.mxu0 0
      %536 = vmatpush1.bf16.msra.mxu0 0
      %537 = vmatprep.mubr.bf16.mxu0 %v503
      %538 = vmatmul.mubr.bf16.gmra.mrb[0].mxu0 %v499
      %v539 = vpop.f32.mrb[0].mxu0
      %v540 = vadd.f32 %v487, %v539
      %v541 = vpop.f32.mrb[0].mxu0
      %v542 = vpop.f32.mrb[0].mxu0
      %v543 = vadd.f32 %v490, %v542
      %v544 = vpop.f32.mrb[0].mxu0
      %545 = vdwg.mxu0
      %v546 = vld [vmem:[%s4] sm:$0xff]
      %v547 = vld [vmem:[%s4 + $0x8] sm:$0xff]
      %549 = vset.pattern.permute.xlu0 0
      %550 = vperm.xlu0 %549, %v546
      %v551 = vpop.permute.xlu0 %550
      %554 = vset.pattern.permute.xlu0 0
      %555 = vperm.xlu0 %554, %v547
      %v556 = vpop.permute.xlu0 %555
      %v558 = vadd.f32 %v540, %v551
      %v559 = vadd.f32 %v543, %v556
      %v560 = vmax.f32 %v558, 0.0
      %v561 = vmax.f32 %v559, 0.0
      %v562 = vpack.c.bf16 %v561, %v560
      %564 = vrot.lane.b32.xlu0 %v562, 9
      %v565 = vpop.permute.xlu0 %564
      %vm566 = vcmask 72704
      %v569 = vsel %vm566, 0, %v565
      %vm570 = vcmask 596992
      %v571 = vsel %vm570, %v569, 0
      %v573 = vunpack.c.l.b16 %v571
      %v574 = vunpack.c.h.b16 %v571
      %v575 = vpack.c.b16 %v573, %v573
      %v576 = vpack.c.b16 %v574, %v574
      %579 = vst [vmem:[%s244] sm:$0xf] %v575
      %580 = vst [vmem:[%s244 + $0x4] sm:$0xf] %v576
      %p581 = scmp.lt.s32.totalorder %s16, 1
      %s582 = scalar_select %p581, %s16, 1
      %s583 = smul.addr %s582, 2
      %s584 = smul.addr %s583, 4
      %s585 = scalar_lea.vmem %s5, %s584
      // Predicated region
      $region41: #{fuseblock_forward.22} parent=39 // pred_check
        %p586 = pneg %p149
      $region42: #{fuseblock_forward.22} parent=39 // pred_check_branch
        %588 = sbr.rel (%p586) target = $region44
      $region43: #{fuseblock_forward.22} parent=39 // pred_region
        _
      $region44: #{fuseblock_forward.22} parent=39 // pred_fallthru
        _
    $region40: #{fuseblock_forward.22} parent=5 // pred_fallthru
      _
    %p589 = scmp.le.s32.totalorder 2, %s11
    // Predicated region
    $region45: #{fuseblock_forward.22} parent=5 // pred_check
      %p590 = pneg %p589
    $region46: #{fuseblock_forward.22} parent=5 // pred_check_branch
      %592 = sbr.rel (%p590) target = $region48
    $region47: #{fuseblock_forward.22} parent=5 // pred_region
      %s593 = ssub.s32 %s11, 2
      // Predicated region
      $region49: #{fuseblock_forward.22} parent=47 // pred_check
        %p594 = pneg %p155
      $region50: #{fuseblock_forward.22} parent=47 // pred_check_branch
        %596 = sbr.rel (%p594) target = $region52
      $region51: #{fuseblock_forward.22} parent=47 // pred_region
        %p597 = scmp.lt.s32.totalorder %s17, 1
        %s598 = scalar_select %p597, %s17, 1
        %s599 = smul.addr %s598, 2
        %s600 = smul.addr %s599, 4
        %s601 = scalar_lea.vmem %s5, %s600
      $region52: #{fuseblock_forward.22} parent=47 // pred_fallthru
        _
    $region48: #{fuseblock_forward.22} parent=5 // pred_fallthru
      _
  $region6: #{fuseblock_forward.22} parent=0 // loop_footer
    %s15 = sadd.s32 1, %s11
  $region7: #{fuseblock_forward.22} parent=0 // loop_footer_branch
    %10 = sbr.rel target = $region3
  $region8: #{fuseblock_forward.22} parent=0 // loop_exit
    _

</llo_original>
